<compile_context>
chip_gen: v6e
topology: v6e:2x2x1
jax: 0.10.0
libtpu: 0.0.40
codegen_flags: <defaults>
</compile_context>

<pallas_src>
import math
import jax
import jax.numpy as jnp
from jax.experimental import pallas as pl
from jax.experimental.pallas import tpu as pltpu

# ---- model hyper-parameters (small, synthetic CLIP text transformer) ----
B = 2            # number of prompts ("batch")
L = 8            # context length
D = 32           # transformer width
H = 4            # attention heads
DH = D // H      # head dim
FF = 4 * D       # MLP hidden size
E = 16           # text embedding dim (text_projection output)
NUM_LAYERS = 2
EPS = 1e-5
NEG_INF = -1e30  # causal-mask fill value (CLIP uses -inf; identical after softmax)


def _layer_norm(x, w, b):
    # f32 statistics, f32 output
    mu = jnp.mean(x, axis=-1, keepdims=True)
    var = jnp.mean(jnp.square(x - mu), axis=-1, keepdims=True)
    return (x - mu) * jax.lax.rsqrt(var + EPS) * w + b


# -------------------- fused kernel --------------------

def text_encoder_kernel(x_ref, pos_ref, mask_ref, onehot_ref,
                        ln1_w, ln1_b, wqkv, bqkv, wo, bo,
                        ln2_w, ln2_b, wfc, bfc, wpr, bpr,
                        lnf_w, lnf_b, proj_ref, o_ref):
    """Full TextEncoder forward for all prompts in one program.

    x_ref, pos_ref : (B*L, D) f32       (batch folded into sublanes)
    mask_ref       : (L, L)   f32       causal mask
    onehot_ref     : (B, B*L) f32       EOT-row selector
    stacked layer params carry a leading NUM_LAYERS (or NUM_LAYERS*H) axis.
    o_ref          : (B, E)   f32
    """
    scale = 1.0 / math.sqrt(DH)
    mask = mask_ref[...]                              # hoisted once

    x = x_ref[...] + pos_ref[...]                     # (B*L, D) f32 residual stream

    for layer in range(NUM_LAYERS):                   # static, unrolled
        # ---- attention branch: x + out_proj(MHA(ln_1(x))) with causal mask ----
        h = _layer_norm(x, ln1_w[layer], ln1_b[layer])
        qkv = jnp.dot(h.astype(jnp.bfloat16), wqkv[layer],
                      preferred_element_type=jnp.float32) + bqkv[layer]   # (B*L, 3D)
        qkv = qkv.reshape(B, L, 3 * D)                # split major dim only (layout no-op)

        attn = jnp.zeros((B * L, D), jnp.float32)
        for hd in range(H):                           # static, unrolled over heads
            q = qkv[:, :, hd * DH:(hd + 1) * DH].astype(jnp.bfloat16)          # (B,L,DH)
            k = qkv[:, :, D + hd * DH:D + (hd + 1) * DH].astype(jnp.bfloat16)
            v = qkv[:, :, 2 * D + hd * DH:2 * D + (hd + 1) * DH].astype(jnp.bfloat16)
            # batched over prompts; transposed contraction handled by einsum (no k.T)
            s = jnp.einsum('bqd,bkd->bqk', q, k,
                           preferred_element_type=jnp.float32) * scale + mask  # (B,L,L)
            s = s - jnp.max(s, axis=-1, keepdims=True)
            p = jnp.exp(s)
            p = p * pl.reciprocal(jnp.sum(p, axis=-1, keepdims=True), approx=True)
            o_h = jnp.einsum('bqk,bkd->bqd', p.astype(jnp.bfloat16), v,
                             preferred_element_type=jnp.float32)                # (B,L,DH)
            # head's slice of the output projection (replaces concat-then-matmul)
            attn = attn + jnp.dot(o_h.reshape(B * L, DH).astype(jnp.bfloat16),
                                  wo[layer * H + hd],
                                  preferred_element_type=jnp.float32)           # (B*L,D)
        x = x + attn + bo[layer]

        # ---- MLP branch: x + c_proj(QuickGELU(c_fc(ln_2(x)))) ----
        h2 = _layer_norm(x, ln2_w[layer], ln2_b[layer])
        h2 = jnp.dot(h2.astype(jnp.bfloat16), wfc[layer],
                     preferred_element_type=jnp.float32) + bfc[layer]           # (B*L,FF)
        h2 = h2 * jax.nn.sigmoid(1.702 * h2)           # QuickGELU (CLIP), f32
        h2 = jnp.dot(h2.astype(jnp.bfloat16), wpr[layer],
                     preferred_element_type=jnp.float32) + bpr[layer]           # (B*L,D)
        x = x + h2

    # ---- EOT gather (one-hot matmul), ln_final, text_projection (kept f32) ----
    eot_rows = jnp.dot(onehot_ref[...], x, preferred_element_type=jnp.float32)  # (B, D)
    hn = _layer_norm(eot_rows, lnf_w[...], lnf_b[...])
    o_ref[...] = jnp.dot(hn, proj_ref[...],
                         preferred_element_type=jnp.float32).astype(o_ref.dtype)


# -------------------- wrapper --------------------

def _vmem_spec():
    return pl.BlockSpec(memory_space=pltpu.MemorySpace.VMEM)


def text_encoder_pallas(x_flat, pos_flat, mask, onehot, stacked_params):
    n_in = 4 + len(stacked_params)
    return pl.pallas_call(
        text_encoder_kernel,
        out_shape=jax.ShapeDtypeStruct((B, E), jnp.float32),
        in_specs=[_vmem_spec() for _ in range(n_in)],
        out_specs=_vmem_spec(),
        # everything (activations ~2 KiB + weights ~100 KiB) fits VMEM on
        # v5e/v6e/v7x, so no grid: a single program, no per-step overhead.
        # TODO(synk): at real CLIP sizes (D=512, 12 layers) stream one layer's
        # weights at a time with double-buffered DMA instead (v7x has 64 MiB VMEM).
    )(x_flat, pos_flat, mask, onehot, *stacked_params)


@jax.jit
def text_encoder_forward(prompts, tokenized_prompts, params):
    # CLIP causal attention mask: 0 on/below diag, -inf above.
    mask = jnp.where(jnp.arange(L)[None, :] > jnp.arange(L)[:, None],
                     NEG_INF, 0.0).astype(jnp.float32)

    # fold batch into sublanes: (B, L, D) -> (B*L, D); tile positional embedding.
    x_flat = prompts.reshape(B * L, D).astype(jnp.float32)
    pos_flat = jnp.tile(params["pos"].astype(jnp.float32), (B, 1))              # (B*L, D)

    # EOT gather index (argmax over token ids) -> one-hot selector for in-kernel matmul.
    eot = jnp.argmax(tokenized_prompts, axis=-1)                                # (B,)
    flat_idx = jnp.arange(B) * L + eot
    onehot = (jnp.arange(B * L)[None, :] == flat_idx[:, None]).astype(jnp.float32)  # (B, B*L)

    def stack(name):
        return jnp.stack([lp[name] for lp in params["layers"]], axis=0)

    ln1_w = stack("ln1_w"); ln1_b = stack("ln1_b")
    wqkv = stack("wqkv").astype(jnp.bfloat16)                                   # (NL, D, 3D)
    bqkv = stack("bqkv")
    # output projection split into per-head row blocks: (NL, D, D) -> (NL*H, DH, D)
    wo = stack("wo").reshape(NUM_LAYERS * H, DH, D).astype(jnp.bfloat16)
    bo = stack("bo")
    ln2_w = stack("ln2_w"); ln2_b = stack("ln2_b")
    wfc = stack("wfc").astype(jnp.bfloat16); bfc = stack("bfc")
    wpr = stack("wpr").astype(jnp.bfloat16); bpr = stack("bpr")

    stacked = [ln1_w, ln1_b, wqkv, bqkv, wo, bo,
               ln2_w, ln2_b, wfc, bfc, wpr, bpr,
               params["lnf_w"].astype(jnp.float32),
               params["lnf_b"].astype(jnp.float32),
               params["text_proj"].astype(jnp.float32)]
    return text_encoder_pallas(x_flat, pos_flat, mask, onehot, stacked)


# -------------------- deterministic parameter init --------------------

def init_params(key):
    params = {"layers": []}
    k_pos, k_proj, *layer_keys = jax.random.split(key, 2 + NUM_LAYERS)
    params["pos"] = 0.01 * jax.random.normal(k_pos, (L, D), jnp.float32)
    params["text_proj"] = 0.02 * jax.random.normal(k_proj, (D, E), jnp.float32)
    params["lnf_w"] = jnp.ones((1, D), jnp.float32)
    params["lnf_b"] = jnp.zeros((1, D), jnp.float32)
    for lk in layer_keys:
        k1, k2, k3, k4 = jax.random.split(lk, 4)
        params["layers"].append({
            "ln1_w": jnp.ones((1, D), jnp.float32),
            "ln1_b": jnp.zeros((1, D), jnp.float32),
            "wqkv": 0.02 * jax.random.normal(k1, (D, 3 * D), jnp.float32),
            "bqkv": jnp.zeros((1, 3 * D), jnp.float32),
            "wo": 0.02 * jax.random.normal(k2, (D, D), jnp.float32),
            "bo": jnp.zeros((1, D), jnp.float32),
            "ln2_w": jnp.ones((1, D), jnp.float32),
            "ln2_b": jnp.zeros((1, D), jnp.float32),
            "wfc": 0.02 * jax.random.normal(k3, (D, FF), jnp.float32),
            "bfc": jnp.zeros((1, FF), jnp.float32),
            "wpr": 0.02 * jax.random.normal(k4, (FF, D), jnp.float32),
            "bpr": jnp.zeros((1, D), jnp.float32),
        })
    return params


if __name__ == "__main__":
    key = jax.random.PRNGKey(0)
    kp, kt, kw = jax.random.split(key, 3)
    params = init_params(kw)

    # prompts: learned prompt embeddings, shape (num_prompts, context_len, width)
    prompts = jax.random.normal(kp, (B, L, D), jnp.float32)
    # tokenized_prompts: integer token ids; put the EOT id (largest) at a
    # different position per prompt so argmax gathers distinct rows.
    tokens = jax.random.randint(kt, (B, L), 1, 100)
    eot_positions = jnp.array([5, 3], dtype=jnp.int32)
    tokens = tokens.at[jnp.arange(B), eot_positions].set(49407)

    out = text_encoder_forward(prompts, tokens, params)
    out = jax.block_until_ready(out)
    assert out.shape == (B, E) and out.dtype == jnp.float32
    print("KERNEL_OK")
</pallas_src>

<mosaic_0001>
module attributes {stable_mosaic.version = 11 : i64} {
  func.func @text_encoder_kernel(%arg0: memref<16x32xf32, #tpu.memory_space<vmem>>, %arg1: memref<16x32xf32, #tpu.memory_space<vmem>>, %arg2: memref<8x8xf32, #tpu.memory_space<vmem>>, %arg3: memref<2x16xf32, #tpu.memory_space<vmem>>, %arg4: memref<2x1x32xf32, #tpu.memory_space<vmem>>, %arg5: memref<2x1x32xf32, #tpu.memory_space<vmem>>, %arg6: memref<2x32x96xbf16, #tpu.memory_space<vmem>>, %arg7: memref<2x1x96xf32, #tpu.memory_space<vmem>>, %arg8: memref<8x8x32xbf16, #tpu.memory_space<vmem>>, %arg9: memref<2x1x32xf32, #tpu.memory_space<vmem>>, %arg10: memref<2x1x32xf32, #tpu.memory_space<vmem>>, %arg11: memref<2x1x32xf32, #tpu.memory_space<vmem>>, %arg12: memref<2x32x128xbf16, #tpu.memory_space<vmem>>, %arg13: memref<2x1x128xf32, #tpu.memory_space<vmem>>, %arg14: memref<2x128x32xbf16, #tpu.memory_space<vmem>>, %arg15: memref<2x1x32xf32, #tpu.memory_space<vmem>>, %arg16: memref<1x32xf32, #tpu.memory_space<vmem>>, %arg17: memref<1x32xf32, #tpu.memory_space<vmem>>, %arg18: memref<32x16xf32, #tpu.memory_space<vmem>>, %arg19: memref<2x16xf32, #tpu.memory_space<vmem>>) attributes {dimension_semantics = [], scalar_prefetch = 0 : i64, scratch_operands = 0 : i64, tpu.core_type = #tpu.core_type<tc>} {
    %c0 = arith.constant 0 : index
    %c0_0 = arith.constant 0 : index
    %0 = vector.load %arg2[%c0, %c0_0] : memref<8x8xf32, #tpu.memory_space<vmem>>, vector<8x8xf32>
    %c0_1 = arith.constant 0 : index
    %c0_2 = arith.constant 0 : index
    %1 = vector.load %arg0[%c0_1, %c0_2] : memref<16x32xf32, #tpu.memory_space<vmem>>, vector<16x32xf32>
    %c0_3 = arith.constant 0 : index
    %c0_4 = arith.constant 0 : index
    %2 = vector.load %arg1[%c0_3, %c0_4] : memref<16x32xf32, #tpu.memory_space<vmem>>, vector<16x32xf32>
    %3 = arith.addf %1, %2 : vector<16x32xf32>
    %c0_5 = arith.constant 0 : index
    %c0_6 = arith.constant 0 : index
    %c0_7 = arith.constant 0 : index
    %4 = vector.load %arg4[%c0_5, %c0_6, %c0_7] : memref<2x1x32xf32, #tpu.memory_space<vmem>>, vector<1x1x32xf32>
    %5 = vector.shape_cast %4 : vector<1x1x32xf32> to vector<1x32xf32>
    %c0_8 = arith.constant 0 : index
    %c0_9 = arith.constant 0 : index
    %c0_10 = arith.constant 0 : index
    %6 = vector.load %arg5[%c0_8, %c0_9, %c0_10] : memref<2x1x32xf32, #tpu.memory_space<vmem>>, vector<1x1x32xf32>
    %7 = vector.shape_cast %6 : vector<1x1x32xf32> to vector<1x32xf32>
    %cst = arith.constant dense<0.000000e+00> : vector<16xf32>
    %8 = vector.multi_reduction <add>, %3, %cst [1] : vector<16x32xf32> to vector<16xf32>
    %9 = vector.shape_cast %8 : vector<16xf32> to vector<16x1xf32>
    %cst_11 = arith.constant 3.200000e+01 : f32
    %10 = vector.broadcast %cst_11 : f32 to vector<16x1xf32>
    %11 = arith.divf %9, %10 : vector<16x1xf32>
    %12 = vector.broadcast %11 : vector<16x1xf32> to vector<16x32xf32>
    %13 = arith.subf %3, %12 : vector<16x32xf32>
    %14 = arith.mulf %13, %13 : vector<16x32xf32>
    %cst_12 = arith.constant dense<0.000000e+00> : vector<16xf32>
    %15 = vector.multi_reduction <add>, %14, %cst_12 [1] : vector<16x32xf32> to vector<16xf32>
    %16 = vector.shape_cast %15 : vector<16xf32> to vector<16x1xf32>
    %cst_13 = arith.constant 3.200000e+01 : f32
    %17 = vector.broadcast %cst_13 : f32 to vector<16x1xf32>
    %18 = arith.divf %16, %17 : vector<16x1xf32>
    %19 = vector.broadcast %11 : vector<16x1xf32> to vector<16x32xf32>
    %20 = arith.subf %3, %19 : vector<16x32xf32>
    %cst_14 = arith.constant 9.99999974E-6 : f32
    %21 = vector.broadcast %cst_14 : f32 to vector<16x1xf32>
    %22 = arith.addf %18, %21 : vector<16x1xf32>
    %23 = math.rsqrt %22 : vector<16x1xf32>
    %24 = vector.broadcast %23 : vector<16x1xf32> to vector<16x32xf32>
    %25 = arith.mulf %20, %24 : vector<16x32xf32>
    %26 = vector.broadcast %5 : vector<1x32xf32> to vector<16x32xf32>
    %27 = arith.mulf %25, %26 : vector<16x32xf32>
    %28 = vector.broadcast %7 : vector<1x32xf32> to vector<16x32xf32>
    %29 = arith.addf %27, %28 : vector<16x32xf32>
    %30 = arith.truncf %29 : vector<16x32xf32> to vector<16x32xbf16>
    %c0_15 = arith.constant 0 : index
    %c0_16 = arith.constant 0 : index
    %c0_17 = arith.constant 0 : index
    %31 = vector.load %arg6[%c0_15, %c0_16, %c0_17] : memref<2x32x96xbf16, #tpu.memory_space<vmem>>, vector<1x32x96xbf16>
    %32 = vector.shape_cast %31 : vector<1x32x96xbf16> to vector<32x96xbf16>
    %cst_18 = arith.constant dense<0.000000e+00> : vector<16x96xf32>
    %33 = tpu.matmul %30, %32, %cst_18 {dimension_numbers = #tpu.dot_dimension_numbers<[1], [0], [0], [1], [0, 0, 1, 1], [], []>} : vector<16x32xbf16>, vector<32x96xbf16>, vector<16x96xf32> -> vector<16x96xf32>
    %c0_19 = arith.constant 0 : index
    %c0_20 = arith.constant 0 : index
    %c0_21 = arith.constant 0 : index
    %34 = vector.load %arg7[%c0_19, %c0_20, %c0_21] : memref<2x1x96xf32, #tpu.memory_space<vmem>>, vector<1x1x96xf32>
    %35 = vector.shape_cast %34 : vector<1x1x96xf32> to vector<1x96xf32>
    %36 = vector.broadcast %35 : vector<1x96xf32> to vector<16x96xf32>
    %37 = arith.addf %33, %36 : vector<16x96xf32>
    %38 = vector.shape_cast %37 : vector<16x96xf32> to vector<2x8x96xf32>
    %cst_22 = arith.constant 0.000000e+00 : f32
    %39 = vector.broadcast %cst_22 : f32 to vector<16x32xf32>
    %40 = vector.extract_strided_slice %38 {offsets = [0, 0, 0], sizes = [2, 8, 8], strides = [1, 1, 1]} : vector<2x8x96xf32> to vector<2x8x8xf32>
    %41 = arith.truncf %40 : vector<2x8x8xf32> to vector<2x8x8xbf16>
    %42 = vector.extract_strided_slice %38 {offsets = [0, 0, 32], sizes = [2, 8, 8], strides = [1, 1, 1]} : vector<2x8x96xf32> to vector<2x8x8xf32>
    %43 = arith.truncf %42 : vector<2x8x8xf32> to vector<2x8x8xbf16>
    %44 = vector.extract_strided_slice %38 {offsets = [0, 0, 64], sizes = [2, 8, 8], strides = [1, 1, 1]} : vector<2x8x96xf32> to vector<2x8x8xf32>
    %45 = arith.truncf %44 : vector<2x8x8xf32> to vector<2x8x8xbf16>
    "tpu.trace_start"() <{level = 10 : i32, message = "bqd,bkd->bqk"}> : () -> ()
    %cst_23 = arith.constant dense<0.000000e+00> : vector<2x8x8xf32>
    %46 = tpu.matmul %41, %43, %cst_23 {dimension_numbers = #tpu.dot_dimension_numbers<[2], [2], [1], [1], [0, 0, 0, 1, 1, 1], [0], [0]>} : vector<2x8x8xbf16>, vector<2x8x8xbf16>, vector<2x8x8xf32> -> vector<2x8x8xf32>
    "tpu.trace_stop"() : () -> ()
    %cst_24 = arith.constant 0.353553385 : f32
    %47 = vector.broadcast %cst_24 : f32 to vector<2x8x8xf32>
    %48 = arith.mulf %46, %47 : vector<2x8x8xf32>
    %49 = vector.shape_cast %0 : vector<8x8xf32> to vector<1x8x8xf32>
    %50 = vector.broadcast %49 : vector<1x8x8xf32> to vector<2x8x8xf32>
    %51 = arith.addf %48, %50 : vector<2x8x8xf32>
    %cst_25 = arith.constant dense<0xFF800000> : vector<2x8xf32>
    %52 = vector.multi_reduction <maximumf>, %51, %cst_25 [2] : vector<2x8x8xf32> to vector<2x8xf32>
    %53 = vector.shape_cast %52 : vector<2x8xf32> to vector<2x8x1xf32>
    %54 = vector.broadcast %53 : vector<2x8x1xf32> to vector<2x8x8xf32>
    %55 = arith.subf %51, %54 : vector<2x8x8xf32>
    %56 = math.exp %55 : vector<2x8x8xf32>
    %cst_26 = arith.constant dense<0.000000e+00> : vector<2x8xf32>
    %57 = vector.multi_reduction <add>, %56, %cst_26 [2] : vector<2x8x8xf32> to vector<2x8xf32>
    %58 = vector.shape_cast %57 : vector<2x8xf32> to vector<2x8x1xf32>
    %59 = tpu.reciprocal %58 {approx = true} : vector<2x8x1xf32> -> vector<2x8x1xf32>
    %60 = vector.broadcast %59 : vector<2x8x1xf32> to vector<2x8x8xf32>
    %61 = arith.mulf %56, %60 : vector<2x8x8xf32>
    %62 = arith.truncf %61 : vector<2x8x8xf32> to vector<2x8x8xbf16>
    "tpu.trace_start"() <{level = 10 : i32, message = "bqk,bkd->bqd"}> : () -> ()
    %cst_27 = arith.constant dense<0.000000e+00> : vector<2x8x8xf32>
    %63 = tpu.matmul %62, %45, %cst_27 {dimension_numbers = #tpu.dot_dimension_numbers<[2], [1], [1], [2], [0, 0, 0, 1, 1, 2], [0], [0]>} : vector<2x8x8xbf16>, vector<2x8x8xbf16>, vector<2x8x8xf32> -> vector<2x8x8xf32>
    "tpu.trace_stop"() : () -> ()
    %64 = vector.shape_cast %63 : vector<2x8x8xf32> to vector<16x8xf32>
    %65 = arith.truncf %64 : vector<16x8xf32> to vector<16x8xbf16>
    %c0_28 = arith.constant 0 : index
    %c0_29 = arith.constant 0 : index
    %c0_30 = arith.constant 0 : index
    %66 = vector.load %arg8[%c0_28, %c0_29, %c0_30] : memref<8x8x32xbf16, #tpu.memory_space<vmem>>, vector<1x8x32xbf16>
    %67 = vector.shape_cast %66 : vector<1x8x32xbf16> to vector<8x32xbf16>
    %cst_31 = arith.constant dense<0.000000e+00> : vector<16x32xf32>
    %68 = tpu.matmul %65, %67, %cst_31 {dimension_numbers = #tpu.dot_dimension_numbers<[1], [0], [0], [1], [0, 0, 1, 1], [], []>} : vector<16x8xbf16>, vector<8x32xbf16>, vector<16x32xf32> -> vector<16x32xf32>
    %69 = arith.addf %39, %68 : vector<16x32xf32>
    %70 = vector.extract_strided_slice %38 {offsets = [0, 0, 8], sizes = [2, 8, 8], strides = [1, 1, 1]} : vector<2x8x96xf32> to vector<2x8x8xf32>
    %71 = arith.truncf %70 : vector<2x8x8xf32> to vector<2x8x8xbf16>
    %72 = vector.extract_strided_slice %38 {offsets = [0, 0, 40], sizes = [2, 8, 8], strides = [1, 1, 1]} : vector<2x8x96xf32> to vector<2x8x8xf32>
    %73 = arith.truncf %72 : vector<2x8x8xf32> to vector<2x8x8xbf16>
    %74 = vector.extract_strided_slice %38 {offsets = [0, 0, 72], sizes = [2, 8, 8], strides = [1, 1, 1]} : vector<2x8x96xf32> to vector<2x8x8xf32>
    %75 = arith.truncf %74 : vector<2x8x8xf32> to vector<2x8x8xbf16>
    "tpu.trace_start"() <{level = 10 : i32, message = "bqd,bkd->bqk"}> : () -> ()
    %cst_32 = arith.constant dense<0.000000e+00> : vector<2x8x8xf32>
    %76 = tpu.matmul %71, %73, %cst_32 {dimension_numbers = #tpu.dot_dimension_numbers<[2], [2], [1], [1], [0, 0, 0, 1, 1, 1], [0], [0]>} : vector<2x8x8xbf16>, vector<2x8x8xbf16>, vector<2x8x8xf32> -> vector<2x8x8xf32>
    "tpu.trace_stop"() : () -> ()
    %cst_33 = arith.constant 0.353553385 : f32
    %77 = vector.broadcast %cst_33 : f32 to vector<2x8x8xf32>
    %78 = arith.mulf %76, %77 : vector<2x8x8xf32>
    %79 = vector.shape_cast %0 : vector<8x8xf32> to vector<1x8x8xf32>
    %80 = vector.broadcast %79 : vector<1x8x8xf32> to vector<2x8x8xf32>
    %81 = arith.addf %78, %80 : vector<2x8x8xf32>
    %cst_34 = arith.constant dense<0xFF800000> : vector<2x8xf32>
    %82 = vector.multi_reduction <maximumf>, %81, %cst_34 [2] : vector<2x8x8xf32> to vector<2x8xf32>
    %83 = vector.shape_cast %82 : vector<2x8xf32> to vector<2x8x1xf32>
    %84 = vector.broadcast %83 : vector<2x8x1xf32> to vector<2x8x8xf32>
    %85 = arith.subf %81, %84 : vector<2x8x8xf32>
    %86 = math.exp %85 : vector<2x8x8xf32>
    %cst_35 = arith.constant dense<0.000000e+00> : vector<2x8xf32>
    %87 = vector.multi_reduction <add>, %86, %cst_35 [2] : vector<2x8x8xf32> to vector<2x8xf32>
    %88 = vector.shape_cast %87 : vector<2x8xf32> to vector<2x8x1xf32>
    %89 = tpu.reciprocal %88 {approx = true} : vector<2x8x1xf32> -> vector<2x8x1xf32>
    %90 = vector.broadcast %89 : vector<2x8x1xf32> to vector<2x8x8xf32>
    %91 = arith.mulf %86, %90 : vector<2x8x8xf32>
    %92 = arith.truncf %91 : vector<2x8x8xf32> to vector<2x8x8xbf16>
    "tpu.trace_start"() <{level = 10 : i32, message = "bqk,bkd->bqd"}> : () -> ()
    %cst_36 = arith.constant dense<0.000000e+00> : vector<2x8x8xf32>
    %93 = tpu.matmul %92, %75, %cst_36 {dimension_numbers = #tpu.dot_dimension_numbers<[2], [1], [1], [2], [0, 0, 0, 1, 1, 2], [0], [0]>} : vector<2x8x8xbf16>, vector<2x8x8xbf16>, vector<2x8x8xf32> -> vector<2x8x8xf32>
    "tpu.trace_stop"() : () -> ()
    %94 = vector.shape_cast %93 : vector<2x8x8xf32> to vector<16x8xf32>
    %95 = arith.truncf %94 : vector<16x8xf32> to vector<16x8xbf16>
    %c1 = arith.constant 1 : index
    %c0_37 = arith.constant 0 : index
    %c0_38 = arith.constant 0 : index
    %96 = vector.load %arg8[%c1, %c0_37, %c0_38] : memref<8x8x32xbf16, #tpu.memory_space<vmem>>, vector<1x8x32xbf16>
    %97 = vector.shape_cast %96 : vector<1x8x32xbf16> to vector<8x32xbf16>
    %cst_39 = arith.constant dense<0.000000e+00> : vector<16x32xf32>
    %98 = tpu.matmul %95, %97, %cst_39 {dimension_numbers = #tpu.dot_dimension_numbers<[1], [0], [0], [1], [0, 0, 1, 1], [], []>} : vector<16x8xbf16>, vector<8x32xbf16>, vector<16x32xf32> -> vector<16x32xf32>
    %99 = arith.addf %69, %98 : vector<16x32xf32>
    %100 = vector.extract_strided_slice %38 {offsets = [0, 0, 16], sizes = [2, 8, 8], strides = [1, 1, 1]} : vector<2x8x96xf32> to vector<2x8x8xf32>
    %101 = arith.truncf %100 : vector<2x8x8xf32> to vector<2x8x8xbf16>
    %102 = vector.extract_strided_slice %38 {offsets = [0, 0, 48], sizes = [2, 8, 8], strides = [1, 1, 1]} : vector<2x8x96xf32> to vector<2x8x8xf32>
    %103 = arith.truncf %102 : vector<2x8x8xf32> to vector<2x8x8xbf16>
    %104 = vector.extract_strided_slice %38 {offsets = [0, 0, 80], sizes = [2, 8, 8], strides = [1, 1, 1]} : vector<2x8x96xf32> to vector<2x8x8xf32>
    %105 = arith.truncf %104 : vector<2x8x8xf32> to vector<2x8x8xbf16>
    "tpu.trace_start"() <{level = 10 : i32, message = "bqd,bkd->bqk"}> : () -> ()
    %cst_40 = arith.constant dense<0.000000e+00> : vector<2x8x8xf32>
    %106 = tpu.matmul %101, %103, %cst_40 {dimension_numbers = #tpu.dot_dimension_numbers<[2], [2], [1], [1], [0, 0, 0, 1, 1, 1], [0], [0]>} : vector<2x8x8xbf16>, vector<2x8x8xbf16>, vector<2x8x8xf32> -> vector<2x8x8xf32>
    "tpu.trace_stop"() : () -> ()
    %cst_41 = arith.constant 0.353553385 : f32
    %107 = vector.broadcast %cst_41 : f32 to vector<2x8x8xf32>
    %108 = arith.mulf %106, %107 : vector<2x8x8xf32>
    %109 = vector.shape_cast %0 : vector<8x8xf32> to vector<1x8x8xf32>
    %110 = vector.broadcast %109 : vector<1x8x8xf32> to vector<2x8x8xf32>
    %111 = arith.addf %108, %110 : vector<2x8x8xf32>
    %cst_42 = arith.constant dense<0xFF800000> : vector<2x8xf32>
    %112 = vector.multi_reduction <maximumf>, %111, %cst_42 [2] : vector<2x8x8xf32> to vector<2x8xf32>
    %113 = vector.shape_cast %112 : vector<2x8xf32> to vector<2x8x1xf32>
    %114 = vector.broadcast %113 : vector<2x8x1xf32> to vector<2x8x8xf32>
    %115 = arith.subf %111, %114 : vector<2x8x8xf32>
    %116 = math.exp %115 : vector<2x8x8xf32>
    %cst_43 = arith.constant dense<0.000000e+00> : vector<2x8xf32>
    %117 = vector.multi_reduction <add>, %116, %cst_43 [2] : vector<2x8x8xf32> to vector<2x8xf32>
    %118 = vector.shape_cast %117 : vector<2x8xf32> to vector<2x8x1xf32>
    %119 = tpu.reciprocal %118 {approx = true} : vector<2x8x1xf32> -> vector<2x8x1xf32>
    %120 = vector.broadcast %119 : vector<2x8x1xf32> to vector<2x8x8xf32>
    %121 = arith.mulf %116, %120 : vector<2x8x8xf32>
    %122 = arith.truncf %121 : vector<2x8x8xf32> to vector<2x8x8xbf16>
    "tpu.trace_start"() <{level = 10 : i32, message = "bqk,bkd->bqd"}> : () -> ()
    %cst_44 = arith.constant dense<0.000000e+00> : vector<2x8x8xf32>
    %123 = tpu.matmul %122, %105, %cst_44 {dimension_numbers = #tpu.dot_dimension_numbers<[2], [1], [1], [2], [0, 0, 0, 1, 1, 2], [0], [0]>} : vector<2x8x8xbf16>, vector<2x8x8xbf16>, vector<2x8x8xf32> -> vector<2x8x8xf32>
    "tpu.trace_stop"() : () -> ()
    %124 = vector.shape_cast %123 : vector<2x8x8xf32> to vector<16x8xf32>
    %125 = arith.truncf %124 : vector<16x8xf32> to vector<16x8xbf16>
    %c2 = arith.constant 2 : index
    %c0_45 = arith.constant 0 : index
    %c0_46 = arith.constant 0 : index
    %126 = vector.load %arg8[%c2, %c0_45, %c0_46] : memref<8x8x32xbf16, #tpu.memory_space<vmem>>, vector<1x8x32xbf16>
    %127 = vector.shape_cast %126 : vector<1x8x32xbf16> to vector<8x32xbf16>
    %cst_47 = arith.constant dense<0.000000e+00> : vector<16x32xf32>
    %128 = tpu.matmul %125, %127, %cst_47 {dimension_numbers = #tpu.dot_dimension_numbers<[1], [0], [0], [1], [0, 0, 1, 1], [], []>} : vector<16x8xbf16>, vector<8x32xbf16>, vector<16x32xf32> -> vector<16x32xf32>
    %129 = arith.addf %99, %128 : vector<16x32xf32>
    %130 = vector.extract_strided_slice %38 {offsets = [0, 0, 24], sizes = [2, 8, 8], strides = [1, 1, 1]} : vector<2x8x96xf32> to vector<2x8x8xf32>
    %131 = arith.truncf %130 : vector<2x8x8xf32> to vector<2x8x8xbf16>
    %132 = vector.extract_strided_slice %38 {offsets = [0, 0, 56], sizes = [2, 8, 8], strides = [1, 1, 1]} : vector<2x8x96xf32> to vector<2x8x8xf32>
    %133 = arith.truncf %132 : vector<2x8x8xf32> to vector<2x8x8xbf16>
    %134 = vector.extract_strided_slice %38 {offsets = [0, 0, 88], sizes = [2, 8, 8], strides = [1, 1, 1]} : vector<2x8x96xf32> to vector<2x8x8xf32>
    %135 = arith.truncf %134 : vector<2x8x8xf32> to vector<2x8x8xbf16>
    "tpu.trace_start"() <{level = 10 : i32, message = "bqd,bkd->bqk"}> : () -> ()
    %cst_48 = arith.constant dense<0.000000e+00> : vector<2x8x8xf32>
    %136 = tpu.matmul %131, %133, %cst_48 {dimension_numbers = #tpu.dot_dimension_numbers<[2], [2], [1], [1], [0, 0, 0, 1, 1, 1], [0], [0]>} : vector<2x8x8xbf16>, vector<2x8x8xbf16>, vector<2x8x8xf32> -> vector<2x8x8xf32>
    "tpu.trace_stop"() : () -> ()
    %cst_49 = arith.constant 0.353553385 : f32
    %137 = vector.broadcast %cst_49 : f32 to vector<2x8x8xf32>
    %138 = arith.mulf %136, %137 : vector<2x8x8xf32>
    %139 = vector.shape_cast %0 : vector<8x8xf32> to vector<1x8x8xf32>
    %140 = vector.broadcast %139 : vector<1x8x8xf32> to vector<2x8x8xf32>
    %141 = arith.addf %138, %140 : vector<2x8x8xf32>
    %cst_50 = arith.constant dense<0xFF800000> : vector<2x8xf32>
    %142 = vector.multi_reduction <maximumf>, %141, %cst_50 [2] : vector<2x8x8xf32> to vector<2x8xf32>
    %143 = vector.shape_cast %142 : vector<2x8xf32> to vector<2x8x1xf32>
    %144 = vector.broadcast %143 : vector<2x8x1xf32> to vector<2x8x8xf32>
    %145 = arith.subf %141, %144 : vector<2x8x8xf32>
    %146 = math.exp %145 : vector<2x8x8xf32>
    %cst_51 = arith.constant dense<0.000000e+00> : vector<2x8xf32>
    %147 = vector.multi_reduction <add>, %146, %cst_51 [2] : vector<2x8x8xf32> to vector<2x8xf32>
    %148 = vector.shape_cast %147 : vector<2x8xf32> to vector<2x8x1xf32>
    %149 = tpu.reciprocal %148 {approx = true} : vector<2x8x1xf32> -> vector<2x8x1xf32>
    %150 = vector.broadcast %149 : vector<2x8x1xf32> to vector<2x8x8xf32>
    %151 = arith.mulf %146, %150 : vector<2x8x8xf32>
    %152 = arith.truncf %151 : vector<2x8x8xf32> to vector<2x8x8xbf16>
    "tpu.trace_start"() <{level = 10 : i32, message = "bqk,bkd->bqd"}> : () -> ()
    %cst_52 = arith.constant dense<0.000000e+00> : vector<2x8x8xf32>
    %153 = tpu.matmul %152, %135, %cst_52 {dimension_numbers = #tpu.dot_dimension_numbers<[2], [1], [1], [2], [0, 0, 0, 1, 1, 2], [0], [0]>} : vector<2x8x8xbf16>, vector<2x8x8xbf16>, vector<2x8x8xf32> -> vector<2x8x8xf32>
    "tpu.trace_stop"() : () -> ()
    %154 = vector.shape_cast %153 : vector<2x8x8xf32> to vector<16x8xf32>
    %155 = arith.truncf %154 : vector<16x8xf32> to vector<16x8xbf16>
    %c3 = arith.constant 3 : index
    %c0_53 = arith.constant 0 : index
    %c0_54 = arith.constant 0 : index
    %156 = vector.load %arg8[%c3, %c0_53, %c0_54] : memref<8x8x32xbf16, #tpu.memory_space<vmem>>, vector<1x8x32xbf16>
    %157 = vector.shape_cast %156 : vector<1x8x32xbf16> to vector<8x32xbf16>
    %cst_55 = arith.constant dense<0.000000e+00> : vector<16x32xf32>
    %158 = tpu.matmul %155, %157, %cst_55 {dimension_numbers = #tpu.dot_dimension_numbers<[1], [0], [0], [1], [0, 0, 1, 1], [], []>} : vector<16x8xbf16>, vector<8x32xbf16>, vector<16x32xf32> -> vector<16x32xf32>
    %159 = arith.addf %129, %158 : vector<16x32xf32>
    %160 = arith.addf %3, %159 : vector<16x32xf32>
    %c0_56 = arith.constant 0 : index
    %c0_57 = arith.constant 0 : index
    %c0_58 = arith.constant 0 : index
    %161 = vector.load %arg9[%c0_56, %c0_57, %c0_58] : memref<2x1x32xf32, #tpu.memory_space<vmem>>, vector<1x1x32xf32>
    %162 = vector.shape_cast %161 : vector<1x1x32xf32> to vector<1x32xf32>
    %163 = vector.broadcast %162 : vector<1x32xf32> to vector<16x32xf32>
    %164 = arith.addf %160, %163 : vector<16x32xf32>
    %c0_59 = arith.constant 0 : index
    %c0_60 = arith.constant 0 : index
    %c0_61 = arith.constant 0 : index
    %165 = vector.load %arg10[%c0_59, %c0_60, %c0_61] : memref<2x1x32xf32, #tpu.memory_space<vmem>>, vector<1x1x32xf32>
    %166 = vector.shape_cast %165 : vector<1x1x32xf32> to vector<1x32xf32>
    %c0_62 = arith.constant 0 : index
    %c0_63 = arith.constant 0 : index
    %c0_64 = arith.constant 0 : index
    %167 = vector.load %arg11[%c0_62, %c0_63, %c0_64] : memref<2x1x32xf32, #tpu.memory_space<vmem>>, vector<1x1x32xf32>
    %168 = vector.shape_cast %167 : vector<1x1x32xf32> to vector<1x32xf32>
    %cst_65 = arith.constant dense<0.000000e+00> : vector<16xf32>
    %169 = vector.multi_reduction <add>, %164, %cst_65 [1] : vector<16x32xf32> to vector<16xf32>
    %170 = vector.shape_cast %169 : vector<16xf32> to vector<16x1xf32>
    %cst_66 = arith.constant 3.200000e+01 : f32
    %171 = vector.broadcast %cst_66 : f32 to vector<16x1xf32>
    %172 = arith.divf %170, %171 : vector<16x1xf32>
    %173 = vector.broadcast %172 : vector<16x1xf32> to vector<16x32xf32>
    %174 = arith.subf %164, %173 : vector<16x32xf32>
    %175 = arith.mulf %174, %174 : vector<16x32xf32>
    %cst_67 = arith.constant dense<0.000000e+00> : vector<16xf32>
    %176 = vector.multi_reduction <add>, %175, %cst_67 [1] : vector<16x32xf32> to vector<16xf32>
    %177 = vector.shape_cast %176 : vector<16xf32> to vector<16x1xf32>
    %cst_68 = arith.constant 3.200000e+01 : f32
    %178 = vector.broadcast %cst_68 : f32 to vector<16x1xf32>
    %179 = arith.divf %177, %178 : vector<16x1xf32>
    %180 = vector.broadcast %172 : vector<16x1xf32> to vector<16x32xf32>
    %181 = arith.subf %164, %180 : vector<16x32xf32>
    %cst_69 = arith.constant 9.99999974E-6 : f32
    %182 = vector.broadcast %cst_69 : f32 to vector<16x1xf32>
    %183 = arith.addf %179, %182 : vector<16x1xf32>
    %184 = math.rsqrt %183 : vector<16x1xf32>
    %185 = vector.broadcast %184 : vector<16x1xf32> to vector<16x32xf32>
    %186 = arith.mulf %181, %185 : vector<16x32xf32>
    %187 = vector.broadcast %166 : vector<1x32xf32> to vector<16x32xf32>
    %188 = arith.mulf %186, %187 : vector<16x32xf32>
    %189 = vector.broadcast %168 : vector<1x32xf32> to vector<16x32xf32>
    %190 = arith.addf %188, %189 : vector<16x32xf32>
    %191 = arith.truncf %190 : vector<16x32xf32> to vector<16x32xbf16>
    %c0_70 = arith.constant 0 : index
    %c0_71 = arith.constant 0 : index
    %c0_72 = arith.constant 0 : index
    %192 = vector.load %arg12[%c0_70, %c0_71, %c0_72] : memref<2x32x128xbf16, #tpu.memory_space<vmem>>, vector<1x32x128xbf16>
    %193 = vector.shape_cast %192 : vector<1x32x128xbf16> to vector<32x128xbf16>
    %cst_73 = arith.constant dense<0.000000e+00> : vector<16x128xf32>
    %194 = tpu.matmul %191, %193, %cst_73 {dimension_numbers = #tpu.dot_dimension_numbers<[1], [0], [0], [1], [0, 0, 1, 1], [], []>} : vector<16x32xbf16>, vector<32x128xbf16>, vector<16x128xf32> -> vector<16x128xf32>
    %c0_74 = arith.constant 0 : index
    %c0_75 = arith.constant 0 : index
    %c0_76 = arith.constant 0 : index
    %195 = vector.load %arg13[%c0_74, %c0_75, %c0_76] : memref<2x1x128xf32, #tpu.memory_space<vmem>>, vector<1x1x128xf32>
    %196 = vector.shape_cast %195 : vector<1x1x128xf32> to vector<1x128xf32>
    %197 = vector.broadcast %196 : vector<1x128xf32> to vector<16x128xf32>
    %198 = arith.addf %194, %197 : vector<16x128xf32>
    %cst_77 = arith.constant 1.702000e+00 : f32
    %199 = vector.broadcast %cst_77 : f32 to vector<16x128xf32>
    %200 = arith.mulf %199, %198 : vector<16x128xf32>
    %201 = arith.negf %200 : vector<16x128xf32>
    %202 = math.exp %201 : vector<16x128xf32>
    %cst_78 = arith.constant 1.000000e+00 : f32
    %203 = vector.broadcast %cst_78 : f32 to vector<16x128xf32>
    %204 = arith.addf %203, %202 : vector<16x128xf32>
    %205 = arith.divf %203, %204 : vector<16x128xf32>
    %206 = arith.mulf %198, %205 : vector<16x128xf32>
    %207 = arith.truncf %206 : vector<16x128xf32> to vector<16x128xbf16>
    %c0_79 = arith.constant 0 : index
    %c0_80 = arith.constant 0 : index
    %c0_81 = arith.constant 0 : index
    %208 = vector.load %arg14[%c0_79, %c0_80, %c0_81] : memref<2x128x32xbf16, #tpu.memory_space<vmem>>, vector<1x128x32xbf16>
    %209 = vector.shape_cast %208 : vector<1x128x32xbf16> to vector<128x32xbf16>
    %cst_82 = arith.constant dense<0.000000e+00> : vector<16x32xf32>
    %210 = tpu.matmul %207, %209, %cst_82 {dimension_numbers = #tpu.dot_dimension_numbers<[1], [0], [0], [1], [0, 0, 1, 1], [], []>} : vector<16x128xbf16>, vector<128x32xbf16>, vector<16x32xf32> -> vector<16x32xf32>
    %c0_83 = arith.constant 0 : index
    %c0_84 = arith.constant 0 : index
    %c0_85 = arith.constant 0 : index
    %211 = vector.load %arg15[%c0_83, %c0_84, %c0_85] : memref<2x1x32xf32, #tpu.memory_space<vmem>>, vector<1x1x32xf32>
    %212 = vector.shape_cast %211 : vector<1x1x32xf32> to vector<1x32xf32>
    %213 = vector.broadcast %212 : vector<1x32xf32> to vector<16x32xf32>
    %214 = arith.addf %210, %213 : vector<16x32xf32>
    %215 = arith.addf %164, %214 : vector<16x32xf32>
    %c1_86 = arith.constant 1 : index
    %c0_87 = arith.constant 0 : index
    %c0_88 = arith.constant 0 : index
    %216 = vector.load %arg4[%c1_86, %c0_87, %c0_88] : memref<2x1x32xf32, #tpu.memory_space<vmem>>, vector<1x1x32xf32>
    %217 = vector.shape_cast %216 : vector<1x1x32xf32> to vector<1x32xf32>
    %c1_89 = arith.constant 1 : index
    %c0_90 = arith.constant 0 : index
    %c0_91 = arith.constant 0 : index
    %218 = vector.load %arg5[%c1_89, %c0_90, %c0_91] : memref<2x1x32xf32, #tpu.memory_space<vmem>>, vector<1x1x32xf32>
    %219 = vector.shape_cast %218 : vector<1x1x32xf32> to vector<1x32xf32>
    %cst_92 = arith.constant dense<0.000000e+00> : vector<16xf32>
    %220 = vector.multi_reduction <add>, %215, %cst_92 [1] : vector<16x32xf32> to vector<16xf32>
    %221 = vector.shape_cast %220 : vector<16xf32> to vector<16x1xf32>
    %cst_93 = arith.constant 3.200000e+01 : f32
    %222 = vector.broadcast %cst_93 : f32 to vector<16x1xf32>
    %223 = arith.divf %221, %222 : vector<16x1xf32>
    %224 = vector.broadcast %223 : vector<16x1xf32> to vector<16x32xf32>
    %225 = arith.subf %215, %224 : vector<16x32xf32>
    %226 = arith.mulf %225, %225 : vector<16x32xf32>
    %cst_94 = arith.constant dense<0.000000e+00> : vector<16xf32>
    %227 = vector.multi_reduction <add>, %226, %cst_94 [1] : vector<16x32xf32> to vector<16xf32>
    %228 = vector.shape_cast %227 : vector<16xf32> to vector<16x1xf32>
    %cst_95 = arith.constant 3.200000e+01 : f32
    %229 = vector.broadcast %cst_95 : f32 to vector<16x1xf32>
    %230 = arith.divf %228, %229 : vector<16x1xf32>
    %231 = vector.broadcast %223 : vector<16x1xf32> to vector<16x32xf32>
    %232 = arith.subf %215, %231 : vector<16x32xf32>
    %cst_96 = arith.constant 9.99999974E-6 : f32
    %233 = vector.broadcast %cst_96 : f32 to vector<16x1xf32>
    %234 = arith.addf %230, %233 : vector<16x1xf32>
    %235 = math.rsqrt %234 : vector<16x1xf32>
    %236 = vector.broadcast %235 : vector<16x1xf32> to vector<16x32xf32>
    %237 = arith.mulf %232, %236 : vector<16x32xf32>
    %238 = vector.broadcast %217 : vector<1x32xf32> to vector<16x32xf32>
    %239 = arith.mulf %237, %238 : vector<16x32xf32>
    %240 = vector.broadcast %219 : vector<1x32xf32> to vector<16x32xf32>
    %241 = arith.addf %239, %240 : vector<16x32xf32>
    %242 = arith.truncf %241 : vector<16x32xf32> to vector<16x32xbf16>
    %c1_97 = arith.constant 1 : index
    %c0_98 = arith.constant 0 : index
    %c0_99 = arith.constant 0 : index
    %243 = vector.load %arg6[%c1_97, %c0_98, %c0_99] : memref<2x32x96xbf16, #tpu.memory_space<vmem>>, vector<1x32x96xbf16>
    %244 = vector.shape_cast %243 : vector<1x32x96xbf16> to vector<32x96xbf16>
    %cst_100 = arith.constant dense<0.000000e+00> : vector<16x96xf32>
    %245 = tpu.matmul %242, %244, %cst_100 {dimension_numbers = #tpu.dot_dimension_numbers<[1], [0], [0], [1], [0, 0, 1, 1], [], []>} : vector<16x32xbf16>, vector<32x96xbf16>, vector<16x96xf32> -> vector<16x96xf32>
    %c1_101 = arith.constant 1 : index
    %c0_102 = arith.constant 0 : index
    %c0_103 = arith.constant 0 : index
    %246 = vector.load %arg7[%c1_101, %c0_102, %c0_103] : memref<2x1x96xf32, #tpu.memory_space<vmem>>, vector<1x1x96xf32>
    %247 = vector.shape_cast %246 : vector<1x1x96xf32> to vector<1x96xf32>
    %248 = vector.broadcast %247 : vector<1x96xf32> to vector<16x96xf32>
    %249 = arith.addf %245, %248 : vector<16x96xf32>
    %250 = vector.shape_cast %249 : vector<16x96xf32> to vector<2x8x96xf32>
    %cst_104 = arith.constant 0.000000e+00 : f32
    %251 = vector.broadcast %cst_104 : f32 to vector<16x32xf32>
    %252 = vector.extract_strided_slice %250 {offsets = [0, 0, 0], sizes = [2, 8, 8], strides = [1, 1, 1]} : vector<2x8x96xf32> to vector<2x8x8xf32>
    %253 = arith.truncf %252 : vector<2x8x8xf32> to vector<2x8x8xbf16>
    %254 = vector.extract_strided_slice %250 {offsets = [0, 0, 32], sizes = [2, 8, 8], strides = [1, 1, 1]} : vector<2x8x96xf32> to vector<2x8x8xf32>
    %255 = arith.truncf %254 : vector<2x8x8xf32> to vector<2x8x8xbf16>
    %256 = vector.extract_strided_slice %250 {offsets = [0, 0, 64], sizes = [2, 8, 8], strides = [1, 1, 1]} : vector<2x8x96xf32> to vector<2x8x8xf32>
    %257 = arith.truncf %256 : vector<2x8x8xf32> to vector<2x8x8xbf16>
    "tpu.trace_start"() <{level = 10 : i32, message = "bqd,bkd->bqk"}> : () -> ()
    %cst_105 = arith.constant dense<0.000000e+00> : vector<2x8x8xf32>
    %258 = tpu.matmul %253, %255, %cst_105 {dimension_numbers = #tpu.dot_dimension_numbers<[2], [2], [1], [1], [0, 0, 0, 1, 1, 1], [0], [0]>} : vector<2x8x8xbf16>, vector<2x8x8xbf16>, vector<2x8x8xf32> -> vector<2x8x8xf32>
    "tpu.trace_stop"() : () -> ()
    %cst_106 = arith.constant 0.353553385 : f32
    %259 = vector.broadcast %cst_106 : f32 to vector<2x8x8xf32>
    %260 = arith.mulf %258, %259 : vector<2x8x8xf32>
    %261 = vector.shape_cast %0 : vector<8x8xf32> to vector<1x8x8xf32>
    %262 = vector.broadcast %261 : vector<1x8x8xf32> to vector<2x8x8xf32>
    %263 = arith.addf %260, %262 : vector<2x8x8xf32>
    %cst_107 = arith.constant dense<0xFF800000> : vector<2x8xf32>
    %264 = vector.multi_reduction <maximumf>, %263, %cst_107 [2] : vector<2x8x8xf32> to vector<2x8xf32>
    %265 = vector.shape_cast %264 : vector<2x8xf32> to vector<2x8x1xf32>
    %266 = vector.broadcast %265 : vector<2x8x1xf32> to vector<2x8x8xf32>
    %267 = arith.subf %263, %266 : vector<2x8x8xf32>
    %268 = math.exp %267 : vector<2x8x8xf32>
    %cst_108 = arith.constant dense<0.000000e+00> : vector<2x8xf32>
    %269 = vector.multi_reduction <add>, %268, %cst_108 [2] : vector<2x8x8xf32> to vector<2x8xf32>
    %270 = vector.shape_cast %269 : vector<2x8xf32> to vector<2x8x1xf32>
    %271 = tpu.reciprocal %270 {approx = true} : vector<2x8x1xf32> -> vector<2x8x1xf32>
    %272 = vector.broadcast %271 : vector<2x8x1xf32> to vector<2x8x8xf32>
    %273 = arith.mulf %268, %272 : vector<2x8x8xf32>
    %274 = arith.truncf %273 : vector<2x8x8xf32> to vector<2x8x8xbf16>
    "tpu.trace_start"() <{level = 10 : i32, message = "bqk,bkd->bqd"}> : () -> ()
    %cst_109 = arith.constant dense<0.000000e+00> : vector<2x8x8xf32>
    %275 = tpu.matmul %274, %257, %cst_109 {dimension_numbers = #tpu.dot_dimension_numbers<[2], [1], [1], [2], [0, 0, 0, 1, 1, 2], [0], [0]>} : vector<2x8x8xbf16>, vector<2x8x8xbf16>, vector<2x8x8xf32> -> vector<2x8x8xf32>
    "tpu.trace_stop"() : () -> ()
    %276 = vector.shape_cast %275 : vector<2x8x8xf32> to vector<16x8xf32>
    %277 = arith.truncf %276 : vector<16x8xf32> to vector<16x8xbf16>
    %c4 = arith.constant 4 : index
    %c0_110 = arith.constant 0 : index
    %c0_111 = arith.constant 0 : index
    %278 = vector.load %arg8[%c4, %c0_110, %c0_111] : memref<8x8x32xbf16, #tpu.memory_space<vmem>>, vector<1x8x32xbf16>
    %279 = vector.shape_cast %278 : vector<1x8x32xbf16> to vector<8x32xbf16>
    %cst_112 = arith.constant dense<0.000000e+00> : vector<16x32xf32>
    %280 = tpu.matmul %277, %279, %cst_112 {dimension_numbers = #tpu.dot_dimension_numbers<[1], [0], [0], [1], [0, 0, 1, 1], [], []>} : vector<16x8xbf16>, vector<8x32xbf16>, vector<16x32xf32> -> vector<16x32xf32>
    %281 = arith.addf %251, %280 : vector<16x32xf32>
    %282 = vector.extract_strided_slice %250 {offsets = [0, 0, 8], sizes = [2, 8, 8], strides = [1, 1, 1]} : vector<2x8x96xf32> to vector<2x8x8xf32>
    %283 = arith.truncf %282 : vector<2x8x8xf32> to vector<2x8x8xbf16>
    %284 = vector.extract_strided_slice %250 {offsets = [0, 0, 40], sizes = [2, 8, 8], strides = [1, 1, 1]} : vector<2x8x96xf32> to vector<2x8x8xf32>
    %285 = arith.truncf %284 : vector<2x8x8xf32> to vector<2x8x8xbf16>
    %286 = vector.extract_strided_slice %250 {offsets = [0, 0, 72], sizes = [2, 8, 8], strides = [1, 1, 1]} : vector<2x8x96xf32> to vector<2x8x8xf32>
    %287 = arith.truncf %286 : vector<2x8x8xf32> to vector<2x8x8xbf16>
    "tpu.trace_start"() <{level = 10 : i32, message = "bqd,bkd->bqk"}> : () -> ()
    %cst_113 = arith.constant dense<0.000000e+00> : vector<2x8x8xf32>
    %288 = tpu.matmul %283, %285, %cst_113 {dimension_numbers = #tpu.dot_dimension_numbers<[2], [2], [1], [1], [0, 0, 0, 1, 1, 1], [0], [0]>} : vector<2x8x8xbf16>, vector<2x8x8xbf16>, vector<2x8x8xf32> -> vector<2x8x8xf32>
    "tpu.trace_stop"() : () -> ()
    %cst_114 = arith.constant 0.353553385 : f32
    %289 = vector.broadcast %cst_114 : f32 to vector<2x8x8xf32>
    %290 = arith.mulf %288, %289 : vector<2x8x8xf32>
    %291 = vector.shape_cast %0 : vector<8x8xf32> to vector<1x8x8xf32>
    %292 = vector.broadcast %291 : vector<1x8x8xf32> to vector<2x8x8xf32>
    %293 = arith.addf %290, %292 : vector<2x8x8xf32>
    %cst_115 = arith.constant dense<0xFF800000> : vector<2x8xf32>
    %294 = vector.multi_reduction <maximumf>, %293, %cst_115 [2] : vector<2x8x8xf32> to vector<2x8xf32>
    %295 = vector.shape_cast %294 : vector<2x8xf32> to vector<2x8x1xf32>
    %296 = vector.broadcast %295 : vector<2x8x1xf32> to vector<2x8x8xf32>
    %297 = arith.subf %293, %296 : vector<2x8x8xf32>
    %298 = math.exp %297 : vector<2x8x8xf32>
    %cst_116 = arith.constant dense<0.000000e+00> : vector<2x8xf32>
    %299 = vector.multi_reduction <add>, %298, %cst_116 [2] : vector<2x8x8xf32> to vector<2x8xf32>
    %300 = vector.shape_cast %299 : vector<2x8xf32> to vector<2x8x1xf32>
    %301 = tpu.reciprocal %300 {approx = true} : vector<2x8x1xf32> -> vector<2x8x1xf32>
    %302 = vector.broadcast %301 : vector<2x8x1xf32> to vector<2x8x8xf32>
    %303 = arith.mulf %298, %302 : vector<2x8x8xf32>
    %304 = arith.truncf %303 : vector<2x8x8xf32> to vector<2x8x8xbf16>
    "tpu.trace_start"() <{level = 10 : i32, message = "bqk,bkd->bqd"}> : () -> ()
    %cst_117 = arith.constant dense<0.000000e+00> : vector<2x8x8xf32>
    %305 = tpu.matmul %304, %287, %cst_117 {dimension_numbers = #tpu.dot_dimension_numbers<[2], [1], [1], [2], [0, 0, 0, 1, 1, 2], [0], [0]>} : vector<2x8x8xbf16>, vector<2x8x8xbf16>, vector<2x8x8xf32> -> vector<2x8x8xf32>
    "tpu.trace_stop"() : () -> ()
    %306 = vector.shape_cast %305 : vector<2x8x8xf32> to vector<16x8xf32>
    %307 = arith.truncf %306 : vector<16x8xf32> to vector<16x8xbf16>
    %c5 = arith.constant 5 : index
    %c0_118 = arith.constant 0 : index
    %c0_119 = arith.constant 0 : index
    %308 = vector.load %arg8[%c5, %c0_118, %c0_119] : memref<8x8x32xbf16, #tpu.memory_space<vmem>>, vector<1x8x32xbf16>
    %309 = vector.shape_cast %308 : vector<1x8x32xbf16> to vector<8x32xbf16>
    %cst_120 = arith.constant dense<0.000000e+00> : vector<16x32xf32>
    %310 = tpu.matmul %307, %309, %cst_120 {dimension_numbers = #tpu.dot_dimension_numbers<[1], [0], [0], [1], [0, 0, 1, 1], [], []>} : vector<16x8xbf16>, vector<8x32xbf16>, vector<16x32xf32> -> vector<16x32xf32>
    %311 = arith.addf %281, %310 : vector<16x32xf32>
    %312 = vector.extract_strided_slice %250 {offsets = [0, 0, 16], sizes = [2, 8, 8], strides = [1, 1, 1]} : vector<2x8x96xf32> to vector<2x8x8xf32>
    %313 = arith.truncf %312 : vector<2x8x8xf32> to vector<2x8x8xbf16>
    %314 = vector.extract_strided_slice %250 {offsets = [0, 0, 48], sizes = [2, 8, 8], strides = [1, 1, 1]} : vector<2x8x96xf32> to vector<2x8x8xf32>
    %315 = arith.truncf %314 : vector<2x8x8xf32> to vector<2x8x8xbf16>
    %316 = vector.extract_strided_slice %250 {offsets = [0, 0, 80], sizes = [2, 8, 8], strides = [1, 1, 1]} : vector<2x8x96xf32> to vector<2x8x8xf32>
    %317 = arith.truncf %316 : vector<2x8x8xf32> to vector<2x8x8xbf16>
    "tpu.trace_start"() <{level = 10 : i32, message = "bqd,bkd->bqk"}> : () -> ()
    %cst_121 = arith.constant dense<0.000000e+00> : vector<2x8x8xf32>
    %318 = tpu.matmul %313, %315, %cst_121 {dimension_numbers = #tpu.dot_dimension_numbers<[2], [2], [1], [1], [0, 0, 0, 1, 1, 1], [0], [0]>} : vector<2x8x8xbf16>, vector<2x8x8xbf16>, vector<2x8x8xf32> -> vector<2x8x8xf32>
    "tpu.trace_stop"() : () -> ()
    %cst_122 = arith.constant 0.353553385 : f32
    %319 = vector.broadcast %cst_122 : f32 to vector<2x8x8xf32>
    %320 = arith.mulf %318, %319 : vector<2x8x8xf32>
    %321 = vector.shape_cast %0 : vector<8x8xf32> to vector<1x8x8xf32>
    %322 = vector.broadcast %321 : vector<1x8x8xf32> to vector<2x8x8xf32>
    %323 = arith.addf %320, %322 : vector<2x8x8xf32>
    %cst_123 = arith.constant dense<0xFF800000> : vector<2x8xf32>
    %324 = vector.multi_reduction <maximumf>, %323, %cst_123 [2] : vector<2x8x8xf32> to vector<2x8xf32>
    %325 = vector.shape_cast %324 : vector<2x8xf32> to vector<2x8x1xf32>
    %326 = vector.broadcast %325 : vector<2x8x1xf32> to vector<2x8x8xf32>
    %327 = arith.subf %323, %326 : vector<2x8x8xf32>
    %328 = math.exp %327 : vector<2x8x8xf32>
    %cst_124 = arith.constant dense<0.000000e+00> : vector<2x8xf32>
    %329 = vector.multi_reduction <add>, %328, %cst_124 [2] : vector<2x8x8xf32> to vector<2x8xf32>
    %330 = vector.shape_cast %329 : vector<2x8xf32> to vector<2x8x1xf32>
    %331 = tpu.reciprocal %330 {approx = true} : vector<2x8x1xf32> -> vector<2x8x1xf32>
    %332 = vector.broadcast %331 : vector<2x8x1xf32> to vector<2x8x8xf32>
    %333 = arith.mulf %328, %332 : vector<2x8x8xf32>
    %334 = arith.truncf %333 : vector<2x8x8xf32> to vector<2x8x8xbf16>
    "tpu.trace_start"() <{level = 10 : i32, message = "bqk,bkd->bqd"}> : () -> ()
    %cst_125 = arith.constant dense<0.000000e+00> : vector<2x8x8xf32>
    %335 = tpu.matmul %334, %317, %cst_125 {dimension_numbers = #tpu.dot_dimension_numbers<[2], [1], [1], [2], [0, 0, 0, 1, 1, 2], [0], [0]>} : vector<2x8x8xbf16>, vector<2x8x8xbf16>, vector<2x8x8xf32> -> vector<2x8x8xf32>
    "tpu.trace_stop"() : () -> ()
    %336 = vector.shape_cast %335 : vector<2x8x8xf32> to vector<16x8xf32>
    %337 = arith.truncf %336 : vector<16x8xf32> to vector<16x8xbf16>
    %c6 = arith.constant 6 : index
    %c0_126 = arith.constant 0 : index
    %c0_127 = arith.constant 0 : index
    %338 = vector.load %arg8[%c6, %c0_126, %c0_127] : memref<8x8x32xbf16, #tpu.memory_space<vmem>>, vector<1x8x32xbf16>
    %339 = vector.shape_cast %338 : vector<1x8x32xbf16> to vector<8x32xbf16>
    %cst_128 = arith.constant dense<0.000000e+00> : vector<16x32xf32>
    %340 = tpu.matmul %337, %339, %cst_128 {dimension_numbers = #tpu.dot_dimension_numbers<[1], [0], [0], [1], [0, 0, 1, 1], [], []>} : vector<16x8xbf16>, vector<8x32xbf16>, vector<16x32xf32> -> vector<16x32xf32>
    %341 = arith.addf %311, %340 : vector<16x32xf32>
    %342 = vector.extract_strided_slice %250 {offsets = [0, 0, 24], sizes = [2, 8, 8], strides = [1, 1, 1]} : vector<2x8x96xf32> to vector<2x8x8xf32>
    %343 = arith.truncf %342 : vector<2x8x8xf32> to vector<2x8x8xbf16>
    %344 = vector.extract_strided_slice %250 {offsets = [0, 0, 56], sizes = [2, 8, 8], strides = [1, 1, 1]} : vector<2x8x96xf32> to vector<2x8x8xf32>
    %345 = arith.truncf %344 : vector<2x8x8xf32> to vector<2x8x8xbf16>
    %346 = vector.extract_strided_slice %250 {offsets = [0, 0, 88], sizes = [2, 8, 8], strides = [1, 1, 1]} : vector<2x8x96xf32> to vector<2x8x8xf32>
    %347 = arith.truncf %346 : vector<2x8x8xf32> to vector<2x8x8xbf16>
    "tpu.trace_start"() <{level = 10 : i32, message = "bqd,bkd->bqk"}> : () -> ()
    %cst_129 = arith.constant dense<0.000000e+00> : vector<2x8x8xf32>
    %348 = tpu.matmul %343, %345, %cst_129 {dimension_numbers = #tpu.dot_dimension_numbers<[2], [2], [1], [1], [0, 0, 0, 1, 1, 1], [0], [0]>} : vector<2x8x8xbf16>, vector<2x8x8xbf16>, vector<2x8x8xf32> -> vector<2x8x8xf32>
    "tpu.trace_stop"() : () -> ()
    %cst_130 = arith.constant 0.353553385 : f32
    %349 = vector.broadcast %cst_130 : f32 to vector<2x8x8xf32>
    %350 = arith.mulf %348, %349 : vector<2x8x8xf32>
    %351 = vector.shape_cast %0 : vector<8x8xf32> to vector<1x8x8xf32>
    %352 = vector.broadcast %351 : vector<1x8x8xf32> to vector<2x8x8xf32>
    %353 = arith.addf %350, %352 : vector<2x8x8xf32>
    %cst_131 = arith.constant dense<0xFF800000> : vector<2x8xf32>
    %354 = vector.multi_reduction <maximumf>, %353, %cst_131 [2] : vector<2x8x8xf32> to vector<2x8xf32>
    %355 = vector.shape_cast %354 : vector<2x8xf32> to vector<2x8x1xf32>
    %356 = vector.broadcast %355 : vector<2x8x1xf32> to vector<2x8x8xf32>
    %357 = arith.subf %353, %356 : vector<2x8x8xf32>
    %358 = math.exp %357 : vector<2x8x8xf32>
    %cst_132 = arith.constant dense<0.000000e+00> : vector<2x8xf32>
    %359 = vector.multi_reduction <add>, %358, %cst_132 [2] : vector<2x8x8xf32> to vector<2x8xf32>
    %360 = vector.shape_cast %359 : vector<2x8xf32> to vector<2x8x1xf32>
    %361 = tpu.reciprocal %360 {approx = true} : vector<2x8x1xf32> -> vector<2x8x1xf32>
    %362 = vector.broadcast %361 : vector<2x8x1xf32> to vector<2x8x8xf32>
    %363 = arith.mulf %358, %362 : vector<2x8x8xf32>
    %364 = arith.truncf %363 : vector<2x8x8xf32> to vector<2x8x8xbf16>
    "tpu.trace_start"() <{level = 10 : i32, message = "bqk,bkd->bqd"}> : () -> ()
    %cst_133 = arith.constant dense<0.000000e+00> : vector<2x8x8xf32>
    %365 = tpu.matmul %364, %347, %cst_133 {dimension_numbers = #tpu.dot_dimension_numbers<[2], [1], [1], [2], [0, 0, 0, 1, 1, 2], [0], [0]>} : vector<2x8x8xbf16>, vector<2x8x8xbf16>, vector<2x8x8xf32> -> vector<2x8x8xf32>
    "tpu.trace_stop"() : () -> ()
    %366 = vector.shape_cast %365 : vector<2x8x8xf32> to vector<16x8xf32>
    %367 = arith.truncf %366 : vector<16x8xf32> to vector<16x8xbf16>
    %c7 = arith.constant 7 : index
    %c0_134 = arith.constant 0 : index
    %c0_135 = arith.constant 0 : index
    %368 = vector.load %arg8[%c7, %c0_134, %c0_135] : memref<8x8x32xbf16, #tpu.memory_space<vmem>>, vector<1x8x32xbf16>
    %369 = vector.shape_cast %368 : vector<1x8x32xbf16> to vector<8x32xbf16>
    %cst_136 = arith.constant dense<0.000000e+00> : vector<16x32xf32>
    %370 = tpu.matmul %367, %369, %cst_136 {dimension_numbers = #tpu.dot_dimension_numbers<[1], [0], [0], [1], [0, 0, 1, 1], [], []>} : vector<16x8xbf16>, vector<8x32xbf16>, vector<16x32xf32> -> vector<16x32xf32>
    %371 = arith.addf %341, %370 : vector<16x32xf32>
    %372 = arith.addf %215, %371 : vector<16x32xf32>
    %c1_137 = arith.constant 1 : index
    %c0_138 = arith.constant 0 : index
    %c0_139 = arith.constant 0 : index
    %373 = vector.load %arg9[%c1_137, %c0_138, %c0_139] : memref<2x1x32xf32, #tpu.memory_space<vmem>>, vector<1x1x32xf32>
    %374 = vector.shape_cast %373 : vector<1x1x32xf32> to vector<1x32xf32>
    %375 = vector.broadcast %374 : vector<1x32xf32> to vector<16x32xf32>
    %376 = arith.addf %372, %375 : vector<16x32xf32>
    %c1_140 = arith.constant 1 : index
    %c0_141 = arith.constant 0 : index
    %c0_142 = arith.constant 0 : index
    %377 = vector.load %arg10[%c1_140, %c0_141, %c0_142] : memref<2x1x32xf32, #tpu.memory_space<vmem>>, vector<1x1x32xf32>
    %378 = vector.shape_cast %377 : vector<1x1x32xf32> to vector<1x32xf32>
    %c1_143 = arith.constant 1 : index
    %c0_144 = arith.constant 0 : index
    %c0_145 = arith.constant 0 : index
    %379 = vector.load %arg11[%c1_143, %c0_144, %c0_145] : memref<2x1x32xf32, #tpu.memory_space<vmem>>, vector<1x1x32xf32>
    %380 = vector.shape_cast %379 : vector<1x1x32xf32> to vector<1x32xf32>
    %cst_146 = arith.constant dense<0.000000e+00> : vector<16xf32>
    %381 = vector.multi_reduction <add>, %376, %cst_146 [1] : vector<16x32xf32> to vector<16xf32>
    %382 = vector.shape_cast %381 : vector<16xf32> to vector<16x1xf32>
    %cst_147 = arith.constant 3.200000e+01 : f32
    %383 = vector.broadcast %cst_147 : f32 to vector<16x1xf32>
    %384 = arith.divf %382, %383 : vector<16x1xf32>
    %385 = vector.broadcast %384 : vector<16x1xf32> to vector<16x32xf32>
    %386 = arith.subf %376, %385 : vector<16x32xf32>
    %387 = arith.mulf %386, %386 : vector<16x32xf32>
    %cst_148 = arith.constant dense<0.000000e+00> : vector<16xf32>
    %388 = vector.multi_reduction <add>, %387, %cst_148 [1] : vector<16x32xf32> to vector<16xf32>
    %389 = vector.shape_cast %388 : vector<16xf32> to vector<16x1xf32>
    %cst_149 = arith.constant 3.200000e+01 : f32
    %390 = vector.broadcast %cst_149 : f32 to vector<16x1xf32>
    %391 = arith.divf %389, %390 : vector<16x1xf32>
    %392 = vector.broadcast %384 : vector<16x1xf32> to vector<16x32xf32>
    %393 = arith.subf %376, %392 : vector<16x32xf32>
    %cst_150 = arith.constant 9.99999974E-6 : f32
    %394 = vector.broadcast %cst_150 : f32 to vector<16x1xf32>
    %395 = arith.addf %391, %394 : vector<16x1xf32>
    %396 = math.rsqrt %395 : vector<16x1xf32>
    %397 = vector.broadcast %396 : vector<16x1xf32> to vector<16x32xf32>
    %398 = arith.mulf %393, %397 : vector<16x32xf32>
    %399 = vector.broadcast %378 : vector<1x32xf32> to vector<16x32xf32>
    %400 = arith.mulf %398, %399 : vector<16x32xf32>
    %401 = vector.broadcast %380 : vector<1x32xf32> to vector<16x32xf32>
    %402 = arith.addf %400, %401 : vector<16x32xf32>
    %403 = arith.truncf %402 : vector<16x32xf32> to vector<16x32xbf16>
    %c1_151 = arith.constant 1 : index
    %c0_152 = arith.constant 0 : index
    %c0_153 = arith.constant 0 : index
    %404 = vector.load %arg12[%c1_151, %c0_152, %c0_153] : memref<2x32x128xbf16, #tpu.memory_space<vmem>>, vector<1x32x128xbf16>
    %405 = vector.shape_cast %404 : vector<1x32x128xbf16> to vector<32x128xbf16>
    %cst_154 = arith.constant dense<0.000000e+00> : vector<16x128xf32>
    %406 = tpu.matmul %403, %405, %cst_154 {dimension_numbers = #tpu.dot_dimension_numbers<[1], [0], [0], [1], [0, 0, 1, 1], [], []>} : vector<16x32xbf16>, vector<32x128xbf16>, vector<16x128xf32> -> vector<16x128xf32>
    %c1_155 = arith.constant 1 : index
    %c0_156 = arith.constant 0 : index
    %c0_157 = arith.constant 0 : index
    %407 = vector.load %arg13[%c1_155, %c0_156, %c0_157] : memref<2x1x128xf32, #tpu.memory_space<vmem>>, vector<1x1x128xf32>
    %408 = vector.shape_cast %407 : vector<1x1x128xf32> to vector<1x128xf32>
    %409 = vector.broadcast %408 : vector<1x128xf32> to vector<16x128xf32>
    %410 = arith.addf %406, %409 : vector<16x128xf32>
    %cst_158 = arith.constant 1.702000e+00 : f32
    %411 = vector.broadcast %cst_158 : f32 to vector<16x128xf32>
    %412 = arith.mulf %411, %410 : vector<16x128xf32>
    %413 = arith.negf %412 : vector<16x128xf32>
    %414 = math.exp %413 : vector<16x128xf32>
    %cst_159 = arith.constant 1.000000e+00 : f32
    %415 = vector.broadcast %cst_159 : f32 to vector<16x128xf32>
    %416 = arith.addf %415, %414 : vector<16x128xf32>
    %417 = arith.divf %415, %416 : vector<16x128xf32>
    %418 = arith.mulf %410, %417 : vector<16x128xf32>
    %419 = arith.truncf %418 : vector<16x128xf32> to vector<16x128xbf16>
    %c1_160 = arith.constant 1 : index
    %c0_161 = arith.constant 0 : index
    %c0_162 = arith.constant 0 : index
    %420 = vector.load %arg14[%c1_160, %c0_161, %c0_162] : memref<2x128x32xbf16, #tpu.memory_space<vmem>>, vector<1x128x32xbf16>
    %421 = vector.shape_cast %420 : vector<1x128x32xbf16> to vector<128x32xbf16>
    %cst_163 = arith.constant dense<0.000000e+00> : vector<16x32xf32>
    %422 = tpu.matmul %419, %421, %cst_163 {dimension_numbers = #tpu.dot_dimension_numbers<[1], [0], [0], [1], [0, 0, 1, 1], [], []>} : vector<16x128xbf16>, vector<128x32xbf16>, vector<16x32xf32> -> vector<16x32xf32>
    %c1_164 = arith.constant 1 : index
    %c0_165 = arith.constant 0 : index
    %c0_166 = arith.constant 0 : index
    %423 = vector.load %arg15[%c1_164, %c0_165, %c0_166] : memref<2x1x32xf32, #tpu.memory_space<vmem>>, vector<1x1x32xf32>
    %424 = vector.shape_cast %423 : vector<1x1x32xf32> to vector<1x32xf32>
    %425 = vector.broadcast %424 : vector<1x32xf32> to vector<16x32xf32>
    %426 = arith.addf %422, %425 : vector<16x32xf32>
    %427 = arith.addf %376, %426 : vector<16x32xf32>
    %c0_167 = arith.constant 0 : index
    %c0_168 = arith.constant 0 : index
    %428 = vector.load %arg3[%c0_167, %c0_168] : memref<2x16xf32, #tpu.memory_space<vmem>>, vector<2x16xf32>
    %cst_169 = arith.constant dense<0.000000e+00> : vector<2x32xf32>
    %429 = tpu.matmul %428, %427, %cst_169 {dimension_numbers = #tpu.dot_dimension_numbers<[1], [0], [0], [1], [0, 0, 1, 1], [], []>} : vector<2x16xf32>, vector<16x32xf32>, vector<2x32xf32> -> vector<2x32xf32>
    %c0_170 = arith.constant 0 : index
    %c0_171 = arith.constant 0 : index
    %430 = vector.load %arg16[%c0_170, %c0_171] : memref<1x32xf32, #tpu.memory_space<vmem>>, vector<1x32xf32>
    %c0_172 = arith.constant 0 : index
    %c0_173 = arith.constant 0 : index
    %431 = vector.load %arg17[%c0_172, %c0_173] : memref<1x32xf32, #tpu.memory_space<vmem>>, vector<1x32xf32>
    %cst_174 = arith.constant dense<0.000000e+00> : vector<2xf32>
    %432 = vector.multi_reduction <add>, %429, %cst_174 [1] : vector<2x32xf32> to vector<2xf32>
    %433 = vector.shape_cast %432 : vector<2xf32> to vector<2x1xf32>
    %cst_175 = arith.constant 3.200000e+01 : f32
    %434 = vector.broadcast %cst_175 : f32 to vector<2x1xf32>
    %435 = arith.divf %433, %434 : vector<2x1xf32>
    %436 = vector.broadcast %435 : vector<2x1xf32> to vector<2x32xf32>
    %437 = arith.subf %429, %436 : vector<2x32xf32>
    %438 = arith.mulf %437, %437 : vector<2x32xf32>
    %cst_176 = arith.constant dense<0.000000e+00> : vector<2xf32>
    %439 = vector.multi_reduction <add>, %438, %cst_176 [1] : vector<2x32xf32> to vector<2xf32>
    %440 = vector.shape_cast %439 : vector<2xf32> to vector<2x1xf32>
    %cst_177 = arith.constant 3.200000e+01 : f32
    %441 = vector.broadcast %cst_177 : f32 to vector<2x1xf32>
    %442 = arith.divf %440, %441 : vector<2x1xf32>
    %443 = vector.broadcast %435 : vector<2x1xf32> to vector<2x32xf32>
    %444 = arith.subf %429, %443 : vector<2x32xf32>
    %cst_178 = arith.constant 9.99999974E-6 : f32
    %445 = vector.broadcast %cst_178 : f32 to vector<2x1xf32>
    %446 = arith.addf %442, %445 : vector<2x1xf32>
    %447 = math.rsqrt %446 : vector<2x1xf32>
    %448 = vector.broadcast %447 : vector<2x1xf32> to vector<2x32xf32>
    %449 = arith.mulf %444, %448 : vector<2x32xf32>
    %450 = vector.broadcast %430 : vector<1x32xf32> to vector<2x32xf32>
    %451 = arith.mulf %449, %450 : vector<2x32xf32>
    %452 = vector.broadcast %431 : vector<1x32xf32> to vector<2x32xf32>
    %453 = arith.addf %451, %452 : vector<2x32xf32>
    %c0_179 = arith.constant 0 : index
    %c0_180 = arith.constant 0 : index
    %454 = vector.load %arg18[%c0_179, %c0_180] : memref<32x16xf32, #tpu.memory_space<vmem>>, vector<32x16xf32>
    %cst_181 = arith.constant dense<0.000000e+00> : vector<2x16xf32>
    %455 = tpu.matmul %453, %454, %cst_181 {dimension_numbers = #tpu.dot_dimension_numbers<[1], [0], [0], [1], [0, 0, 1, 1], [], []>} : vector<2x32xf32>, vector<32x16xf32>, vector<2x16xf32> -> vector<2x16xf32>
    %c0_182 = arith.constant 0 : index
    %c0_183 = arith.constant 0 : index
    %456 = vector.load %arg19[%c0_182, %c0_183] : memref<2x16xf32, #tpu.memory_space<vmem>>, vector<2x16xf32>
    tpu.vector_store %arg19[%c0_182, %c0_183], %455 {strides = array<i32>} : memref<2x16xf32, #tpu.memory_space<vmem>>, vector<2x16xf32>,
    return
  }
}

</mosaic_0001>

<llo_original>
// kernel: text_encoder_forward.1
$region0: #{text_encoder_forward.1}
  #allocation0 [shape = 'u32[]', space=smem, size = 0x4, offset = 0x4, fixed_abs, tag = 'smem constant byte address 0x4 - core index']
  #allocation1 [shape = 'u32[144,128]{1,0:T(1,128)}', space=vmem, size = 0x12000, scoped, tag = 'internal scratch']
  %s0 = inlined_call_operand.vmem [shape: f32[16,32], index: 0, kind: input, shape index: {}]
  %s1 = inlined_call_operand.vmem [shape: f32[16,32], index: 1, kind: input, shape index: {}]
  %s2 = inlined_call_operand.vmem [shape: f32[8,8], index: 2, kind: input, shape index: {}]
  %s3 = inlined_call_operand.vmem [shape: f32[2,16], index: 3, kind: input, shape index: {}]
  %s4 = inlined_call_operand.vmem [shape: f32[2,1,32], index: 4, kind: input, shape index: {}]
  %s5 = inlined_call_operand.vmem [shape: f32[2,1,32], index: 5, kind: input, shape index: {}]
  %s6 = inlined_call_operand.vmem [shape: bf16[2,32,96], index: 6, kind: input, shape index: {}]
  %s7 = inlined_call_operand.vmem [shape: f32[2,1,96], index: 7, kind: input, shape index: {}]
  %s8 = inlined_call_operand.vmem [shape: bf16[8,8,32], index: 8, kind: input, shape index: {}]
  %s9 = inlined_call_operand.vmem [shape: f32[2,1,32], index: 9, kind: input, shape index: {}]
  %s10 = inlined_call_operand.vmem [shape: f32[2,1,32], index: 10, kind: input, shape index: {}]
  %s11 = inlined_call_operand.vmem [shape: f32[2,1,32], index: 11, kind: input, shape index: {}]
  %s12 = inlined_call_operand.vmem [shape: bf16[2,32,128], index: 12, kind: input, shape index: {}]
  %s13 = inlined_call_operand.vmem [shape: f32[2,1,128], index: 13, kind: input, shape index: {}]
  %s14 = inlined_call_operand.vmem [shape: bf16[2,128,32], index: 14, kind: input, shape index: {}]
  %s15 = inlined_call_operand.vmem [shape: f32[2,1,32], index: 15, kind: input, shape index: {}]
  %s16 = inlined_call_operand.vmem [shape: f32[1,32], index: 16, kind: input, shape index: {}]
  %s17 = inlined_call_operand.vmem [shape: f32[1,32], index: 17, kind: input, shape index: {}]
  %s18 = inlined_call_operand.vmem [shape: f32[32,16], index: 18, kind: input, shape index: {}]
  %s19 = inlined_call_operand.hbm [shape: f32[2,16], index: 19, kind: output, shape index: {}]
  %s20 = sld [smem:[#allocation0]]
  $region86: #{text_encoder_forward.1} parent=0
    _
  %s22 = ssub.s32 1, %s20
  %s23 = scalar_select 0, %s22, %s20
  $region1: #{text_encoder_forward.1} parent=0
    #allocation2 [shape = 'u8[1024]{0}', space=vmem, size = 0x400, scoped, tag = 'output window, operand 0, single buffered']
    #allocation3 [shape = 's32[1]{0}', space=sflag, size = 0x4, scoped, tag = 'scoped memory for text_encoder_forward.1']
    %24 = vsyncpa [#allocation3], 0
    // Predicated region
    $region2: #{text_encoder_forward.1} parent=1 // pred_check
      _
    $region3: #{text_encoder_forward.1} parent=1 // pred_check_branch
      %26 = sbr.rel (0) target = $region5
    $region4: #{text_encoder_forward.1} parent=1 // pred_region
      _
    $region5: #{text_encoder_forward.1} parent=1 // pred_fallthru
      _
    // Predicated region
    $region6: #{text_encoder_forward.1} parent=1 // pred_check
      _
    $region7: #{text_encoder_forward.1} parent=1 // pred_check_branch
      %28 = sbr.rel (0) target = $region9
    $region8: #{text_encoder_forward.1} parent=1 // pred_region
      _
    $region9: #{text_encoder_forward.1} parent=1 // pred_fallthru
      _
    // Predicated region
    $region10: #{text_encoder_forward.1} parent=1 // pred_check
      _
    $region11: #{text_encoder_forward.1} parent=1 // pred_check_branch
      %30 = sbr.rel (0) target = $region13
    $region12: #{text_encoder_forward.1} parent=1 // pred_region
      _
    $region13: #{text_encoder_forward.1} parent=1 // pred_fallthru
      _
    // Predicated region
    $region14: #{text_encoder_forward.1} parent=1 // pred_check
      _
    $region15: #{text_encoder_forward.1} parent=1 // pred_check_branch
      %32 = sbr.rel (0) target = $region17
    $region16: #{text_encoder_forward.1} parent=1 // pred_region
      _
    $region17: #{text_encoder_forward.1} parent=1 // pred_fallthru
      _
    // Predicated region
    $region18: #{text_encoder_forward.1} parent=1 // pred_check
      _
    $region19: #{text_encoder_forward.1} parent=1 // pred_check_branch
      %34 = sbr.rel (0) target = $region21
    $region20: #{text_encoder_forward.1} parent=1 // pred_region
      _
    $region21: #{text_encoder_forward.1} parent=1 // pred_fallthru
      _
    // Predicated region
    $region22: #{text_encoder_forward.1} parent=1 // pred_check
      _
    $region23: #{text_encoder_forward.1} parent=1 // pred_check_branch
      %36 = sbr.rel (0) target = $region25
    $region24: #{text_encoder_forward.1} parent=1 // pred_region
      _
    $region25: #{text_encoder_forward.1} parent=1 // pred_fallthru
      _
    // Predicated region
    $region26: #{text_encoder_forward.1} parent=1 // pred_check
      _
    $region27: #{text_encoder_forward.1} parent=1 // pred_check_branch
      %38 = sbr.rel (0) target = $region29
    $region28: #{text_encoder_forward.1} parent=1 // pred_region
      _
    $region29: #{text_encoder_forward.1} parent=1 // pred_fallthru
      _
    // Predicated region
    $region30: #{text_encoder_forward.1} parent=1 // pred_check
      _
    $region31: #{text_encoder_forward.1} parent=1 // pred_check_branch
      %40 = sbr.rel (0) target = $region33
    $region32: #{text_encoder_forward.1} parent=1 // pred_region
      _
    $region33: #{text_encoder_forward.1} parent=1 // pred_fallthru
      _
    // Predicated region
    $region34: #{text_encoder_forward.1} parent=1 // pred_check
      _
    $region35: #{text_encoder_forward.1} parent=1 // pred_check_branch
      %42 = sbr.rel (0) target = $region37
    $region36: #{text_encoder_forward.1} parent=1 // pred_region
      _
    $region37: #{text_encoder_forward.1} parent=1 // pred_fallthru
      _
    // Predicated region
    $region38: #{text_encoder_forward.1} parent=1 // pred_check
      _
    $region39: #{text_encoder_forward.1} parent=1 // pred_check_branch
      %44 = sbr.rel (0) target = $region41
    $region40: #{text_encoder_forward.1} parent=1 // pred_region
      _
    $region41: #{text_encoder_forward.1} parent=1 // pred_fallthru
      _
    // Predicated region
    $region42: #{text_encoder_forward.1} parent=1 // pred_check
      _
    $region43: #{text_encoder_forward.1} parent=1 // pred_check_branch
      %46 = sbr.rel (0) target = $region45
    $region44: #{text_encoder_forward.1} parent=1 // pred_region
      _
    $region45: #{text_encoder_forward.1} parent=1 // pred_fallthru
      _
    // Predicated region
    $region46: #{text_encoder_forward.1} parent=1 // pred_check
      _
    $region47: #{text_encoder_forward.1} parent=1 // pred_check_branch
      %48 = sbr.rel (0) target = $region49
    $region48: #{text_encoder_forward.1} parent=1 // pred_region
      _
    $region49: #{text_encoder_forward.1} parent=1 // pred_fallthru
      _
    // Predicated region
    $region50: #{text_encoder_forward.1} parent=1 // pred_check
      _
    $region51: #{text_encoder_forward.1} parent=1 // pred_check_branch
      %50 = sbr.rel (0) target = $region53
    $region52: #{text_encoder_forward.1} parent=1 // pred_region
      _
    $region53: #{text_encoder_forward.1} parent=1 // pred_fallthru
      _
    // Predicated region
    $region54: #{text_encoder_forward.1} parent=1 // pred_check
      _
    $region55: #{text_encoder_forward.1} parent=1 // pred_check_branch
      %52 = sbr.rel (0) target = $region57
    $region56: #{text_encoder_forward.1} parent=1 // pred_region
      _
    $region57: #{text_encoder_forward.1} parent=1 // pred_fallthru
      _
    // Predicated region
    $region58: #{text_encoder_forward.1} parent=1 // pred_check
      _
    $region59: #{text_encoder_forward.1} parent=1 // pred_check_branch
      %54 = sbr.rel (0) target = $region61
    $region60: #{text_encoder_forward.1} parent=1 // pred_region
      _
    $region61: #{text_encoder_forward.1} parent=1 // pred_fallthru
      _
    // Predicated region
    $region62: #{text_encoder_forward.1} parent=1 // pred_check
      _
    $region63: #{text_encoder_forward.1} parent=1 // pred_check_branch
      %56 = sbr.rel (0) target = $region65
    $region64: #{text_encoder_forward.1} parent=1 // pred_region
      _
    $region65: #{text_encoder_forward.1} parent=1 // pred_fallthru
      _
    // Predicated region
    $region66: #{text_encoder_forward.1} parent=1 // pred_check
      _
    $region67: #{text_encoder_forward.1} parent=1 // pred_check_branch
      %58 = sbr.rel (0) target = $region69
    $region68: #{text_encoder_forward.1} parent=1 // pred_region
      _
    $region69: #{text_encoder_forward.1} parent=1 // pred_fallthru
      _
    // Predicated region
    $region70: #{text_encoder_forward.1} parent=1 // pred_check
      _
    $region71: #{text_encoder_forward.1} parent=1 // pred_check_branch
      %60 = sbr.rel (0) target = $region73
    $region72: #{text_encoder_forward.1} parent=1 // pred_region
      _
    $region73: #{text_encoder_forward.1} parent=1 // pred_fallthru
      _
    // Predicated region
    $region74: #{text_encoder_forward.1} parent=1 // pred_check
      _
    $region75: #{text_encoder_forward.1} parent=1 // pred_check_branch
      %62 = sbr.rel (0) target = $region77
    $region76: #{text_encoder_forward.1} parent=1 // pred_region
      _
    $region77: #{text_encoder_forward.1} parent=1 // pred_fallthru
      _
    %v64 = vld [vmem:[%s2] sm:$0xff]
    %v65 = vld [vmem:[%s0] sm:$0xff]
    %v66 = vld [vmem:[%s0 + $0x8] sm:$0xff]
    %v67 = vld [vmem:[%s1] sm:$0xff]
    %v68 = vld [vmem:[%s1 + $0x8] sm:$0xff]
    %v69 = vadd.f32 %v65, %v67
    %v70 = vadd.f32 %v66, %v68
    %v71 = vld [vmem:[%s4] sm:$0x1]
    %v72 = vld [vmem:[%s5] sm:$0x1]
    %vm73 = vcmask 261120
    %v74 = vsel %vm73, %v69, 0.0
    %75 = vadd.xlane.f32.xlu0 %v74
    %v76 = vpop.xlane.xlu0 %75
    %v77 = vsel %vm73, %v70, 0.0
    %78 = vadd.xlane.f32.xlu0 %v77
    %v79 = vpop.xlane.xlu0 %78
    %v80 = vrcp.pop 32.0
    %v81 = vmul.f32 %v76, %v80
    %v82 = vmul.f32 %v79, %v80
    %v83 = vsub.f32 %v69, %v81
    %v84 = vsub.f32 %v70, %v82
    %v85 = vmul.f32 %v83, %v83
    %v86 = vmul.f32 %v84, %v84
    %v87 = vsel %vm73, %v85, 0.0
    %88 = vadd.xlane.f32.xlu0 %v87
    %v89 = vpop.xlane.xlu0 %88
    %v90 = vsel %vm73, %v86, 0.0
    %91 = vadd.xlane.f32.xlu0 %v90
    %v92 = vpop.xlane.xlu0 %91
    %v93 = vmul.f32 %v89, %v80
    %v94 = vmul.f32 %v92, %v80
    %v95 = vadd.f32 %v93, 1e-05
    %v96 = vadd.f32 %v94, 1e-05
    %v97 = vrsqrt.pop %v95
    %v98 = vrsqrt.pop %v96
    %v99 = vmul.f32 %v83, %v97
    %v100 = vmul.f32 %v84, %v98
    %v102 = vlaneseq
    %v103 = vshrl.u32 %v102, 7
    %v104 = vsub.s32 0, %v103
    %v105 = vrot.slane %v71, %v104
    %v107 = vmul.f32 %v99, %v105
    %v108 = vmul.f32 %v100, %v105
    %v110 = vlaneseq
    %v111 = vshrl.u32 %v110, 7
    %v112 = vsub.s32 0, %v111
    %v113 = vrot.slane %v72, %v112
    %v115 = vadd.f32 %v107, %v113
    %v116 = vadd.f32 %v108, %v113
    %v117 = vpack.c.bf16 %v116, %v115
    %v118 = vld [vmem:[%s6] sm:$0xf]
    %v119 = vld [vmem:[%s6 + $0x4] sm:$0xf]
    %v120 = vld [vmem:[%s6 + $0x8] sm:$0xf]
    %v121 = vld [vmem:[%s6 + $0xc] sm:$0xf]
    %v122 = vld [vmem:[%s7] sm:$0x1]
    %v124 = vlaneseq
    %v125 = vshrl.u32 %v124, 7
    %v126 = vsub.s32 0, %v125
    %v127 = vrot.slane %v122, %v126
    %v133 = vunpack.c.l.b16 %v118
    %v134 = vunpack.c.l.b16 %v119
    %v135 = vunpack.c.l.b16 %v120
    %v136 = vunpack.c.l.b16 %v121
    %v137 = vpack.c.b16 %v134, %v133
    %v138 = vpack.c.b16 %v136, %v135
    %v142 = vsel %vm73, %v117, 0
    %144 = vmatprep.subr.bf16.mxu0 0
    %145 = vmatpush1.bf16.msra.mxu0 0
    %146 = vmatprep.subr.bf16.mxu0 0
    %147 = vmatpush1.bf16.msra.mxu0 0
    %148 = vmatprep.subr.bf16.mxu0 0
    %149 = vmatpush1.bf16.msra.mxu0 0
    %150 = vmatprep.subr.bf16.mxu0 0
    %151 = vmatpush1.bf16.msra.mxu0 0
    %152 = vmatprep.subr.bf16.mxu0 0
    %153 = vmatpush1.bf16.msra.mxu0 0
    %154 = vmatprep.subr.bf16.mxu0 0
    %155 = vmatpush1.bf16.msra.mxu0 0
    %156 = vmatprep.subr.bf16.mxu0 0
    %157 = vmatpush1.bf16.msra.mxu0 %v138
    %158 = vmatprep.subr.bf16.mxu0 0
    %159 = vmatpush1.bf16.msra.mxu0 %v137
    %160 = vmatprep.subr.bf16.mxu0 0
    %161 = vmatpush2.bf16.msra.mxu0 0
    %162 = vmatprep.subr.bf16.mxu0 0
    %163 = vmatpush2.bf16.msra.mxu0 0
    %164 = vmatprep.subr.bf16.mxu0 0
    %165 = vmatpush2.bf16.msra.mxu0 0
    %166 = vmatprep.subr.bf16.mxu0 0
    %167 = vmatpush2.bf16.msra.mxu0 0
    %168 = vmatprep.subr.bf16.mxu0 0
    %169 = vmatpush2.bf16.msra.mxu0 0
    %170 = vmatprep.subr.bf16.mxu0 0
    %171 = vmatpush2.bf16.msra.mxu0 0
    %172 = vmatprep.subr.bf16.mxu0 0
    %173 = vmatpush2.bf16.msra.mxu0 0
    %174 = vmatprep.subr.bf16.mxu0 0
    %175 = vmatpush2.bf16.msra.mxu0 0
    %176 = vmatprep.mubr.bf16.mxu0 0
    %177 = vmatmul.mubr.bf16.gmra.mxu0 %v142
    %v178 = vpop.f32.mrf.mxu0
    %v179 = vadd.f32 %v127, %v178
    %v180 = vpop.f32.mrf.mxu0
    %v181 = vpop.f32.mrf.mxu0
    %v182 = vadd.f32 %v127, %v181
    %v183 = vpop.f32.mrf.mxu0
    %184 = vdwg.mxu0
    %v185 = vpack.c.bf16 %v179, %v179
    %v186 = vpack.c.bf16 %v182, %v182
    %188 = vrot.lane.b32.xlu0 %v185, 96
    %v189 = vpop.permute.xlu0 %188
    %vm190 = vcmask 64512
    %v192 = vsel %vm190, %v185, 0
    %v195 = vsel %vm190, %v189, 0
    %197 = vmatprep.subr.bf16.mxu0 0
    %198 = vmatpush1.bf16.xpose.msra.mxu0 0
    %199 = vmatprep.subr.bf16.mxu0 0
    %200 = vmatpush1.bf16.xpose.msra.mxu0 0
    %201 = vmatprep.subr.bf16.mxu0 0
    %202 = vmatpush1.bf16.xpose.msra.mxu0 0
    %203 = vmatprep.subr.bf16.mxu0 0
    %204 = vmatpush1.bf16.xpose.msra.mxu0 0
    %205 = vmatprep.subr.bf16.mxu0 0
    %206 = vmatpush1.bf16.xpose.msra.mxu0 0
    %207 = vmatprep.subr.bf16.mxu0 0
    %208 = vmatpush1.bf16.xpose.msra.mxu0 0
    %209 = vmatprep.subr.bf16.mxu0 0
    %210 = vmatpush1.bf16.xpose.msra.mxu0 0
    %211 = vmatprep.subr.bf16.mxu0 0
    %212 = vmatpush1.bf16.xpose.msra.mxu0 %v195
    %213 = vmatprep.subr.bf16.mxu0 0
    %214 = vmatpush2.bf16.xpose.msra.mxu0 0
    %215 = vmatprep.subr.bf16.mxu0 0
    %216 = vmatpush2.bf16.xpose.msra.mxu0 0
    %217 = vmatprep.subr.bf16.mxu0 0
    %218 = vmatpush2.bf16.xpose.msra.mxu0 0
    %219 = vmatprep.subr.bf16.mxu0 0
    %220 = vmatpush2.bf16.xpose.msra.mxu0 0
    %221 = vmatprep.subr.bf16.mxu0 0
    %222 = vmatpush2.bf16.xpose.msra.mxu0 0
    %223 = vmatprep.subr.bf16.mxu0 0
    %224 = vmatpush2.bf16.xpose.msra.mxu0 0
    %225 = vmatprep.subr.bf16.mxu0 0
    %226 = vmatpush2.bf16.xpose.msra.mxu0 0
    %227 = vmatprep.subr.bf16.mxu0 0
    %228 = vmatpush2.bf16.xpose.msra.mxu0 0
    %229 = vmatprep.mubr.bf16.mxu0 0
    %230 = vmatmul.mubr.bf16.gmra.mxu0 %v192
    %v231 = vpop.f32.mrf.mxu0
    %v232 = vadd.f32 0.0, %v231
    %v233 = vpop.f32.mrf.mxu0
    %v234 = vpop.f32.mrf.mxu0
    %v235 = vpop.f32.mrf.mxu0
    %236 = vdwg.mxu0
    %238 = vrot.lane.b32.xlu0 %v186, 96
    %v239 = vpop.permute.xlu0 %238
    %v241 = vsel %vm190, %v186, 0
    %v244 = vsel %vm190, %v239, 0
    %246 = vmatprep.subr.bf16.mxu0 0
    %247 = vmatpush1.bf16.xpose.msra.mxu0 0
    %248 = vmatprep.subr.bf16.mxu0 0
    %249 = vmatpush1.bf16.xpose.msra.mxu0 0
    %250 = vmatprep.subr.bf16.mxu0 0
    %251 = vmatpush1.bf16.xpose.msra.mxu0 0
    %252 = vmatprep.subr.bf16.mxu0 0
    %253 = vmatpush1.bf16.xpose.msra.mxu0 0
    %254 = vmatprep.subr.bf16.mxu0 0
    %255 = vmatpush1.bf16.xpose.msra.mxu0 0
    %256 = vmatprep.subr.bf16.mxu0 0
    %257 = vmatpush1.bf16.xpose.msra.mxu0 0
    %258 = vmatprep.subr.bf16.mxu0 0
    %259 = vmatpush1.bf16.xpose.msra.mxu0 0
    %260 = vmatprep.subr.bf16.mxu0 0
    %261 = vmatpush1.bf16.xpose.msra.mxu0 %v244
    %262 = vmatprep.subr.bf16.mxu0 0
    %263 = vmatpush2.bf16.xpose.msra.mxu0 0
    %264 = vmatprep.subr.bf16.mxu0 0
    %265 = vmatpush2.bf16.xpose.msra.mxu0 0
    %266 = vmatprep.subr.bf16.mxu0 0
    %267 = vmatpush2.bf16.xpose.msra.mxu0 0
    %268 = vmatprep.subr.bf16.mxu0 0
    %269 = vmatpush2.bf16.xpose.msra.mxu0 0
    %270 = vmatprep.subr.bf16.mxu0 0
    %271 = vmatpush2.bf16.xpose.msra.mxu0 0
    %272 = vmatprep.subr.bf16.mxu0 0
    %273 = vmatpush2.bf16.xpose.msra.mxu0 0
    %274 = vmatprep.subr.bf16.mxu0 0
    %275 = vmatpush2.bf16.xpose.msra.mxu0 0
    %276 = vmatprep.subr.bf16.mxu0 0
    %277 = vmatpush2.bf16.xpose.msra.mxu0 0
    %278 = vmatprep.mubr.bf16.mxu0 0
    %279 = vmatmul.mubr.bf16.gmra.mxu0 %v241
    %v280 = vpop.f32.mrf.mxu0
    %v281 = vadd.f32 0.0, %v280
    %v282 = vpop.f32.mrf.mxu0
    %v283 = vpop.f32.mrf.mxu0
    %v284 = vpop.f32.mrf.mxu0
    %285 = vdwg.mxu0
    %v286 = vmul.f32 %v232, 0.35355338
    %v287 = vmul.f32 %v281, 0.35355338
    %v288 = vadd.f32 %v286, %v64
    %v289 = vadd.f32 %v287, %v64
    %v290 = vsel %vm190, %v288, -inf
    %291 = vmax.xlane.f32.xlu0 %v290
    %v292 = vpop.xlane.xlu0 %291
    %v293 = vsel %vm190, %v289, -inf
    %294 = vmax.xlane.f32.xlu0 %v293
    %v295 = vpop.xlane.xlu0 %294
    %v296 = vsub.f32 %v288, %v292
    %v297 = vsub.f32 %v289, %v295
    %v298 = vmul.f32 %v296, 1.442695
    %v299 = vpow.pop %v298
    %v300 = vmul.f32 %v297, 1.442695
    %v301 = vpow.pop %v300
    %v302 = vsel %vm190, %v299, 0.0
    %303 = vadd.xlane.f32.xlu0 %v302
    %v304 = vpop.xlane.xlu0 %303
    %v305 = vsel %vm190, %v301, 0.0
    %306 = vadd.xlane.f32.xlu0 %v305
    %v307 = vpop.xlane.xlu0 %306
    %v308 = vrcp.pop %v304
    %v309 = vrcp.pop %v307
    %v310 = vmul.f32 %v299, %v308
    %v311 = vmul.f32 %v301, %v309
    %v312 = vpack.c.bf16 %v310, %v310
    %v313 = vpack.c.bf16 %v311, %v311
    %314 = vrot.lane.b32.xlu0 %v185, 64
    %v315 = vpop.permute.xlu0 %314
    %v317 = vsel %vm190, %v312, 0
    %vm319 = vcmask 1043456
    %v321 = vsel %vm319, %v315, 0
    %323 = vmatprep.subr.bf16.mxu0 0
    %324 = vmatpush1.bf16.msra.mxu0 0
    %325 = vmatprep.subr.bf16.mxu0 0
    %326 = vmatpush1.bf16.msra.mxu0 0
    %327 = vmatprep.subr.bf16.mxu0 0
    %328 = vmatpush1.bf16.msra.mxu0 0
    %329 = vmatprep.subr.bf16.mxu0 0
    %330 = vmatpush1.bf16.msra.mxu0 0
    %331 = vmatprep.subr.bf16.mxu0 0
    %332 = vmatpush1.bf16.msra.mxu0 0
    %333 = vmatprep.subr.bf16.mxu0 0
    %334 = vmatpush1.bf16.msra.mxu0 0
    %335 = vmatprep.subr.bf16.mxu0 0
    %336 = vmatpush1.bf16.msra.mxu0 0
    %337 = vmatprep.subr.bf16.mxu0 0
    %338 = vmatpush1.bf16.msra.mxu0 %v321
    %339 = vmatprep.subr.bf16.mxu0 0
    %340 = vmatpush2.bf16.msra.mxu0 0
    %341 = vmatprep.subr.bf16.mxu0 0
    %342 = vmatpush2.bf16.msra.mxu0 0
    %343 = vmatprep.subr.bf16.mxu0 0
    %344 = vmatpush2.bf16.msra.mxu0 0
    %345 = vmatprep.subr.bf16.mxu0 0
    %346 = vmatpush2.bf16.msra.mxu0 0
    %347 = vmatprep.subr.bf16.mxu0 0
    %348 = vmatpush2.bf16.msra.mxu0 0
    %349 = vmatprep.subr.bf16.mxu0 0
    %350 = vmatpush2.bf16.msra.mxu0 0
    %351 = vmatprep.subr.bf16.mxu0 0
    %352 = vmatpush2.bf16.msra.mxu0 0
    %353 = vmatprep.subr.bf16.mxu0 0
    %354 = vmatpush2.bf16.msra.mxu0 0
    %355 = vmatprep.mubr.bf16.mxu0 0
    %356 = vmatmul.mubr.bf16.gmra.mxu0 %v317
    %v357 = vpop.f32.mrf.mxu0
    %v358 = vadd.f32 0.0, %v357
    %v359 = vpop.f32.mrf.mxu0
    %v360 = vpop.f32.mrf.mxu0
    %v361 = vpop.f32.mrf.mxu0
    %362 = vdwg.mxu0
    %363 = vrot.lane.b32.xlu0 %v186, 64
    %v364 = vpop.permute.xlu0 %363
    %v366 = vsel %vm190, %v313, 0
    %v369 = vsel %vm319, %v364, 0
    %371 = vmatprep.subr.bf16.mxu0 0
    %372 = vmatpush1.bf16.msra.mxu0 0
    %373 = vmatprep.subr.bf16.mxu0 0
    %374 = vmatpush1.bf16.msra.mxu0 0
    %375 = vmatprep.subr.bf16.mxu0 0
    %376 = vmatpush1.bf16.msra.mxu0 0
    %377 = vmatprep.subr.bf16.mxu0 0
    %378 = vmatpush1.bf16.msra.mxu0 0
    %379 = vmatprep.subr.bf16.mxu0 0
    %380 = vmatpush1.bf16.msra.mxu0 0
    %381 = vmatprep.subr.bf16.mxu0 0
    %382 = vmatpush1.bf16.msra.mxu0 0
    %383 = vmatprep.subr.bf16.mxu0 0
    %384 = vmatpush1.bf16.msra.mxu0 0
    %385 = vmatprep.subr.bf16.mxu0 0
    %386 = vmatpush1.bf16.msra.mxu0 %v369
    %387 = vmatprep.subr.bf16.mxu0 0
    %388 = vmatpush2.bf16.msra.mxu0 0
    %389 = vmatprep.subr.bf16.mxu0 0
    %390 = vmatpush2.bf16.msra.mxu0 0
    %391 = vmatprep.subr.bf16.mxu0 0
    %392 = vmatpush2.bf16.msra.mxu0 0
    %393 = vmatprep.subr.bf16.mxu0 0
    %394 = vmatpush2.bf16.msra.mxu0 0
    %395 = vmatprep.subr.bf16.mxu0 0
    %396 = vmatpush2.bf16.msra.mxu0 0
    %397 = vmatprep.subr.bf16.mxu0 0
    %398 = vmatpush2.bf16.msra.mxu0 0
    %399 = vmatprep.subr.bf16.mxu0 0
    %400 = vmatpush2.bf16.msra.mxu0 0
    %401 = vmatprep.subr.bf16.mxu0 0
    %402 = vmatpush2.bf16.msra.mxu0 0
    %403 = vmatprep.mubr.bf16.mxu0 0
    %404 = vmatmul.mubr.bf16.gmra.mxu0 %v366
    %v405 = vpop.f32.mrf.mxu0
    %v406 = vadd.f32 0.0, %v405
    %v407 = vpop.f32.mrf.mxu0
    %v408 = vpop.f32.mrf.mxu0
    %v409 = vpop.f32.mrf.mxu0
    %410 = vdwg.mxu0
    %v411 = vpack.c.bf16 %v406, %v358
    %v412 = vld [vmem:[%s8] sm:$0xf]
    %413 = vrot.lane.b32.xlu0 %v185, 120
    %v414 = vpop.permute.xlu0 %413
    %415 = vrot.lane.b32.xlu0 %v185, 88
    %v416 = vpop.permute.xlu0 %415
    %v418 = vsel %vm190, %v414, 0
    %v421 = vsel %vm190, %v416, 0
    %423 = vmatprep.subr.bf16.mxu0 0
    %424 = vmatpush1.bf16.xpose.msra.mxu0 0
    %425 = vmatprep.subr.bf16.mxu0 0
    %426 = vmatpush1.bf16.xpose.msra.mxu0 0
    %427 = vmatprep.subr.bf16.mxu0 0
    %428 = vmatpush1.bf16.xpose.msra.mxu0 0
    %429 = vmatprep.subr.bf16.mxu0 0
    %430 = vmatpush1.bf16.xpose.msra.mxu0 0
    %431 = vmatprep.subr.bf16.mxu0 0
    %432 = vmatpush1.bf16.xpose.msra.mxu0 0
    %433 = vmatprep.subr.bf16.mxu0 0
    %434 = vmatpush1.bf16.xpose.msra.mxu0 0
    %435 = vmatprep.subr.bf16.mxu0 0
    %436 = vmatpush1.bf16.xpose.msra.mxu0 0
    %437 = vmatprep.subr.bf16.mxu0 0
    %438 = vmatpush1.bf16.xpose.msra.mxu0 %v421
    %439 = vmatprep.subr.bf16.mxu0 0
    %440 = vmatpush2.bf16.xpose.msra.mxu0 0
    %441 = vmatprep.subr.bf16.mxu0 0
    %442 = vmatpush2.bf16.xpose.msra.mxu0 0
    %443 = vmatprep.subr.bf16.mxu0 0
    %444 = vmatpush2.bf16.xpose.msra.mxu0 0
    %445 = vmatprep.subr.bf16.mxu0 0
    %446 = vmatpush2.bf16.xpose.msra.mxu0 0
    %447 = vmatprep.subr.bf16.mxu0 0
    %448 = vmatpush2.bf16.xpose.msra.mxu0 0
    %449 = vmatprep.subr.bf16.mxu0 0
    %450 = vmatpush2.bf16.xpose.msra.mxu0 0
    %451 = vmatprep.subr.bf16.mxu0 0
    %452 = vmatpush2.bf16.xpose.msra.mxu0 0
    %453 = vmatprep.subr.bf16.mxu0 0
    %454 = vmatpush2.bf16.xpose.msra.mxu0 0
    %455 = vmatprep.mubr.bf16.mxu0 0
    %456 = vmatmul.mubr.bf16.gmra.mxu0 %v418
    %v457 = vpop.f32.mrf.mxu0
    %v458 = vadd.f32 0.0, %v457
    %v459 = vpop.f32.mrf.mxu0
    %v460 = vpop.f32.mrf.mxu0
    %v461 = vpop.f32.mrf.mxu0
    %462 = vdwg.mxu0
    %463 = vrot.lane.b32.xlu0 %v186, 120
    %v464 = vpop.permute.xlu0 %463
    %465 = vrot.lane.b32.xlu0 %v186, 88
    %v466 = vpop.permute.xlu0 %465
    %v468 = vsel %vm190, %v464, 0
    %v471 = vsel %vm190, %v466, 0
    %473 = vmatprep.subr.bf16.mxu0 0
    %474 = vmatpush1.bf16.xpose.msra.mxu0 0
    %475 = vmatprep.subr.bf16.mxu0 0
    %476 = vmatpush1.bf16.xpose.msra.mxu0 0
    %477 = vmatprep.subr.bf16.mxu0 0
    %478 = vmatpush1.bf16.xpose.msra.mxu0 0
    %479 = vmatprep.subr.bf16.mxu0 0
    %480 = vmatpush1.bf16.xpose.msra.mxu0 0
    %481 = vmatprep.subr.bf16.mxu0 0
    %482 = vmatpush1.bf16.xpose.msra.mxu0 0
    %483 = vmatprep.subr.bf16.mxu0 0
    %484 = vmatpush1.bf16.xpose.msra.mxu0 0
    %485 = vmatprep.subr.bf16.mxu0 0
    %486 = vmatpush1.bf16.xpose.msra.mxu0 0
    %487 = vmatprep.subr.bf16.mxu0 0
    %488 = vmatpush1.bf16.xpose.msra.mxu0 %v471
    %489 = vmatprep.subr.bf16.mxu0 0
    %490 = vmatpush2.bf16.xpose.msra.mxu0 0
    %491 = vmatprep.subr.bf16.mxu0 0
    %492 = vmatpush2.bf16.xpose.msra.mxu0 0
    %493 = vmatprep.subr.bf16.mxu0 0
    %494 = vmatpush2.bf16.xpose.msra.mxu0 0
    %495 = vmatprep.subr.bf16.mxu0 0
    %496 = vmatpush2.bf16.xpose.msra.mxu0 0
    %497 = vmatprep.subr.bf16.mxu0 0
    %498 = vmatpush2.bf16.xpose.msra.mxu0 0
    %499 = vmatprep.subr.bf16.mxu0 0
    %500 = vmatpush2.bf16.xpose.msra.mxu0 0
    %501 = vmatprep.subr.bf16.mxu0 0
    %502 = vmatpush2.bf16.xpose.msra.mxu0 0
    %503 = vmatprep.subr.bf16.mxu0 0
    %504 = vmatpush2.bf16.xpose.msra.mxu0 0
    %505 = vmatprep.mubr.bf16.mxu0 0
    %506 = vmatmul.mubr.bf16.gmra.mxu0 %v468
    %v507 = vpop.f32.mrf.mxu0
    %v508 = vadd.f32 0.0, %v507
    %v509 = vpop.f32.mrf.mxu0
    %v510 = vpop.f32.mrf.mxu0
    %v511 = vpop.f32.mrf.mxu0
    %512 = vdwg.mxu0
    %v513 = vmul.f32 %v458, 0.35355338
    %v514 = vmul.f32 %v508, 0.35355338
    %v515 = vadd.f32 %v513, %v64
    %v516 = vadd.f32 %v514, %v64
    %v517 = vsel %vm190, %v515, -inf
    %518 = vmax.xlane.f32.xlu0 %v517
    %v519 = vpop.xlane.xlu0 %518
    %v520 = vsel %vm190, %v516, -inf
    %521 = vmax.xlane.f32.xlu0 %v520
    %v522 = vpop.xlane.xlu0 %521
    %v523 = vsub.f32 %v515, %v519
    %v524 = vsub.f32 %v516, %v522
    %v525 = vmul.f32 %v523, 1.442695
    %v526 = vpow.pop %v525
    %v527 = vmul.f32 %v524, 1.442695
    %v528 = vpow.pop %v527
    %v529 = vsel %vm190, %v526, 0.0
    %530 = vadd.xlane.f32.xlu0 %v529
    %v531 = vpop.xlane.xlu0 %530
    %v532 = vsel %vm190, %v528, 0.0
    %533 = vadd.xlane.f32.xlu0 %v532
    %v534 = vpop.xlane.xlu0 %533
    %v535 = vrcp.pop %v531
    %v536 = vrcp.pop %v534
    %v537 = vmul.f32 %v526, %v535
    %v538 = vmul.f32 %v528, %v536
    %v539 = vpack.c.bf16 %v537, %v537
    %v540 = vpack.c.bf16 %v538, %v538
    %541 = vrot.lane.b32.xlu0 %v185, 56
    %v542 = vpop.permute.xlu0 %541
    %v544 = vsel %vm190, %v539, 0
    %v547 = vsel %vm319, %v542, 0
    %549 = vmatprep.subr.bf16.mxu0 0
    %550 = vmatpush1.bf16.msra.mxu0 0
    %551 = vmatprep.subr.bf16.mxu0 0
    %552 = vmatpush1.bf16.msra.mxu0 0
    %553 = vmatprep.subr.bf16.mxu0 0
    %554 = vmatpush1.bf16.msra.mxu0 0
    %555 = vmatprep.subr.bf16.mxu0 0
    %556 = vmatpush1.bf16.msra.mxu0 0
    %557 = vmatprep.subr.bf16.mxu0 0
    %558 = vmatpush1.bf16.msra.mxu0 0
    %559 = vmatprep.subr.bf16.mxu0 0
    %560 = vmatpush1.bf16.msra.mxu0 0
    %561 = vmatprep.subr.bf16.mxu0 0
    %562 = vmatpush1.bf16.msra.mxu0 0
    %563 = vmatprep.subr.bf16.mxu0 0
    %564 = vmatpush1.bf16.msra.mxu0 %v547
    %565 = vmatprep.subr.bf16.mxu0 0
    %566 = vmatpush2.bf16.msra.mxu0 0
    %567 = vmatprep.subr.bf16.mxu0 0
    %568 = vmatpush2.bf16.msra.mxu0 0
    %569 = vmatprep.subr.bf16.mxu0 0
    %570 = vmatpush2.bf16.msra.mxu0 0
    %571 = vmatprep.subr.bf16.mxu0 0
    %572 = vmatpush2.bf16.msra.mxu0 0
    %573 = vmatprep.subr.bf16.mxu0 0
    %574 = vmatpush2.bf16.msra.mxu0 0
    %575 = vmatprep.subr.bf16.mxu0 0
    %576 = vmatpush2.bf16.msra.mxu0 0
    %577 = vmatprep.subr.bf16.mxu0 0
    %578 = vmatpush2.bf16.msra.mxu0 0
    %579 = vmatprep.subr.bf16.mxu0 0
    %580 = vmatpush2.bf16.msra.mxu0 0
    %581 = vmatprep.mubr.bf16.mxu0 0
    %582 = vmatmul.mubr.bf16.gmra.mxu0 %v544
    %v583 = vpop.f32.mrf.mxu0
    %v584 = vadd.f32 0.0, %v583
    %v585 = vpop.f32.mrf.mxu0
    %v586 = vpop.f32.mrf.mxu0
    %v587 = vpop.f32.mrf.mxu0
    %588 = vdwg.mxu0
    %589 = vrot.lane.b32.xlu0 %v186, 56
    %v590 = vpop.permute.xlu0 %589
    %v592 = vsel %vm190, %v540, 0
    %v595 = vsel %vm319, %v590, 0
    %597 = vmatprep.subr.bf16.mxu0 0
    %598 = vmatpush1.bf16.msra.mxu0 0
    %599 = vmatprep.subr.bf16.mxu0 0
    %600 = vmatpush1.bf16.msra.mxu0 0
    %601 = vmatprep.subr.bf16.mxu0 0
    %602 = vmatpush1.bf16.msra.mxu0 0
    %603 = vmatprep.subr.bf16.mxu0 0
    %604 = vmatpush1.bf16.msra.mxu0 0
    %605 = vmatprep.subr.bf16.mxu0 0
    %606 = vmatpush1.bf16.msra.mxu0 0
    %607 = vmatprep.subr.bf16.mxu0 0
    %608 = vmatpush1.bf16.msra.mxu0 0
    %609 = vmatprep.subr.bf16.mxu0 0
    %610 = vmatpush1.bf16.msra.mxu0 0
    %611 = vmatprep.subr.bf16.mxu0 0
    %612 = vmatpush1.bf16.msra.mxu0 %v595
    %613 = vmatprep.subr.bf16.mxu0 0
    %614 = vmatpush2.bf16.msra.mxu0 0
    %615 = vmatprep.subr.bf16.mxu0 0
    %616 = vmatpush2.bf16.msra.mxu0 0
    %617 = vmatprep.subr.bf16.mxu0 0
    %618 = vmatpush2.bf16.msra.mxu0 0
    %619 = vmatprep.subr.bf16.mxu0 0
    %620 = vmatpush2.bf16.msra.mxu0 0
    %621 = vmatprep.subr.bf16.mxu0 0
    %622 = vmatpush2.bf16.msra.mxu0 0
    %623 = vmatprep.subr.bf16.mxu0 0
    %624 = vmatpush2.bf16.msra.mxu0 0
    %625 = vmatprep.subr.bf16.mxu0 0
    %626 = vmatpush2.bf16.msra.mxu0 0
    %627 = vmatprep.subr.bf16.mxu0 0
    %628 = vmatpush2.bf16.msra.mxu0 0
    %629 = vmatprep.mubr.bf16.mxu0 0
    %630 = vmatmul.mubr.bf16.gmra.mxu0 %v592
    %v631 = vpop.f32.mrf.mxu0
    %v632 = vadd.f32 0.0, %v631
    %v633 = vpop.f32.mrf.mxu0
    %v634 = vpop.f32.mrf.mxu0
    %v635 = vpop.f32.mrf.mxu0
    %636 = vdwg.mxu0
    %v637 = vpack.c.bf16 %v632, %v584
    %s638 = scalar_lea.vmem %s8, 4
    %v639 = vld [vmem:[%s638] sm:$0xf]
    %v641 = vsel %vm190, %v637, 0
    %v644 = vsel %vm319, %v639, 0
    %646 = vmatprep.subr.bf16.mxu0 0
    %647 = vmatpush1.bf16.msra.mxu0 0
    %648 = vmatprep.subr.bf16.mxu0 0
    %649 = vmatpush1.bf16.msra.mxu0 0
    %650 = vmatprep.subr.bf16.mxu0 0
    %651 = vmatpush1.bf16.msra.mxu0 0
    %652 = vmatprep.subr.bf16.mxu0 0
    %653 = vmatpush1.bf16.msra.mxu0 0
    %654 = vmatprep.subr.bf16.mxu0 0
    %655 = vmatpush1.bf16.msra.mxu0 0
    %656 = vmatprep.subr.bf16.mxu0 0
    %657 = vmatpush1.bf16.msra.mxu0 0
    %658 = vmatprep.subr.bf16.mxu0 0
    %659 = vmatpush1.bf16.msra.mxu0 0
    %660 = vmatprep.subr.bf16.mxu0 0
    %661 = vmatpush1.bf16.msra.mxu0 %v644
    %662 = vmatprep.subr.bf16.mxu0 0
    %663 = vmatpush2.bf16.msra.mxu0 0
    %664 = vmatprep.subr.bf16.mxu0 0
    %665 = vmatpush2.bf16.msra.mxu0 0
    %666 = vmatprep.subr.bf16.mxu0 0
    %667 = vmatpush2.bf16.msra.mxu0 0
    %668 = vmatprep.subr.bf16.mxu0 0
    %669 = vmatpush2.bf16.msra.mxu0 0
    %670 = vmatprep.subr.bf16.mxu0 0
    %671 = vmatpush2.bf16.msra.mxu0 0
    %672 = vmatprep.subr.bf16.mxu0 0
    %673 = vmatpush2.bf16.msra.mxu0 0
    %674 = vmatprep.subr.bf16.mxu0 0
    %675 = vmatpush2.bf16.msra.mxu0 0
    %676 = vmatprep.subr.bf16.mxu0 0
    %677 = vmatpush2.bf16.msra.mxu0 0
    %678 = vmatprep.mubr.bf16.mxu0 0
    %679 = vmatmul.mubr.bf16.gmra.mxu0 %v641
    %v680 = vpop.f32.mrf.mxu0
    %v681 = vadd.f32 0.0, %v680
    %v682 = vpop.f32.mrf.mxu0
    %v683 = vpop.f32.mrf.mxu0
    %v684 = vadd.f32 0.0, %v683
    %v685 = vpop.f32.mrf.mxu0
    %686 = vdwg.mxu0
    %v688 = vsel %vm190, %v411, 0
    %v691 = vsel %vm319, %v412, 0
    %693 = vmatprep.subr.bf16.mxu0 0
    %694 = vmatpush1.bf16.msra.mxu0 0
    %695 = vmatprep.subr.bf16.mxu0 0
    %696 = vmatpush1.bf16.msra.mxu0 0
    %697 = vmatprep.subr.bf16.mxu0 0
    %698 = vmatpush1.bf16.msra.mxu0 0
    %699 = vmatprep.subr.bf16.mxu0 0
    %700 = vmatpush1.bf16.msra.mxu0 0
    %701 = vmatprep.subr.bf16.mxu0 0
    %702 = vmatpush1.bf16.msra.mxu0 0
    %703 = vmatprep.subr.bf16.mxu0 0
    %704 = vmatpush1.bf16.msra.mxu0 0
    %705 = vmatprep.subr.bf16.mxu0 0
    %706 = vmatpush1.bf16.msra.mxu0 0
    %707 = vmatprep.subr.bf16.mxu0 0
    %708 = vmatpush1.bf16.msra.mxu0 %v691
    %709 = vmatprep.subr.bf16.mxu0 0
    %710 = vmatpush2.bf16.msra.mxu0 0
    %711 = vmatprep.subr.bf16.mxu0 0
    %712 = vmatpush2.bf16.msra.mxu0 0
    %713 = vmatprep.subr.bf16.mxu0 0
    %714 = vmatpush2.bf16.msra.mxu0 0
    %715 = vmatprep.subr.bf16.mxu0 0
    %716 = vmatpush2.bf16.msra.mxu0 0
    %717 = vmatprep.subr.bf16.mxu0 0
    %718 = vmatpush2.bf16.msra.mxu0 0
    %719 = vmatprep.subr.bf16.mxu0 0
    %720 = vmatpush2.bf16.msra.mxu0 0
    %721 = vmatprep.subr.bf16.mxu0 0
    %722 = vmatpush2.bf16.msra.mxu0 0
    %723 = vmatprep.subr.bf16.mxu0 0
    %724 = vmatpush2.bf16.msra.mxu0 0
    %725 = vmatprep.mubr.bf16.mxu0 0
    %726 = vmatmul.mubr.bf16.gmra.mxu0 %v688
    %v727 = vpop.f32.mrf.mxu0
    %v728 = vadd.f32 %v681, %v727
    %v729 = vpop.f32.mrf.mxu0
    %v730 = vpop.f32.mrf.mxu0
    %v731 = vadd.f32 %v684, %v730
    %v732 = vpop.f32.mrf.mxu0
    %733 = vdwg.mxu0
    %734 = vrot.lane.b32.xlu0 %v185, 112
    %v735 = vpop.permute.xlu0 %734
    %736 = vrot.lane.b32.xlu0 %v185, 80
    %v737 = vpop.permute.xlu0 %736
    %v739 = vsel %vm190, %v735, 0
    %v742 = vsel %vm190, %v737, 0
    %744 = vmatprep.subr.bf16.mxu0 0
    %745 = vmatpush1.bf16.xpose.msra.mxu0 0
    %746 = vmatprep.subr.bf16.mxu0 0
    %747 = vmatpush1.bf16.xpose.msra.mxu0 0
    %748 = vmatprep.subr.bf16.mxu0 0
    %749 = vmatpush1.bf16.xpose.msra.mxu0 0
    %750 = vmatprep.subr.bf16.mxu0 0
    %751 = vmatpush1.bf16.xpose.msra.mxu0 0
    %752 = vmatprep.subr.bf16.mxu0 0
    %753 = vmatpush1.bf16.xpose.msra.mxu0 0
    %754 = vmatprep.subr.bf16.mxu0 0
    %755 = vmatpush1.bf16.xpose.msra.mxu0 0
    %756 = vmatprep.subr.bf16.mxu0 0
    %757 = vmatpush1.bf16.xpose.msra.mxu0 0
    %758 = vmatprep.subr.bf16.mxu0 0
    %759 = vmatpush1.bf16.xpose.msra.mxu0 %v742
    %760 = vmatprep.subr.bf16.mxu0 0
    %761 = vmatpush2.bf16.xpose.msra.mxu0 0
    %762 = vmatprep.subr.bf16.mxu0 0
    %763 = vmatpush2.bf16.xpose.msra.mxu0 0
    %764 = vmatprep.subr.bf16.mxu0 0
    %765 = vmatpush2.bf16.xpose.msra.mxu0 0
    %766 = vmatprep.subr.bf16.mxu0 0
    %767 = vmatpush2.bf16.xpose.msra.mxu0 0
    %768 = vmatprep.subr.bf16.mxu0 0
    %769 = vmatpush2.bf16.xpose.msra.mxu0 0
    %770 = vmatprep.subr.bf16.mxu0 0
    %771 = vmatpush2.bf16.xpose.msra.mxu0 0
    %772 = vmatprep.subr.bf16.mxu0 0
    %773 = vmatpush2.bf16.xpose.msra.mxu0 0
    %774 = vmatprep.subr.bf16.mxu0 0
    %775 = vmatpush2.bf16.xpose.msra.mxu0 0
    %776 = vmatprep.mubr.bf16.mxu0 0
    %777 = vmatmul.mubr.bf16.gmra.mxu0 %v739
    %v778 = vpop.f32.mrf.mxu0
    %v779 = vadd.f32 0.0, %v778
    %v780 = vpop.f32.mrf.mxu0
    %v781 = vpop.f32.mrf.mxu0
    %v782 = vpop.f32.mrf.mxu0
    %783 = vdwg.mxu0
    %784 = vrot.lane.b32.xlu0 %v186, 112
    %v785 = vpop.permute.xlu0 %784
    %786 = vrot.lane.b32.xlu0 %v186, 80
    %v787 = vpop.permute.xlu0 %786
    %v789 = vsel %vm190, %v785, 0
    %v792 = vsel %vm190, %v787, 0
    %794 = vmatprep.subr.bf16.mxu0 0
    %795 = vmatpush1.bf16.xpose.msra.mxu0 0
    %796 = vmatprep.subr.bf16.mxu0 0
    %797 = vmatpush1.bf16.xpose.msra.mxu0 0
    %798 = vmatprep.subr.bf16.mxu0 0
    %799 = vmatpush1.bf16.xpose.msra.mxu0 0
    %800 = vmatprep.subr.bf16.mxu0 0
    %801 = vmatpush1.bf16.xpose.msra.mxu0 0
    %802 = vmatprep.subr.bf16.mxu0 0
    %803 = vmatpush1.bf16.xpose.msra.mxu0 0
    %804 = vmatprep.subr.bf16.mxu0 0
    %805 = vmatpush1.bf16.xpose.msra.mxu0 0
    %806 = vmatprep.subr.bf16.mxu0 0
    %807 = vmatpush1.bf16.xpose.msra.mxu0 0
    %808 = vmatprep.subr.bf16.mxu0 0
    %809 = vmatpush1.bf16.xpose.msra.mxu0 %v792
    %810 = vmatprep.subr.bf16.mxu0 0
    %811 = vmatpush2.bf16.xpose.msra.mxu0 0
    %812 = vmatprep.subr.bf16.mxu0 0
    %813 = vmatpush2.bf16.xpose.msra.mxu0 0
    %814 = vmatprep.subr.bf16.mxu0 0
    %815 = vmatpush2.bf16.xpose.msra.mxu0 0
    %816 = vmatprep.subr.bf16.mxu0 0
    %817 = vmatpush2.bf16.xpose.msra.mxu0 0
    %818 = vmatprep.subr.bf16.mxu0 0
    %819 = vmatpush2.bf16.xpose.msra.mxu0 0
    %820 = vmatprep.subr.bf16.mxu0 0
    %821 = vmatpush2.bf16.xpose.msra.mxu0 0
    %822 = vmatprep.subr.bf16.mxu0 0
    %823 = vmatpush2.bf16.xpose.msra.mxu0 0
    %824 = vmatprep.subr.bf16.mxu0 0
    %825 = vmatpush2.bf16.xpose.msra.mxu0 0
    %826 = vmatprep.mubr.bf16.mxu0 0
    %827 = vmatmul.mubr.bf16.gmra.mxu0 %v789
    %v828 = vpop.f32.mrf.mxu0
    %v829 = vadd.f32 0.0, %v828
    %v830 = vpop.f32.mrf.mxu0
    %v831 = vpop.f32.mrf.mxu0
    %v832 = vpop.f32.mrf.mxu0
    %833 = vdwg.mxu0
    %v834 = vmul.f32 %v779, 0.35355338
    %v835 = vmul.f32 %v829, 0.35355338
    %v836 = vadd.f32 %v834, %v64
    %v837 = vadd.f32 %v835, %v64
    %v838 = vsel %vm190, %v836, -inf
    %839 = vmax.xlane.f32.xlu0 %v838
    %v840 = vpop.xlane.xlu0 %839
    %v841 = vsel %vm190, %v837, -inf
    %842 = vmax.xlane.f32.xlu0 %v841
    %v843 = vpop.xlane.xlu0 %842
    %v844 = vsub.f32 %v836, %v840
    %v845 = vsub.f32 %v837, %v843
    %v846 = vmul.f32 %v844, 1.442695
    %v847 = vpow.pop %v846
    %v848 = vmul.f32 %v845, 1.442695
    %v849 = vpow.pop %v848
    %v850 = vsel %vm190, %v847, 0.0
    %851 = vadd.xlane.f32.xlu0 %v850
    %v852 = vpop.xlane.xlu0 %851
    %v853 = vsel %vm190, %v849, 0.0
    %854 = vadd.xlane.f32.xlu0 %v853
    %v855 = vpop.xlane.xlu0 %854
    %v856 = vrcp.pop %v852
    %v857 = vrcp.pop %v855
    %v858 = vmul.f32 %v847, %v856
    %v859 = vmul.f32 %v849, %v857
    %v860 = vpack.c.bf16 %v858, %v858
    %v861 = vpack.c.bf16 %v859, %v859
    %862 = vrot.lane.b32.xlu0 %v185, 48
    %v863 = vpop.permute.xlu0 %862
    %v865 = vsel %vm190, %v860, 0
    %v868 = vsel %vm319, %v863, 0
    %870 = vmatprep.subr.bf16.mxu0 0
    %871 = vmatpush1.bf16.msra.mxu0 0
    %872 = vmatprep.subr.bf16.mxu0 0
    %873 = vmatpush1.bf16.msra.mxu0 0
    %874 = vmatprep.subr.bf16.mxu0 0
    %875 = vmatpush1.bf16.msra.mxu0 0
    %876 = vmatprep.subr.bf16.mxu0 0
    %877 = vmatpush1.bf16.msra.mxu0 0
    %878 = vmatprep.subr.bf16.mxu0 0
    %879 = vmatpush1.bf16.msra.mxu0 0
    %880 = vmatprep.subr.bf16.mxu0 0
    %881 = vmatpush1.bf16.msra.mxu0 0
    %882 = vmatprep.subr.bf16.mxu0 0
    %883 = vmatpush1.bf16.msra.mxu0 0
    %884 = vmatprep.subr.bf16.mxu0 0
    %885 = vmatpush1.bf16.msra.mxu0 %v868
    %886 = vmatprep.subr.bf16.mxu0 0
    %887 = vmatpush2.bf16.msra.mxu0 0
    %888 = vmatprep.subr.bf16.mxu0 0
    %889 = vmatpush2.bf16.msra.mxu0 0
    %890 = vmatprep.subr.bf16.mxu0 0
    %891 = vmatpush2.bf16.msra.mxu0 0
    %892 = vmatprep.subr.bf16.mxu0 0
    %893 = vmatpush2.bf16.msra.mxu0 0
    %894 = vmatprep.subr.bf16.mxu0 0
    %895 = vmatpush2.bf16.msra.mxu0 0
    %896 = vmatprep.subr.bf16.mxu0 0
    %897 = vmatpush2.bf16.msra.mxu0 0
    %898 = vmatprep.subr.bf16.mxu0 0
    %899 = vmatpush2.bf16.msra.mxu0 0
    %900 = vmatprep.subr.bf16.mxu0 0
    %901 = vmatpush2.bf16.msra.mxu0 0
    %902 = vmatprep.mubr.bf16.mxu0 0
    %903 = vmatmul.mubr.bf16.gmra.mxu0 %v865
    %v904 = vpop.f32.mrf.mxu0
    %v905 = vadd.f32 0.0, %v904
    %v906 = vpop.f32.mrf.mxu0
    %v907 = vpop.f32.mrf.mxu0
    %v908 = vpop.f32.mrf.mxu0
    %909 = vdwg.mxu0
    %910 = vrot.lane.b32.xlu0 %v186, 48
    %v911 = vpop.permute.xlu0 %910
    %v913 = vsel %vm190, %v861, 0
    %v916 = vsel %vm319, %v911, 0
    %918 = vmatprep.subr.bf16.mxu0 0
    %919 = vmatpush1.bf16.msra.mxu0 0
    %920 = vmatprep.subr.bf16.mxu0 0
    %921 = vmatpush1.bf16.msra.mxu0 0
    %922 = vmatprep.subr.bf16.mxu0 0
    %923 = vmatpush1.bf16.msra.mxu0 0
    %924 = vmatprep.subr.bf16.mxu0 0
    %925 = vmatpush1.bf16.msra.mxu0 0
    %926 = vmatprep.subr.bf16.mxu0 0
    %927 = vmatpush1.bf16.msra.mxu0 0
    %928 = vmatprep.subr.bf16.mxu0 0
    %929 = vmatpush1.bf16.msra.mxu0 0
    %930 = vmatprep.subr.bf16.mxu0 0
    %931 = vmatpush1.bf16.msra.mxu0 0
    %932 = vmatprep.subr.bf16.mxu0 0
    %933 = vmatpush1.bf16.msra.mxu0 %v916
    %934 = vmatprep.subr.bf16.mxu0 0
    %935 = vmatpush2.bf16.msra.mxu0 0
    %936 = vmatprep.subr.bf16.mxu0 0
    %937 = vmatpush2.bf16.msra.mxu0 0
    %938 = vmatprep.subr.bf16.mxu0 0
    %939 = vmatpush2.bf16.msra.mxu0 0
    %940 = vmatprep.subr.bf16.mxu0 0
    %941 = vmatpush2.bf16.msra.mxu0 0
    %942 = vmatprep.subr.bf16.mxu0 0
    %943 = vmatpush2.bf16.msra.mxu0 0
    %944 = vmatprep.subr.bf16.mxu0 0
    %945 = vmatpush2.bf16.msra.mxu0 0
    %946 = vmatprep.subr.bf16.mxu0 0
    %947 = vmatpush2.bf16.msra.mxu0 0
    %948 = vmatprep.subr.bf16.mxu0 0
    %949 = vmatpush2.bf16.msra.mxu0 0
    %950 = vmatprep.mubr.bf16.mxu0 0
    %951 = vmatmul.mubr.bf16.gmra.mxu0 %v913
    %v952 = vpop.f32.mrf.mxu0
    %v953 = vadd.f32 0.0, %v952
    %v954 = vpop.f32.mrf.mxu0
    %v955 = vpop.f32.mrf.mxu0
    %v956 = vpop.f32.mrf.mxu0
    %957 = vdwg.mxu0
    %v958 = vpack.c.bf16 %v953, %v905
    %s959 = scalar_lea.vmem %s8, 8
    %v960 = vld [vmem:[%s959] sm:$0xf]
    %v962 = vsel %vm190, %v958, 0
    %v965 = vsel %vm319, %v960, 0
    %967 = vmatprep.subr.bf16.mxu0 0
    %968 = vmatpush1.bf16.msra.mxu0 0
    %969 = vmatprep.subr.bf16.mxu0 0
    %970 = vmatpush1.bf16.msra.mxu0 0
    %971 = vmatprep.subr.bf16.mxu0 0
    %972 = vmatpush1.bf16.msra.mxu0 0
    %973 = vmatprep.subr.bf16.mxu0 0
    %974 = vmatpush1.bf16.msra.mxu0 0
    %975 = vmatprep.subr.bf16.mxu0 0
    %976 = vmatpush1.bf16.msra.mxu0 0
    %977 = vmatprep.subr.bf16.mxu0 0
    %978 = vmatpush1.bf16.msra.mxu0 0
    %979 = vmatprep.subr.bf16.mxu0 0
    %980 = vmatpush1.bf16.msra.mxu0 0
    %981 = vmatprep.subr.bf16.mxu0 0
    %982 = vmatpush1.bf16.msra.mxu0 %v965
    %983 = vmatprep.subr.bf16.mxu0 0
    %984 = vmatpush2.bf16.msra.mxu0 0
    %985 = vmatprep.subr.bf16.mxu0 0
    %986 = vmatpush2.bf16.msra.mxu0 0
    %987 = vmatprep.subr.bf16.mxu0 0
    %988 = vmatpush2.bf16.msra.mxu0 0
    %989 = vmatprep.subr.bf16.mxu0 0
    %990 = vmatpush2.bf16.msra.mxu0 0
    %991 = vmatprep.subr.bf16.mxu0 0
    %992 = vmatpush2.bf16.msra.mxu0 0
    %993 = vmatprep.subr.bf16.mxu0 0
    %994 = vmatpush2.bf16.msra.mxu0 0
    %995 = vmatprep.subr.bf16.mxu0 0
    %996 = vmatpush2.bf16.msra.mxu0 0
    %997 = vmatprep.subr.bf16.mxu0 0
    %998 = vmatpush2.bf16.msra.mxu0 0
    %999 = vmatprep.mubr.bf16.mxu0 0
    %1000 = vmatmul.mubr.bf16.gmra.mxu0 %v962
    %v1001 = vpop.f32.mrf.mxu0
    %v1002 = vadd.f32 0.0, %v1001
    %v1003 = vpop.f32.mrf.mxu0
    %v1004 = vpop.f32.mrf.mxu0
    %v1005 = vadd.f32 0.0, %v1004
    %v1006 = vpop.f32.mrf.mxu0
    %1007 = vdwg.mxu0
    %v1008 = vadd.f32 %v728, %v1002
    %v1009 = vadd.f32 %v731, %v1005
    %1010 = vrot.lane.b32.xlu0 %v185, 104
    %v1011 = vpop.permute.xlu0 %1010
    %1012 = vrot.lane.b32.xlu0 %v185, 72
    %v1013 = vpop.permute.xlu0 %1012
    %v1015 = vsel %vm190, %v1011, 0
    %v1018 = vsel %vm190, %v1013, 0
    %1020 = vmatprep.subr.bf16.mxu0 0
    %1021 = vmatpush1.bf16.xpose.msra.mxu0 0
    %1022 = vmatprep.subr.bf16.mxu0 0
    %1023 = vmatpush1.bf16.xpose.msra.mxu0 0
    %1024 = vmatprep.subr.bf16.mxu0 0
    %1025 = vmatpush1.bf16.xpose.msra.mxu0 0
    %1026 = vmatprep.subr.bf16.mxu0 0
    %1027 = vmatpush1.bf16.xpose.msra.mxu0 0
    %1028 = vmatprep.subr.bf16.mxu0 0
    %1029 = vmatpush1.bf16.xpose.msra.mxu0 0
    %1030 = vmatprep.subr.bf16.mxu0 0
    %1031 = vmatpush1.bf16.xpose.msra.mxu0 0
    %1032 = vmatprep.subr.bf16.mxu0 0
    %1033 = vmatpush1.bf16.xpose.msra.mxu0 0
    %1034 = vmatprep.subr.bf16.mxu0 0
    %1035 = vmatpush1.bf16.xpose.msra.mxu0 %v1018
    %1036 = vmatprep.subr.bf16.mxu0 0
    %1037 = vmatpush2.bf16.xpose.msra.mxu0 0
    %1038 = vmatprep.subr.bf16.mxu0 0
    %1039 = vmatpush2.bf16.xpose.msra.mxu0 0
    %1040 = vmatprep.subr.bf16.mxu0 0
    %1041 = vmatpush2.bf16.xpose.msra.mxu0 0
    %1042 = vmatprep.subr.bf16.mxu0 0
    %1043 = vmatpush2.bf16.xpose.msra.mxu0 0
    %1044 = vmatprep.subr.bf16.mxu0 0
    %1045 = vmatpush2.bf16.xpose.msra.mxu0 0
    %1046 = vmatprep.subr.bf16.mxu0 0
    %1047 = vmatpush2.bf16.xpose.msra.mxu0 0
    %1048 = vmatprep.subr.bf16.mxu0 0
    %1049 = vmatpush2.bf16.xpose.msra.mxu0 0
    %1050 = vmatprep.subr.bf16.mxu0 0
    %1051 = vmatpush2.bf16.xpose.msra.mxu0 0
    %1052 = vmatprep.mubr.bf16.mxu0 0
    %1053 = vmatmul.mubr.bf16.gmra.mxu0 %v1015
    %v1054 = vpop.f32.mrf.mxu0
    %v1055 = vadd.f32 0.0, %v1054
    %v1056 = vpop.f32.mrf.mxu0
    %v1057 = vpop.f32.mrf.mxu0
    %v1058 = vpop.f32.mrf.mxu0
    %1059 = vdwg.mxu0
    %1060 = vrot.lane.b32.xlu0 %v186, 104
    %v1061 = vpop.permute.xlu0 %1060
    %1062 = vrot.lane.b32.xlu0 %v186, 72
    %v1063 = vpop.permute.xlu0 %1062
    %v1065 = vsel %vm190, %v1061, 0
    %v1068 = vsel %vm190, %v1063, 0
    %1070 = vmatprep.subr.bf16.mxu0 0
    %1071 = vmatpush1.bf16.xpose.msra.mxu0 0
    %1072 = vmatprep.subr.bf16.mxu0 0
    %1073 = vmatpush1.bf16.xpose.msra.mxu0 0
    %1074 = vmatprep.subr.bf16.mxu0 0
    %1075 = vmatpush1.bf16.xpose.msra.mxu0 0
    %1076 = vmatprep.subr.bf16.mxu0 0
    %1077 = vmatpush1.bf16.xpose.msra.mxu0 0
    %1078 = vmatprep.subr.bf16.mxu0 0
    %1079 = vmatpush1.bf16.xpose.msra.mxu0 0
    %1080 = vmatprep.subr.bf16.mxu0 0
    %1081 = vmatpush1.bf16.xpose.msra.mxu0 0
    %1082 = vmatprep.subr.bf16.mxu0 0
    %1083 = vmatpush1.bf16.xpose.msra.mxu0 0
    %1084 = vmatprep.subr.bf16.mxu0 0
    %1085 = vmatpush1.bf16.xpose.msra.mxu0 %v1068
    %1086 = vmatprep.subr.bf16.mxu0 0
    %1087 = vmatpush2.bf16.xpose.msra.mxu0 0
    %1088 = vmatprep.subr.bf16.mxu0 0
    %1089 = vmatpush2.bf16.xpose.msra.mxu0 0
    %1090 = vmatprep.subr.bf16.mxu0 0
    %1091 = vmatpush2.bf16.xpose.msra.mxu0 0
    %1092 = vmatprep.subr.bf16.mxu0 0
    %1093 = vmatpush2.bf16.xpose.msra.mxu0 0
    %1094 = vmatprep.subr.bf16.mxu0 0
    %1095 = vmatpush2.bf16.xpose.msra.mxu0 0
    %1096 = vmatprep.subr.bf16.mxu0 0
    %1097 = vmatpush2.bf16.xpose.msra.mxu0 0
    %1098 = vmatprep.subr.bf16.mxu0 0
    %1099 = vmatpush2.bf16.xpose.msra.mxu0 0
    %1100 = vmatprep.subr.bf16.mxu0 0
    %1101 = vmatpush2.bf16.xpose.msra.mxu0 0
    %1102 = vmatprep.mubr.bf16.mxu0 0
    %1103 = vmatmul.mubr.bf16.gmra.mxu0 %v1065
    %v1104 = vpop.f32.mrf.mxu0
    %v1105 = vadd.f32 0.0, %v1104
    %v1106 = vpop.f32.mrf.mxu0
    %v1107 = vpop.f32.mrf.mxu0
    %v1108 = vpop.f32.mrf.mxu0
    %1109 = vdwg.mxu0
    %v1110 = vmul.f32 %v1055, 0.35355338
    %v1111 = vmul.f32 %v1105, 0.35355338
    %v1112 = vadd.f32 %v1110, %v64
    %v1113 = vadd.f32 %v1111, %v64
    %v1114 = vsel %vm190, %v1112, -inf
    %1115 = vmax.xlane.f32.xlu0 %v1114
    %v1116 = vpop.xlane.xlu0 %1115
    %v1117 = vsel %vm190, %v1113, -inf
    %1118 = vmax.xlane.f32.xlu0 %v1117
    %v1119 = vpop.xlane.xlu0 %1118
    %v1120 = vsub.f32 %v1112, %v1116
    %v1121 = vsub.f32 %v1113, %v1119
    %v1122 = vmul.f32 %v1120, 1.442695
    %v1123 = vpow.pop %v1122
    %v1124 = vmul.f32 %v1121, 1.442695
    %v1125 = vpow.pop %v1124
    %v1126 = vsel %vm190, %v1123, 0.0
    %1127 = vadd.xlane.f32.xlu0 %v1126
    %v1128 = vpop.xlane.xlu0 %1127
    %v1129 = vsel %vm190, %v1125, 0.0
    %1130 = vadd.xlane.f32.xlu0 %v1129
    %v1131 = vpop.xlane.xlu0 %1130
    %v1132 = vrcp.pop %v1128
    %v1133 = vrcp.pop %v1131
    %v1134 = vmul.f32 %v1123, %v1132
    %v1135 = vmul.f32 %v1125, %v1133
    %v1136 = vpack.c.bf16 %v1134, %v1134
    %v1137 = vpack.c.bf16 %v1135, %v1135
    %1138 = vrot.lane.b32.xlu0 %v185, 40
    %v1139 = vpop.permute.xlu0 %1138
    %v1141 = vsel %vm190, %v1136, 0
    %v1144 = vsel %vm319, %v1139, 0
    %1146 = vmatprep.subr.bf16.mxu0 0
    %1147 = vmatpush1.bf16.msra.mxu0 0
    %1148 = vmatprep.subr.bf16.mxu0 0
    %1149 = vmatpush1.bf16.msra.mxu0 0
    %1150 = vmatprep.subr.bf16.mxu0 0
    %1151 = vmatpush1.bf16.msra.mxu0 0
    %1152 = vmatprep.subr.bf16.mxu0 0
    %1153 = vmatpush1.bf16.msra.mxu0 0
    %1154 = vmatprep.subr.bf16.mxu0 0
    %1155 = vmatpush1.bf16.msra.mxu0 0
    %1156 = vmatprep.subr.bf16.mxu0 0
    %1157 = vmatpush1.bf16.msra.mxu0 0
    %1158 = vmatprep.subr.bf16.mxu0 0
    %1159 = vmatpush1.bf16.msra.mxu0 0
    %1160 = vmatprep.subr.bf16.mxu0 0
    %1161 = vmatpush1.bf16.msra.mxu0 %v1144
    %1162 = vmatprep.subr.bf16.mxu0 0
    %1163 = vmatpush2.bf16.msra.mxu0 0
    %1164 = vmatprep.subr.bf16.mxu0 0
    %1165 = vmatpush2.bf16.msra.mxu0 0
    %1166 = vmatprep.subr.bf16.mxu0 0
    %1167 = vmatpush2.bf16.msra.mxu0 0
    %1168 = vmatprep.subr.bf16.mxu0 0
    %1169 = vmatpush2.bf16.msra.mxu0 0
    %1170 = vmatprep.subr.bf16.mxu0 0
    %1171 = vmatpush2.bf16.msra.mxu0 0
    %1172 = vmatprep.subr.bf16.mxu0 0
    %1173 = vmatpush2.bf16.msra.mxu0 0
    %1174 = vmatprep.subr.bf16.mxu0 0
    %1175 = vmatpush2.bf16.msra.mxu0 0
    %1176 = vmatprep.subr.bf16.mxu0 0
    %1177 = vmatpush2.bf16.msra.mxu0 0
    %1178 = vmatprep.mubr.bf16.mxu0 0
    %1179 = vmatmul.mubr.bf16.gmra.mxu0 %v1141
    %v1180 = vpop.f32.mrf.mxu0
    %v1181 = vadd.f32 0.0, %v1180
    %v1182 = vpop.f32.mrf.mxu0
    %v1183 = vpop.f32.mrf.mxu0
    %v1184 = vpop.f32.mrf.mxu0
    %1185 = vdwg.mxu0
    %1186 = vrot.lane.b32.xlu0 %v186, 40
    %v1187 = vpop.permute.xlu0 %1186
    %v1189 = vsel %vm190, %v1137, 0
    %v1192 = vsel %vm319, %v1187, 0
    %1194 = vmatprep.subr.bf16.mxu0 0
    %1195 = vmatpush1.bf16.msra.mxu0 0
    %1196 = vmatprep.subr.bf16.mxu0 0
    %1197 = vmatpush1.bf16.msra.mxu0 0
    %1198 = vmatprep.subr.bf16.mxu0 0
    %1199 = vmatpush1.bf16.msra.mxu0 0
    %1200 = vmatprep.subr.bf16.mxu0 0
    %1201 = vmatpush1.bf16.msra.mxu0 0
    %1202 = vmatprep.subr.bf16.mxu0 0
    %1203 = vmatpush1.bf16.msra.mxu0 0
    %1204 = vmatprep.subr.bf16.mxu0 0
    %1205 = vmatpush1.bf16.msra.mxu0 0
    %1206 = vmatprep.subr.bf16.mxu0 0
    %1207 = vmatpush1.bf16.msra.mxu0 0
    %1208 = vmatprep.subr.bf16.mxu0 0
    %1209 = vmatpush1.bf16.msra.mxu0 %v1192
    %1210 = vmatprep.subr.bf16.mxu0 0
    %1211 = vmatpush2.bf16.msra.mxu0 0
    %1212 = vmatprep.subr.bf16.mxu0 0
    %1213 = vmatpush2.bf16.msra.mxu0 0
    %1214 = vmatprep.subr.bf16.mxu0 0
    %1215 = vmatpush2.bf16.msra.mxu0 0
    %1216 = vmatprep.subr.bf16.mxu0 0
    %1217 = vmatpush2.bf16.msra.mxu0 0
    %1218 = vmatprep.subr.bf16.mxu0 0
    %1219 = vmatpush2.bf16.msra.mxu0 0
    %1220 = vmatprep.subr.bf16.mxu0 0
    %1221 = vmatpush2.bf16.msra.mxu0 0
    %1222 = vmatprep.subr.bf16.mxu0 0
    %1223 = vmatpush2.bf16.msra.mxu0 0
    %1224 = vmatprep.subr.bf16.mxu0 0
    %1225 = vmatpush2.bf16.msra.mxu0 0
    %1226 = vmatprep.mubr.bf16.mxu0 0
    %1227 = vmatmul.mubr.bf16.gmra.mxu0 %v1189
    %v1228 = vpop.f32.mrf.mxu0
    %v1229 = vadd.f32 0.0, %v1228
    %v1230 = vpop.f32.mrf.mxu0
    %v1231 = vpop.f32.mrf.mxu0
    %v1232 = vpop.f32.mrf.mxu0
    %1233 = vdwg.mxu0
    %v1234 = vpack.c.bf16 %v1229, %v1181
    %s1235 = scalar_lea.vmem %s8, 12
    %v1236 = vld [vmem:[%s1235] sm:$0xf]
    %v1238 = vsel %vm190, %v1234, 0
    %v1241 = vsel %vm319, %v1236, 0
    %1243 = vmatprep.subr.bf16.mxu0 0
    %1244 = vmatpush1.bf16.msra.mxu0 0
    %1245 = vmatprep.subr.bf16.mxu0 0
    %1246 = vmatpush1.bf16.msra.mxu0 0
    %1247 = vmatprep.subr.bf16.mxu0 0
    %1248 = vmatpush1.bf16.msra.mxu0 0
    %1249 = vmatprep.subr.bf16.mxu0 0
    %1250 = vmatpush1.bf16.msra.mxu0 0
    %1251 = vmatprep.subr.bf16.mxu0 0
    %1252 = vmatpush1.bf16.msra.mxu0 0
    %1253 = vmatprep.subr.bf16.mxu0 0
    %1254 = vmatpush1.bf16.msra.mxu0 0
    %1255 = vmatprep.subr.bf16.mxu0 0
    %1256 = vmatpush1.bf16.msra.mxu0 0
    %1257 = vmatprep.subr.bf16.mxu0 0
    %1258 = vmatpush1.bf16.msra.mxu0 %v1241
    %1259 = vmatprep.subr.bf16.mxu0 0
    %1260 = vmatpush2.bf16.msra.mxu0 0
    %1261 = vmatprep.subr.bf16.mxu0 0
    %1262 = vmatpush2.bf16.msra.mxu0 0
    %1263 = vmatprep.subr.bf16.mxu0 0
    %1264 = vmatpush2.bf16.msra.mxu0 0
    %1265 = vmatprep.subr.bf16.mxu0 0
    %1266 = vmatpush2.bf16.msra.mxu0 0
    %1267 = vmatprep.subr.bf16.mxu0 0
    %1268 = vmatpush2.bf16.msra.mxu0 0
    %1269 = vmatprep.subr.bf16.mxu0 0
    %1270 = vmatpush2.bf16.msra.mxu0 0
    %1271 = vmatprep.subr.bf16.mxu0 0
    %1272 = vmatpush2.bf16.msra.mxu0 0
    %1273 = vmatprep.subr.bf16.mxu0 0
    %1274 = vmatpush2.bf16.msra.mxu0 0
    %1275 = vmatprep.mubr.bf16.mxu0 0
    %1276 = vmatmul.mubr.bf16.gmra.mxu0 %v1238
    %v1277 = vpop.f32.mrf.mxu0
    %v1278 = vadd.f32 0.0, %v1277
    %v1279 = vpop.f32.mrf.mxu0
    %v1280 = vpop.f32.mrf.mxu0
    %v1281 = vadd.f32 0.0, %v1280
    %v1282 = vpop.f32.mrf.mxu0
    %1283 = vdwg.mxu0
    %v1284 = vadd.f32 %v1008, %v1278
    %v1285 = vadd.f32 %v1009, %v1281
    %v1286 = vadd.f32 %v69, %v1284
    %v1287 = vadd.f32 %v70, %v1285
    %v1288 = vld [vmem:[%s9] sm:$0x1]
    %v1290 = vlaneseq
    %v1291 = vshrl.u32 %v1290, 7
    %v1292 = vsub.s32 0, %v1291
    %v1293 = vrot.slane %v1288, %v1292
    %v1295 = vadd.f32 %v1286, %v1293
    %v1296 = vadd.f32 %v1287, %v1293
    %v1297 = vld [vmem:[%s10] sm:$0x1]
    %v1298 = vld [vmem:[%s11] sm:$0x1]
    %v1299 = vsel %vm73, %v1295, 0.0
    %1300 = vadd.xlane.f32.xlu0 %v1299
    %v1301 = vpop.xlane.xlu0 %1300
    %v1302 = vsel %vm73, %v1296, 0.0
    %1303 = vadd.xlane.f32.xlu0 %v1302
    %v1304 = vpop.xlane.xlu0 %1303
    %v1305 = vmul.f32 %v1301, %v80
    %v1306 = vmul.f32 %v1304, %v80
    %v1307 = vsub.f32 %v1295, %v1305
    %v1308 = vsub.f32 %v1296, %v1306
    %v1309 = vmul.f32 %v1307, %v1307
    %v1310 = vmul.f32 %v1308, %v1308
    %v1311 = vsel %vm73, %v1309, 0.0
    %1312 = vadd.xlane.f32.xlu0 %v1311
    %v1313 = vpop.xlane.xlu0 %1312
    %v1314 = vsel %vm73, %v1310, 0.0
    %1315 = vadd.xlane.f32.xlu0 %v1314
    %v1316 = vpop.xlane.xlu0 %1315
    %v1317 = vmul.f32 %v1313, %v80
    %v1318 = vmul.f32 %v1316, %v80
    %v1319 = vadd.f32 %v1317, 1e-05
    %v1320 = vadd.f32 %v1318, 1e-05
    %v1321 = vrsqrt.pop %v1319
    %v1322 = vrsqrt.pop %v1320
    %v1323 = vmul.f32 %v1307, %v1321
    %v1324 = vmul.f32 %v1308, %v1322
    %v1326 = vlaneseq
    %v1327 = vshrl.u32 %v1326, 7
    %v1328 = vsub.s32 0, %v1327
    %v1329 = vrot.slane %v1297, %v1328
    %v1331 = vmul.f32 %v1323, %v1329
    %v1332 = vmul.f32 %v1324, %v1329
    %v1334 = vlaneseq
    %v1335 = vshrl.u32 %v1334, 7
    %v1336 = vsub.s32 0, %v1335
    %v1337 = vrot.slane %v1298, %v1336
    %v1339 = vadd.f32 %v1331, %v1337
    %v1340 = vadd.f32 %v1332, %v1337
    %v1341 = vpack.c.bf16 %v1340, %v1339
    %v1342 = vld [vmem:[%s12] sm:$0xf]
    %v1343 = vld [vmem:[%s12 + $0x4] sm:$0xf]
    %v1344 = vld [vmem:[%s12 + $0x8] sm:$0xf]
    %v1345 = vld [vmem:[%s12 + $0xc] sm:$0xf]
    %v1346 = vld [vmem:[%s13] sm:$0x1]
    %v1348 = vlaneseq
    %v1349 = vshrl.u32 %v1348, 7
    %v1350 = vsub.s32 0, %v1349
    %v1351 = vrot.slane %v1346, %v1350
    %v1357 = vunpack.c.l.b16 %v1342
    %v1358 = vunpack.c.l.b16 %v1343
    %v1359 = vunpack.c.l.b16 %v1344
    %v1360 = vunpack.c.l.b16 %v1345
    %v1361 = vpack.c.b16 %v1358, %v1357
    %v1362 = vpack.c.b16 %v1360, %v1359
    %v1366 = vsel %vm73, %v1341, 0
    %1368 = vmatprep.subr.bf16.mxu0 0
    %1369 = vmatpush1.bf16.msra.mxu0 0
    %1370 = vmatprep.subr.bf16.mxu0 0
    %1371 = vmatpush1.bf16.msra.mxu0 0
    %1372 = vmatprep.subr.bf16.mxu0 0
    %1373 = vmatpush1.bf16.msra.mxu0 0
    %1374 = vmatprep.subr.bf16.mxu0 0
    %1375 = vmatpush1.bf16.msra.mxu0 0
    %1376 = vmatprep.subr.bf16.mxu0 0
    %1377 = vmatpush1.bf16.msra.mxu0 0
    %1378 = vmatprep.subr.bf16.mxu0 0
    %1379 = vmatpush1.bf16.msra.mxu0 0
    %1380 = vmatprep.subr.bf16.mxu0 0
    %1381 = vmatpush1.bf16.msra.mxu0 %v1362
    %1382 = vmatprep.subr.bf16.mxu0 0
    %1383 = vmatpush1.bf16.msra.mxu0 %v1361
    %1384 = vmatprep.subr.bf16.mxu0 0
    %1385 = vmatpush2.bf16.msra.mxu0 0
    %1386 = vmatprep.subr.bf16.mxu0 0
    %1387 = vmatpush2.bf16.msra.mxu0 0
    %1388 = vmatprep.subr.bf16.mxu0 0
    %1389 = vmatpush2.bf16.msra.mxu0 0
    %1390 = vmatprep.subr.bf16.mxu0 0
    %1391 = vmatpush2.bf16.msra.mxu0 0
    %1392 = vmatprep.subr.bf16.mxu0 0
    %1393 = vmatpush2.bf16.msra.mxu0 0
    %1394 = vmatprep.subr.bf16.mxu0 0
    %1395 = vmatpush2.bf16.msra.mxu0 0
    %1396 = vmatprep.subr.bf16.mxu0 0
    %1397 = vmatpush2.bf16.msra.mxu0 0
    %1398 = vmatprep.subr.bf16.mxu0 0
    %1399 = vmatpush2.bf16.msra.mxu0 0
    %1400 = vmatprep.mubr.bf16.mxu0 0
    %1401 = vmatmul.mubr.bf16.gmra.mxu0 %v1366
    %v1402 = vpop.f32.mrf.mxu0
    %v1403 = vadd.f32 %v1351, %v1402
    %v1404 = vpop.f32.mrf.mxu0
    %v1405 = vpop.f32.mrf.mxu0
    %v1406 = vadd.f32 %v1351, %v1405
    %v1407 = vpop.f32.mrf.mxu0
    %1408 = vdwg.mxu0
    %v1409 = vmul.f32 %v1403, 1.702
    %v1410 = vmul.f32 %v1406, 1.702
    %v1411 = vxor.u32 %v1409, 2147483648
    %v1412 = vxor.u32 %v1410, 2147483648
    %v1413 = vmul.f32 %v1411, 1.442695
    %v1414 = vpow.pop %v1413
    %v1415 = vmul.f32 %v1412, 1.442695
    %v1416 = vpow.pop %v1415
    %v1417 = vadd.f32 %v1414, 1.0
    %v1418 = vadd.f32 %v1416, 1.0
    %v1419 = vrcp.pop %v1417
    %v1420 = vmul.f32 1.0, %v1419
    %v1421 = vrcp.pop %v1418
    %v1422 = vmul.f32 1.0, %v1421
    %v1423 = vmul.f32 %v1403, %v1420
    %v1424 = vmul.f32 %v1406, %v1422
    %v1425 = vpack.c.bf16 %v1424, %v1423
    %v1426 = vld [vmem:[%s14] sm:$0xf]
    %v1427 = vld [vmem:[%s14 + $0x4] sm:$0xf]
    %v1428 = vld [vmem:[%s14 + $0x8] sm:$0xf]
    %v1429 = vld [vmem:[%s14 + $0xc] sm:$0xf]
    %v1430 = vld [vmem:[%s14 + $0x10] sm:$0xf]
    %v1431 = vld [vmem:[%s14 + $0x14] sm:$0xf]
    %v1432 = vld [vmem:[%s14 + $0x18] sm:$0xf]
    %v1433 = vld [vmem:[%s14 + $0x1c] sm:$0xf]
    %v1434 = vld [vmem:[%s14 + $0x20] sm:$0xf]
    %v1435 = vld [vmem:[%s14 + $0x24] sm:$0xf]
    %v1436 = vld [vmem:[%s14 + $0x28] sm:$0xf]
    %v1437 = vld [vmem:[%s14 + $0x2c] sm:$0xf]
    %v1438 = vld [vmem:[%s14 + $0x30] sm:$0xf]
    %v1439 = vld [vmem:[%s14 + $0x34] sm:$0xf]
    %v1440 = vld [vmem:[%s14 + $0x38] sm:$0xf]
    %v1441 = vld [vmem:[%s14 + $0x3c] sm:$0xf]
    %v1442 = vld [vmem:[%s15] sm:$0x1]
    %v1444 = vlaneseq
    %v1445 = vshrl.u32 %v1444, 7
    %v1446 = vsub.s32 0, %v1445
    %v1447 = vrot.slane %v1442, %v1446
    %v1465 = vunpack.c.l.b16 %v1426
    %v1466 = vunpack.c.l.b16 %v1427
    %v1467 = vunpack.c.l.b16 %v1428
    %v1468 = vunpack.c.l.b16 %v1429
    %v1469 = vunpack.c.l.b16 %v1430
    %v1470 = vunpack.c.l.b16 %v1431
    %v1471 = vunpack.c.l.b16 %v1432
    %v1472 = vunpack.c.l.b16 %v1433
    %v1473 = vunpack.c.l.b16 %v1434
    %v1474 = vunpack.c.l.b16 %v1435
    %v1475 = vunpack.c.l.b16 %v1436
    %v1476 = vunpack.c.l.b16 %v1437
    %v1477 = vunpack.c.l.b16 %v1438
    %v1478 = vunpack.c.l.b16 %v1439
    %v1479 = vunpack.c.l.b16 %v1440
    %v1480 = vunpack.c.l.b16 %v1441
    %v1481 = vpack.c.b16 %v1466, %v1465
    %v1482 = vpack.c.b16 %v1468, %v1467
    %v1483 = vpack.c.b16 %v1470, %v1469
    %v1484 = vpack.c.b16 %v1472, %v1471
    %v1485 = vpack.c.b16 %v1474, %v1473
    %v1486 = vpack.c.b16 %v1476, %v1475
    %v1487 = vpack.c.b16 %v1478, %v1477
    %v1488 = vpack.c.b16 %v1480, %v1479
    %1497 = vmatprep.subr.bf16.mxu0 0
    %1498 = vmatpush1.bf16.msra.mxu0 %v1488
    %1499 = vmatprep.subr.bf16.mxu0 0
    %1500 = vmatpush1.bf16.msra.mxu0 %v1487
    %1501 = vmatprep.subr.bf16.mxu0 0
    %1502 = vmatpush1.bf16.msra.mxu0 %v1486
    %1503 = vmatprep.subr.bf16.mxu0 0
    %1504 = vmatpush1.bf16.msra.mxu0 %v1485
    %1505 = vmatprep.subr.bf16.mxu0 0
    %1506 = vmatpush1.bf16.msra.mxu0 %v1484
    %1507 = vmatprep.subr.bf16.mxu0 0
    %1508 = vmatpush1.bf16.msra.mxu0 %v1483
    %1509 = vmatprep.subr.bf16.mxu0 0
    %1510 = vmatpush1.bf16.msra.mxu0 %v1482
    %1511 = vmatprep.subr.bf16.mxu0 0
    %1512 = vmatpush1.bf16.msra.mxu0 %v1481
    %1513 = vmatprep.subr.bf16.mxu0 0
    %1514 = vmatpush2.bf16.msra.mxu0 0
    %1515 = vmatprep.subr.bf16.mxu0 0
    %1516 = vmatpush2.bf16.msra.mxu0 0
    %1517 = vmatprep.subr.bf16.mxu0 0
    %1518 = vmatpush2.bf16.msra.mxu0 0
    %1519 = vmatprep.subr.bf16.mxu0 0
    %1520 = vmatpush2.bf16.msra.mxu0 0
    %1521 = vmatprep.subr.bf16.mxu0 0
    %1522 = vmatpush2.bf16.msra.mxu0 0
    %1523 = vmatprep.subr.bf16.mxu0 0
    %1524 = vmatpush2.bf16.msra.mxu0 0
    %1525 = vmatprep.subr.bf16.mxu0 0
    %1526 = vmatpush2.bf16.msra.mxu0 0
    %1527 = vmatprep.subr.bf16.mxu0 0
    %1528 = vmatpush2.bf16.msra.mxu0 0
    %1529 = vmatprep.mubr.bf16.mxu0 0
    %1530 = vmatmul.mubr.bf16.gmra.mxu0 %v1425
    %v1531 = vpop.f32.mrf.mxu0
    %v1532 = vadd.f32 %v1447, %v1531
    %v1533 = vpop.f32.mrf.mxu0
    %v1534 = vpop.f32.mrf.mxu0
    %v1535 = vadd.f32 %v1447, %v1534
    %v1536 = vpop.f32.mrf.mxu0
    %1537 = vdwg.mxu0
    %v1538 = vadd.f32 %v1295, %v1532
    %v1539 = vadd.f32 %v1296, %v1535
    %s1540 = scalar_lea.vmem %s4, 1
    %v1541 = vld [vmem:[%s1540] sm:$0x1]
    %s1542 = scalar_lea.vmem %s5, 1
    %v1543 = vld [vmem:[%s1542] sm:$0x1]
    %v1544 = vsel %vm73, %v1538, 0.0
    %1545 = vadd.xlane.f32.xlu0 %v1544
    %v1546 = vpop.xlane.xlu0 %1545
    %v1547 = vsel %vm73, %v1539, 0.0
    %1548 = vadd.xlane.f32.xlu0 %v1547
    %v1549 = vpop.xlane.xlu0 %1548
    %v1550 = vmul.f32 %v1546, %v80
    %v1551 = vmul.f32 %v1549, %v80
    %v1552 = vsub.f32 %v1538, %v1550
    %v1553 = vsub.f32 %v1539, %v1551
    %v1554 = vmul.f32 %v1552, %v1552
    %v1555 = vmul.f32 %v1553, %v1553
    %v1556 = vsel %vm73, %v1554, 0.0
    %1557 = vadd.xlane.f32.xlu0 %v1556
    %v1558 = vpop.xlane.xlu0 %1557
    %v1559 = vsel %vm73, %v1555, 0.0
    %1560 = vadd.xlane.f32.xlu0 %v1559
    %v1561 = vpop.xlane.xlu0 %1560
    %v1562 = vmul.f32 %v1558, %v80
    %v1563 = vmul.f32 %v1561, %v80
    %v1564 = vadd.f32 %v1562, 1e-05
    %v1565 = vadd.f32 %v1563, 1e-05
    %v1566 = vrsqrt.pop %v1564
    %v1567 = vrsqrt.pop %v1565
    %v1568 = vmul.f32 %v1552, %v1566
    %v1569 = vmul.f32 %v1553, %v1567
    %v1571 = vlaneseq
    %v1572 = vshrl.u32 %v1571, 7
    %v1573 = vsub.s32 0, %v1572
    %v1574 = vrot.slane %v1541, %v1573
    %v1576 = vmul.f32 %v1568, %v1574
    %v1577 = vmul.f32 %v1569, %v1574
    %v1579 = vlaneseq
    %v1580 = vshrl.u32 %v1579, 7
    %v1581 = vsub.s32 0, %v1580
    %v1582 = vrot.slane %v1543, %v1581
    %v1584 = vadd.f32 %v1576, %v1582
    %v1585 = vadd.f32 %v1577, %v1582
    %v1586 = vpack.c.bf16 %v1585, %v1584
    %s1587 = scalar_lea.vmem %s6, 16
    %v1588 = vld [vmem:[%s1587] sm:$0xf]
    %v1589 = vld [vmem:[%s1587 + $0x4] sm:$0xf]
    %v1590 = vld [vmem:[%s1587 + $0x8] sm:$0xf]
    %v1591 = vld [vmem:[%s1587 + $0xc] sm:$0xf]
    %s1592 = scalar_lea.vmem %s7, 1
    %v1593 = vld [vmem:[%s1592] sm:$0x1]
    %v1595 = vlaneseq
    %v1596 = vshrl.u32 %v1595, 7
    %v1597 = vsub.s32 0, %v1596
    %v1598 = vrot.slane %v1593, %v1597
    %v1604 = vunpack.c.l.b16 %v1588
    %v1605 = vunpack.c.l.b16 %v1589
    %v1606 = vunpack.c.l.b16 %v1590
    %v1607 = vunpack.c.l.b16 %v1591
    %v1608 = vpack.c.b16 %v1605, %v1604
    %v1609 = vpack.c.b16 %v1607, %v1606
    %v1613 = vsel %vm73, %v1586, 0
    %1615 = vmatprep.subr.bf16.mxu0 0
    %1616 = vmatpush1.bf16.msra.mxu0 0
    %1617 = vmatprep.subr.bf16.mxu0 0
    %1618 = vmatpush1.bf16.msra.mxu0 0
    %1619 = vmatprep.subr.bf16.mxu0 0
    %1620 = vmatpush1.bf16.msra.mxu0 0
    %1621 = vmatprep.subr.bf16.mxu0 0
    %1622 = vmatpush1.bf16.msra.mxu0 0
    %1623 = vmatprep.subr.bf16.mxu0 0
    %1624 = vmatpush1.bf16.msra.mxu0 0
    %1625 = vmatprep.subr.bf16.mxu0 0
    %1626 = vmatpush1.bf16.msra.mxu0 0
    %1627 = vmatprep.subr.bf16.mxu0 0
    %1628 = vmatpush1.bf16.msra.mxu0 %v1609
    %1629 = vmatprep.subr.bf16.mxu0 0
    %1630 = vmatpush1.bf16.msra.mxu0 %v1608
    %1631 = vmatprep.subr.bf16.mxu0 0
    %1632 = vmatpush2.bf16.msra.mxu0 0
    %1633 = vmatprep.subr.bf16.mxu0 0
    %1634 = vmatpush2.bf16.msra.mxu0 0
    %1635 = vmatprep.subr.bf16.mxu0 0
    %1636 = vmatpush2.bf16.msra.mxu0 0
    %1637 = vmatprep.subr.bf16.mxu0 0
    %1638 = vmatpush2.bf16.msra.mxu0 0
    %1639 = vmatprep.subr.bf16.mxu0 0
    %1640 = vmatpush2.bf16.msra.mxu0 0
    %1641 = vmatprep.subr.bf16.mxu0 0
    %1642 = vmatpush2.bf16.msra.mxu0 0
    %1643 = vmatprep.subr.bf16.mxu0 0
    %1644 = vmatpush2.bf16.msra.mxu0 0
    %1645 = vmatprep.subr.bf16.mxu0 0
    %1646 = vmatpush2.bf16.msra.mxu0 0
    %1647 = vmatprep.mubr.bf16.mxu0 0
    %1648 = vmatmul.mubr.bf16.gmra.mxu0 %v1613
    %v1649 = vpop.f32.mrf.mxu0
    %v1650 = vadd.f32 %v1598, %v1649
    %v1651 = vpop.f32.mrf.mxu0
    %v1652 = vpop.f32.mrf.mxu0
    %v1653 = vadd.f32 %v1598, %v1652
    %v1654 = vpop.f32.mrf.mxu0
    %1655 = vdwg.mxu0
    %v1656 = vpack.c.bf16 %v1650, %v1650
    %v1657 = vpack.c.bf16 %v1653, %v1653
    %1659 = vrot.lane.b32.xlu0 %v1656, 96
    %v1660 = vpop.permute.xlu0 %1659
    %v1662 = vsel %vm190, %v1656, 0
    %v1665 = vsel %vm190, %v1660, 0
    %1667 = vmatprep.subr.bf16.mxu0 0
    %1668 = vmatpush1.bf16.xpose.msra.mxu0 0
    %1669 = vmatprep.subr.bf16.mxu0 0
    %1670 = vmatpush1.bf16.xpose.msra.mxu0 0
    %1671 = vmatprep.subr.bf16.mxu0 0
    %1672 = vmatpush1.bf16.xpose.msra.mxu0 0
    %1673 = vmatprep.subr.bf16.mxu0 0
    %1674 = vmatpush1.bf16.xpose.msra.mxu0 0
    %1675 = vmatprep.subr.bf16.mxu0 0
    %1676 = vmatpush1.bf16.xpose.msra.mxu0 0
    %1677 = vmatprep.subr.bf16.mxu0 0
    %1678 = vmatpush1.bf16.xpose.msra.mxu0 0
    %1679 = vmatprep.subr.bf16.mxu0 0
    %1680 = vmatpush1.bf16.xpose.msra.mxu0 0
    %1681 = vmatprep.subr.bf16.mxu0 0
    %1682 = vmatpush1.bf16.xpose.msra.mxu0 %v1665
    %1683 = vmatprep.subr.bf16.mxu0 0
    %1684 = vmatpush2.bf16.xpose.msra.mxu0 0
    %1685 = vmatprep.subr.bf16.mxu0 0
    %1686 = vmatpush2.bf16.xpose.msra.mxu0 0
    %1687 = vmatprep.subr.bf16.mxu0 0
    %1688 = vmatpush2.bf16.xpose.msra.mxu0 0
    %1689 = vmatprep.subr.bf16.mxu0 0
    %1690 = vmatpush2.bf16.xpose.msra.mxu0 0
    %1691 = vmatprep.subr.bf16.mxu0 0
    %1692 = vmatpush2.bf16.xpose.msra.mxu0 0
    %1693 = vmatprep.subr.bf16.mxu0 0
    %1694 = vmatpush2.bf16.xpose.msra.mxu0 0
    %1695 = vmatprep.subr.bf16.mxu0 0
    %1696 = vmatpush2.bf16.xpose.msra.mxu0 0
    %1697 = vmatprep.subr.bf16.mxu0 0
    %1698 = vmatpush2.bf16.xpose.msra.mxu0 0
    %1699 = vmatprep.mubr.bf16.mxu0 0
    %1700 = vmatmul.mubr.bf16.gmra.mxu0 %v1662
    %v1701 = vpop.f32.mrf.mxu0
    %v1702 = vadd.f32 0.0, %v1701
    %v1703 = vpop.f32.mrf.mxu0
    %v1704 = vpop.f32.mrf.mxu0
    %v1705 = vpop.f32.mrf.mxu0
    %1706 = vdwg.mxu0
    %1708 = vrot.lane.b32.xlu0 %v1657, 96
    %v1709 = vpop.permute.xlu0 %1708
    %v1711 = vsel %vm190, %v1657, 0
    %v1714 = vsel %vm190, %v1709, 0
    %1716 = vmatprep.subr.bf16.mxu0 0
    %1717 = vmatpush1.bf16.xpose.msra.mxu0 0
    %1718 = vmatprep.subr.bf16.mxu0 0
    %1719 = vmatpush1.bf16.xpose.msra.mxu0 0
    %1720 = vmatprep.subr.bf16.mxu0 0
    %1721 = vmatpush1.bf16.xpose.msra.mxu0 0
    %1722 = vmatprep.subr.bf16.mxu0 0
    %1723 = vmatpush1.bf16.xpose.msra.mxu0 0
    %1724 = vmatprep.subr.bf16.mxu0 0
    %1725 = vmatpush1.bf16.xpose.msra.mxu0 0
    %1726 = vmatprep.subr.bf16.mxu0 0
    %1727 = vmatpush1.bf16.xpose.msra.mxu0 0
    %1728 = vmatprep.subr.bf16.mxu0 0
    %1729 = vmatpush1.bf16.xpose.msra.mxu0 0
    %1730 = vmatprep.subr.bf16.mxu0 0
    %1731 = vmatpush1.bf16.xpose.msra.mxu0 %v1714
    %1732 = vmatprep.subr.bf16.mxu0 0
    %1733 = vmatpush2.bf16.xpose.msra.mxu0 0
    %1734 = vmatprep.subr.bf16.mxu0 0
    %1735 = vmatpush2.bf16.xpose.msra.mxu0 0
    %1736 = vmatprep.subr.bf16.mxu0 0
    %1737 = vmatpush2.bf16.xpose.msra.mxu0 0
    %1738 = vmatprep.subr.bf16.mxu0 0
    %1739 = vmatpush2.bf16.xpose.msra.mxu0 0
    %1740 = vmatprep.subr.bf16.mxu0 0
    %1741 = vmatpush2.bf16.xpose.msra.mxu0 0
    %1742 = vmatprep.subr.bf16.mxu0 0
    %1743 = vmatpush2.bf16.xpose.msra.mxu0 0
    %1744 = vmatprep.subr.bf16.mxu0 0
    %1745 = vmatpush2.bf16.xpose.msra.mxu0 0
    %1746 = vmatprep.subr.bf16.mxu0 0
    %1747 = vmatpush2.bf16.xpose.msra.mxu0 0
    %1748 = vmatprep.mubr.bf16.mxu0 0
    %1749 = vmatmul.mubr.bf16.gmra.mxu0 %v1711
    %v1750 = vpop.f32.mrf.mxu0
    %v1751 = vadd.f32 0.0, %v1750
    %v1752 = vpop.f32.mrf.mxu0
    %v1753 = vpop.f32.mrf.mxu0
    %v1754 = vpop.f32.mrf.mxu0
    %1755 = vdwg.mxu0
    %v1756 = vmul.f32 %v1702, 0.35355338
    %v1757 = vmul.f32 %v1751, 0.35355338
    %v1758 = vadd.f32 %v1756, %v64
    %v1759 = vadd.f32 %v1757, %v64
    %v1760 = vsel %vm190, %v1758, -inf
    %1761 = vmax.xlane.f32.xlu0 %v1760
    %v1762 = vpop.xlane.xlu0 %1761
    %v1763 = vsel %vm190, %v1759, -inf
    %1764 = vmax.xlane.f32.xlu0 %v1763
    %v1765 = vpop.xlane.xlu0 %1764
    %v1766 = vsub.f32 %v1758, %v1762
    %v1767 = vsub.f32 %v1759, %v1765
    %v1768 = vmul.f32 %v1766, 1.442695
    %v1769 = vpow.pop %v1768
    %v1770 = vmul.f32 %v1767, 1.442695
    %v1771 = vpow.pop %v1770
    %v1772 = vsel %vm190, %v1769, 0.0
    %1773 = vadd.xlane.f32.xlu0 %v1772
    %v1774 = vpop.xlane.xlu0 %1773
    %v1775 = vsel %vm190, %v1771, 0.0
    %1776 = vadd.xlane.f32.xlu0 %v1775
    %v1777 = vpop.xlane.xlu0 %1776
    %v1778 = vrcp.pop %v1774
    %v1779 = vrcp.pop %v1777
    %v1780 = vmul.f32 %v1769, %v1778
    %v1781 = vmul.f32 %v1771, %v1779
    %v1782 = vpack.c.bf16 %v1780, %v1780
    %v1783 = vpack.c.bf16 %v1781, %v1781
    %1784 = vrot.lane.b32.xlu0 %v1656, 64
    %v1785 = vpop.permute.xlu0 %1784
    %v1787 = vsel %vm190, %v1782, 0
    %v1790 = vsel %vm319, %v1785, 0
    %1792 = vmatprep.subr.bf16.mxu0 0
    %1793 = vmatpush1.bf16.msra.mxu0 0
    %1794 = vmatprep.subr.bf16.mxu0 0
    %1795 = vmatpush1.bf16.msra.mxu0 0
    %1796 = vmatprep.subr.bf16.mxu0 0
    %1797 = vmatpush1.bf16.msra.mxu0 0
    %1798 = vmatprep.subr.bf16.mxu0 0
    %1799 = vmatpush1.bf16.msra.mxu0 0
    %1800 = vmatprep.subr.bf16.mxu0 0
    %1801 = vmatpush1.bf16.msra.mxu0 0
    %1802 = vmatprep.subr.bf16.mxu0 0
    %1803 = vmatpush1.bf16.msra.mxu0 0
    %1804 = vmatprep.subr.bf16.mxu0 0
    %1805 = vmatpush1.bf16.msra.mxu0 0
    %1806 = vmatprep.subr.bf16.mxu0 0
    %1807 = vmatpush1.bf16.msra.mxu0 %v1790
    %1808 = vmatprep.subr.bf16.mxu0 0
    %1809 = vmatpush2.bf16.msra.mxu0 0
    %1810 = vmatprep.subr.bf16.mxu0 0
    %1811 = vmatpush2.bf16.msra.mxu0 0
    %1812 = vmatprep.subr.bf16.mxu0 0
    %1813 = vmatpush2.bf16.msra.mxu0 0
    %1814 = vmatprep.subr.bf16.mxu0 0
    %1815 = vmatpush2.bf16.msra.mxu0 0
    %1816 = vmatprep.subr.bf16.mxu0 0
    %1817 = vmatpush2.bf16.msra.mxu0 0
    %1818 = vmatprep.subr.bf16.mxu0 0
    %1819 = vmatpush2.bf16.msra.mxu0 0
    %1820 = vmatprep.subr.bf16.mxu0 0
    %1821 = vmatpush2.bf16.msra.mxu0 0
    %1822 = vmatprep.subr.bf16.mxu0 0
    %1823 = vmatpush2.bf16.msra.mxu0 0
    %1824 = vmatprep.mubr.bf16.mxu0 0
    %1825 = vmatmul.mubr.bf16.gmra.mxu0 %v1787
    %v1826 = vpop.f32.mrf.mxu0
    %v1827 = vadd.f32 0.0, %v1826
    %v1828 = vpop.f32.mrf.mxu0
    %v1829 = vpop.f32.mrf.mxu0
    %v1830 = vpop.f32.mrf.mxu0
    %1831 = vdwg.mxu0
    %1832 = vrot.lane.b32.xlu0 %v1657, 64
    %v1833 = vpop.permute.xlu0 %1832
    %v1835 = vsel %vm190, %v1783, 0
    %v1838 = vsel %vm319, %v1833, 0
    %1840 = vmatprep.subr.bf16.mxu0 0
    %1841 = vmatpush1.bf16.msra.mxu0 0
    %1842 = vmatprep.subr.bf16.mxu0 0
    %1843 = vmatpush1.bf16.msra.mxu0 0
    %1844 = vmatprep.subr.bf16.mxu0 0
    %1845 = vmatpush1.bf16.msra.mxu0 0
    %1846 = vmatprep.subr.bf16.mxu0 0
    %1847 = vmatpush1.bf16.msra.mxu0 0
    %1848 = vmatprep.subr.bf16.mxu0 0
    %1849 = vmatpush1.bf16.msra.mxu0 0
    %1850 = vmatprep.subr.bf16.mxu0 0
    %1851 = vmatpush1.bf16.msra.mxu0 0
    %1852 = vmatprep.subr.bf16.mxu0 0
    %1853 = vmatpush1.bf16.msra.mxu0 0
    %1854 = vmatprep.subr.bf16.mxu0 0
    %1855 = vmatpush1.bf16.msra.mxu0 %v1838
    %1856 = vmatprep.subr.bf16.mxu0 0
    %1857 = vmatpush2.bf16.msra.mxu0 0
    %1858 = vmatprep.subr.bf16.mxu0 0
    %1859 = vmatpush2.bf16.msra.mxu0 0
    %1860 = vmatprep.subr.bf16.mxu0 0
    %1861 = vmatpush2.bf16.msra.mxu0 0
    %1862 = vmatprep.subr.bf16.mxu0 0
    %1863 = vmatpush2.bf16.msra.mxu0 0
    %1864 = vmatprep.subr.bf16.mxu0 0
    %1865 = vmatpush2.bf16.msra.mxu0 0
    %1866 = vmatprep.subr.bf16.mxu0 0
    %1867 = vmatpush2.bf16.msra.mxu0 0
    %1868 = vmatprep.subr.bf16.mxu0 0
    %1869 = vmatpush2.bf16.msra.mxu0 0
    %1870 = vmatprep.subr.bf16.mxu0 0
    %1871 = vmatpush2.bf16.msra.mxu0 0
    %1872 = vmatprep.mubr.bf16.mxu0 0
    %1873 = vmatmul.mubr.bf16.gmra.mxu0 %v1835
    %v1874 = vpop.f32.mrf.mxu0
    %v1875 = vadd.f32 0.0, %v1874
    %v1876 = vpop.f32.mrf.mxu0
    %v1877 = vpop.f32.mrf.mxu0
    %v1878 = vpop.f32.mrf.mxu0
    %1879 = vdwg.mxu0
    %v1880 = vpack.c.bf16 %v1875, %v1827
    %s1881 = scalar_lea.vmem %s8, 16
    %v1882 = vld [vmem:[%s1881] sm:$0xf]
    %1883 = vrot.lane.b32.xlu0 %v1656, 120
    %v1884 = vpop.permute.xlu0 %1883
    %1885 = vrot.lane.b32.xlu0 %v1656, 88
    %v1886 = vpop.permute.xlu0 %1885
    %v1888 = vsel %vm190, %v1884, 0
    %v1891 = vsel %vm190, %v1886, 0
    %1893 = vmatprep.subr.bf16.mxu0 0
    %1894 = vmatpush1.bf16.xpose.msra.mxu0 0
    %1895 = vmatprep.subr.bf16.mxu0 0
    %1896 = vmatpush1.bf16.xpose.msra.mxu0 0
    %1897 = vmatprep.subr.bf16.mxu0 0
    %1898 = vmatpush1.bf16.xpose.msra.mxu0 0
    %1899 = vmatprep.subr.bf16.mxu0 0
    %1900 = vmatpush1.bf16.xpose.msra.mxu0 0
    %1901 = vmatprep.subr.bf16.mxu0 0
    %1902 = vmatpush1.bf16.xpose.msra.mxu0 0
    %1903 = vmatprep.subr.bf16.mxu0 0
    %1904 = vmatpush1.bf16.xpose.msra.mxu0 0
    %1905 = vmatprep.subr.bf16.mxu0 0
    %1906 = vmatpush1.bf16.xpose.msra.mxu0 0
    %1907 = vmatprep.subr.bf16.mxu0 0
    %1908 = vmatpush1.bf16.xpose.msra.mxu0 %v1891
    %1909 = vmatprep.subr.bf16.mxu0 0
    %1910 = vmatpush2.bf16.xpose.msra.mxu0 0
    %1911 = vmatprep.subr.bf16.mxu0 0
    %1912 = vmatpush2.bf16.xpose.msra.mxu0 0
    %1913 = vmatprep.subr.bf16.mxu0 0
    %1914 = vmatpush2.bf16.xpose.msra.mxu0 0
    %1915 = vmatprep.subr.bf16.mxu0 0
    %1916 = vmatpush2.bf16.xpose.msra.mxu0 0
    %1917 = vmatprep.subr.bf16.mxu0 0
    %1918 = vmatpush2.bf16.xpose.msra.mxu0 0
    %1919 = vmatprep.subr.bf16.mxu0 0
    %1920 = vmatpush2.bf16.xpose.msra.mxu0 0
    %1921 = vmatprep.subr.bf16.mxu0 0
    %1922 = vmatpush2.bf16.xpose.msra.mxu0 0
    %1923 = vmatprep.subr.bf16.mxu0 0
    %1924 = vmatpush2.bf16.xpose.msra.mxu0 0
    %1925 = vmatprep.mubr.bf16.mxu0 0
    %1926 = vmatmul.mubr.bf16.gmra.mxu0 %v1888
    %v1927 = vpop.f32.mrf.mxu0
    %v1928 = vadd.f32 0.0, %v1927
    %v1929 = vpop.f32.mrf.mxu0
    %v1930 = vpop.f32.mrf.mxu0
    %v1931 = vpop.f32.mrf.mxu0
    %1932 = vdwg.mxu0
    %1933 = vrot.lane.b32.xlu0 %v1657, 120
    %v1934 = vpop.permute.xlu0 %1933
    %1935 = vrot.lane.b32.xlu0 %v1657, 88
    %v1936 = vpop.permute.xlu0 %1935
    %v1938 = vsel %vm190, %v1934, 0
    %v1941 = vsel %vm190, %v1936, 0
    %1943 = vmatprep.subr.bf16.mxu0 0
    %1944 = vmatpush1.bf16.xpose.msra.mxu0 0
    %1945 = vmatprep.subr.bf16.mxu0 0
    %1946 = vmatpush1.bf16.xpose.msra.mxu0 0
    %1947 = vmatprep.subr.bf16.mxu0 0
    %1948 = vmatpush1.bf16.xpose.msra.mxu0 0
    %1949 = vmatprep.subr.bf16.mxu0 0
    %1950 = vmatpush1.bf16.xpose.msra.mxu0 0
    %1951 = vmatprep.subr.bf16.mxu0 0
    %1952 = vmatpush1.bf16.xpose.msra.mxu0 0
    %1953 = vmatprep.subr.bf16.mxu0 0
    %1954 = vmatpush1.bf16.xpose.msra.mxu0 0
    %1955 = vmatprep.subr.bf16.mxu0 0
    %1956 = vmatpush1.bf16.xpose.msra.mxu0 0
    %1957 = vmatprep.subr.bf16.mxu0 0
    %1958 = vmatpush1.bf16.xpose.msra.mxu0 %v1941
    %1959 = vmatprep.subr.bf16.mxu0 0
    %1960 = vmatpush2.bf16.xpose.msra.mxu0 0
    %1961 = vmatprep.subr.bf16.mxu0 0
    %1962 = vmatpush2.bf16.xpose.msra.mxu0 0
    %1963 = vmatprep.subr.bf16.mxu0 0
    %1964 = vmatpush2.bf16.xpose.msra.mxu0 0
    %1965 = vmatprep.subr.bf16.mxu0 0
    %1966 = vmatpush2.bf16.xpose.msra.mxu0 0
    %1967 = vmatprep.subr.bf16.mxu0 0
    %1968 = vmatpush2.bf16.xpose.msra.mxu0 0
    %1969 = vmatprep.subr.bf16.mxu0 0
    %1970 = vmatpush2.bf16.xpose.msra.mxu0 0
    %1971 = vmatprep.subr.bf16.mxu0 0
    %1972 = vmatpush2.bf16.xpose.msra.mxu0 0
    %1973 = vmatprep.subr.bf16.mxu0 0
    %1974 = vmatpush2.bf16.xpose.msra.mxu0 0
    %1975 = vmatprep.mubr.bf16.mxu0 0
    %1976 = vmatmul.mubr.bf16.gmra.mxu0 %v1938
    %v1977 = vpop.f32.mrf.mxu0
    %v1978 = vadd.f32 0.0, %v1977
    %v1979 = vpop.f32.mrf.mxu0
    %v1980 = vpop.f32.mrf.mxu0
    %v1981 = vpop.f32.mrf.mxu0
    %1982 = vdwg.mxu0
    %v1983 = vmul.f32 %v1928, 0.35355338
    %v1984 = vmul.f32 %v1978, 0.35355338
    %v1985 = vadd.f32 %v1983, %v64
    %v1986 = vadd.f32 %v1984, %v64
    %v1987 = vsel %vm190, %v1985, -inf
    %1988 = vmax.xlane.f32.xlu0 %v1987
    %v1989 = vpop.xlane.xlu0 %1988
    %v1990 = vsel %vm190, %v1986, -inf
    %1991 = vmax.xlane.f32.xlu0 %v1990
    %v1992 = vpop.xlane.xlu0 %1991
    %v1993 = vsub.f32 %v1985, %v1989
    %v1994 = vsub.f32 %v1986, %v1992
    %v1995 = vmul.f32 %v1993, 1.442695
    %v1996 = vpow.pop %v1995
    %v1997 = vmul.f32 %v1994, 1.442695
    %v1998 = vpow.pop %v1997
    %v1999 = vsel %vm190, %v1996, 0.0
    %2000 = vadd.xlane.f32.xlu0 %v1999
    %v2001 = vpop.xlane.xlu0 %2000
    %v2002 = vsel %vm190, %v1998, 0.0
    %2003 = vadd.xlane.f32.xlu0 %v2002
    %v2004 = vpop.xlane.xlu0 %2003
    %v2005 = vrcp.pop %v2001
    %v2006 = vrcp.pop %v2004
    %v2007 = vmul.f32 %v1996, %v2005
    %v2008 = vmul.f32 %v1998, %v2006
    %v2009 = vpack.c.bf16 %v2007, %v2007
    %v2010 = vpack.c.bf16 %v2008, %v2008
    %2011 = vrot.lane.b32.xlu0 %v1656, 56
    %v2012 = vpop.permute.xlu0 %2011
    %v2014 = vsel %vm190, %v2009, 0
    %v2017 = vsel %vm319, %v2012, 0
    %2019 = vmatprep.subr.bf16.mxu0 0
    %2020 = vmatpush1.bf16.msra.mxu0 0
    %2021 = vmatprep.subr.bf16.mxu0 0
    %2022 = vmatpush1.bf16.msra.mxu0 0
    %2023 = vmatprep.subr.bf16.mxu0 0
    %2024 = vmatpush1.bf16.msra.mxu0 0
    %2025 = vmatprep.subr.bf16.mxu0 0
    %2026 = vmatpush1.bf16.msra.mxu0 0
    %2027 = vmatprep.subr.bf16.mxu0 0
    %2028 = vmatpush1.bf16.msra.mxu0 0
    %2029 = vmatprep.subr.bf16.mxu0 0
    %2030 = vmatpush1.bf16.msra.mxu0 0
    %2031 = vmatprep.subr.bf16.mxu0 0
    %2032 = vmatpush1.bf16.msra.mxu0 0
    %2033 = vmatprep.subr.bf16.mxu0 0
    %2034 = vmatpush1.bf16.msra.mxu0 %v2017
    %2035 = vmatprep.subr.bf16.mxu0 0
    %2036 = vmatpush2.bf16.msra.mxu0 0
    %2037 = vmatprep.subr.bf16.mxu0 0
    %2038 = vmatpush2.bf16.msra.mxu0 0
    %2039 = vmatprep.subr.bf16.mxu0 0
    %2040 = vmatpush2.bf16.msra.mxu0 0
    %2041 = vmatprep.subr.bf16.mxu0 0
    %2042 = vmatpush2.bf16.msra.mxu0 0
    %2043 = vmatprep.subr.bf16.mxu0 0
    %2044 = vmatpush2.bf16.msra.mxu0 0
    %2045 = vmatprep.subr.bf16.mxu0 0
    %2046 = vmatpush2.bf16.msra.mxu0 0
    %2047 = vmatprep.subr.bf16.mxu0 0
    %2048 = vmatpush2.bf16.msra.mxu0 0
    %2049 = vmatprep.subr.bf16.mxu0 0
    %2050 = vmatpush2.bf16.msra.mxu0 0
    %2051 = vmatprep.mubr.bf16.mxu0 0
    %2052 = vmatmul.mubr.bf16.gmra.mxu0 %v2014
    %v2053 = vpop.f32.mrf.mxu0
    %v2054 = vadd.f32 0.0, %v2053
    %v2055 = vpop.f32.mrf.mxu0
    %v2056 = vpop.f32.mrf.mxu0
    %v2057 = vpop.f32.mrf.mxu0
    %2058 = vdwg.mxu0
    %2059 = vrot.lane.b32.xlu0 %v1657, 56
    %v2060 = vpop.permute.xlu0 %2059
    %v2062 = vsel %vm190, %v2010, 0
    %v2065 = vsel %vm319, %v2060, 0
    %2067 = vmatprep.subr.bf16.mxu0 0
    %2068 = vmatpush1.bf16.msra.mxu0 0
    %2069 = vmatprep.subr.bf16.mxu0 0
    %2070 = vmatpush1.bf16.msra.mxu0 0
    %2071 = vmatprep.subr.bf16.mxu0 0
    %2072 = vmatpush1.bf16.msra.mxu0 0
    %2073 = vmatprep.subr.bf16.mxu0 0
    %2074 = vmatpush1.bf16.msra.mxu0 0
    %2075 = vmatprep.subr.bf16.mxu0 0
    %2076 = vmatpush1.bf16.msra.mxu0 0
    %2077 = vmatprep.subr.bf16.mxu0 0
    %2078 = vmatpush1.bf16.msra.mxu0 0
    %2079 = vmatprep.subr.bf16.mxu0 0
    %2080 = vmatpush1.bf16.msra.mxu0 0
    %2081 = vmatprep.subr.bf16.mxu0 0
    %2082 = vmatpush1.bf16.msra.mxu0 %v2065
    %2083 = vmatprep.subr.bf16.mxu0 0
    %2084 = vmatpush2.bf16.msra.mxu0 0
    %2085 = vmatprep.subr.bf16.mxu0 0
    %2086 = vmatpush2.bf16.msra.mxu0 0
    %2087 = vmatprep.subr.bf16.mxu0 0
    %2088 = vmatpush2.bf16.msra.mxu0 0
    %2089 = vmatprep.subr.bf16.mxu0 0
    %2090 = vmatpush2.bf16.msra.mxu0 0
    %2091 = vmatprep.subr.bf16.mxu0 0
    %2092 = vmatpush2.bf16.msra.mxu0 0
    %2093 = vmatprep.subr.bf16.mxu0 0
    %2094 = vmatpush2.bf16.msra.mxu0 0
    %2095 = vmatprep.subr.bf16.mxu0 0
    %2096 = vmatpush2.bf16.msra.mxu0 0
    %2097 = vmatprep.subr.bf16.mxu0 0
    %2098 = vmatpush2.bf16.msra.mxu0 0
    %2099 = vmatprep.mubr.bf16.mxu0 0
    %2100 = vmatmul.mubr.bf16.gmra.mxu0 %v2062
    %v2101 = vpop.f32.mrf.mxu0
    %v2102 = vadd.f32 0.0, %v2101
    %v2103 = vpop.f32.mrf.mxu0
    %v2104 = vpop.f32.mrf.mxu0
    %v2105 = vpop.f32.mrf.mxu0
    %2106 = vdwg.mxu0
    %v2107 = vpack.c.bf16 %v2102, %v2054
    %s2108 = scalar_lea.vmem %s8, 20
    %v2109 = vld [vmem:[%s2108] sm:$0xf]
    %v2111 = vsel %vm190, %v2107, 0
    %v2114 = vsel %vm319, %v2109, 0
    %2116 = vmatprep.subr.bf16.mxu0 0
    %2117 = vmatpush1.bf16.msra.mxu0 0
    %2118 = vmatprep.subr.bf16.mxu0 0
    %2119 = vmatpush1.bf16.msra.mxu0 0
    %2120 = vmatprep.subr.bf16.mxu0 0
    %2121 = vmatpush1.bf16.msra.mxu0 0
    %2122 = vmatprep.subr.bf16.mxu0 0
    %2123 = vmatpush1.bf16.msra.mxu0 0
    %2124 = vmatprep.subr.bf16.mxu0 0
    %2125 = vmatpush1.bf16.msra.mxu0 0
    %2126 = vmatprep.subr.bf16.mxu0 0
    %2127 = vmatpush1.bf16.msra.mxu0 0
    %2128 = vmatprep.subr.bf16.mxu0 0
    %2129 = vmatpush1.bf16.msra.mxu0 0
    %2130 = vmatprep.subr.bf16.mxu0 0
    %2131 = vmatpush1.bf16.msra.mxu0 %v2114
    %2132 = vmatprep.subr.bf16.mxu0 0
    %2133 = vmatpush2.bf16.msra.mxu0 0
    %2134 = vmatprep.subr.bf16.mxu0 0
    %2135 = vmatpush2.bf16.msra.mxu0 0
    %2136 = vmatprep.subr.bf16.mxu0 0
    %2137 = vmatpush2.bf16.msra.mxu0 0
    %2138 = vmatprep.subr.bf16.mxu0 0
    %2139 = vmatpush2.bf16.msra.mxu0 0
    %2140 = vmatprep.subr.bf16.mxu0 0
    %2141 = vmatpush2.bf16.msra.mxu0 0
    %2142 = vmatprep.subr.bf16.mxu0 0
    %2143 = vmatpush2.bf16.msra.mxu0 0
    %2144 = vmatprep.subr.bf16.mxu0 0
    %2145 = vmatpush2.bf16.msra.mxu0 0
    %2146 = vmatprep.subr.bf16.mxu0 0
    %2147 = vmatpush2.bf16.msra.mxu0 0
    %2148 = vmatprep.mubr.bf16.mxu0 0
    %2149 = vmatmul.mubr.bf16.gmra.mxu0 %v2111
    %v2150 = vpop.f32.mrf.mxu0
    %v2151 = vadd.f32 0.0, %v2150
    %v2152 = vpop.f32.mrf.mxu0
    %v2153 = vpop.f32.mrf.mxu0
    %v2154 = vadd.f32 0.0, %v2153
    %v2155 = vpop.f32.mrf.mxu0
    %2156 = vdwg.mxu0
    %v2158 = vsel %vm190, %v1880, 0
    %v2161 = vsel %vm319, %v1882, 0
    %2163 = vmatprep.subr.bf16.mxu0 0
    %2164 = vmatpush1.bf16.msra.mxu0 0
    %2165 = vmatprep.subr.bf16.mxu0 0
    %2166 = vmatpush1.bf16.msra.mxu0 0
    %2167 = vmatprep.subr.bf16.mxu0 0
    %2168 = vmatpush1.bf16.msra.mxu0 0
    %2169 = vmatprep.subr.bf16.mxu0 0
    %2170 = vmatpush1.bf16.msra.mxu0 0
    %2171 = vmatprep.subr.bf16.mxu0 0
    %2172 = vmatpush1.bf16.msra.mxu0 0
    %2173 = vmatprep.subr.bf16.mxu0 0
    %2174 = vmatpush1.bf16.msra.mxu0 0
    %2175 = vmatprep.subr.bf16.mxu0 0
    %2176 = vmatpush1.bf16.msra.mxu0 0
    %2177 = vmatprep.subr.bf16.mxu0 0
    %2178 = vmatpush1.bf16.msra.mxu0 %v2161
    %2179 = vmatprep.subr.bf16.mxu0 0
    %2180 = vmatpush2.bf16.msra.mxu0 0
    %2181 = vmatprep.subr.bf16.mxu0 0
    %2182 = vmatpush2.bf16.msra.mxu0 0
    %2183 = vmatprep.subr.bf16.mxu0 0
    %2184 = vmatpush2.bf16.msra.mxu0 0
    %2185 = vmatprep.subr.bf16.mxu0 0
    %2186 = vmatpush2.bf16.msra.mxu0 0
    %2187 = vmatprep.subr.bf16.mxu0 0
    %2188 = vmatpush2.bf16.msra.mxu0 0
    %2189 = vmatprep.subr.bf16.mxu0 0
    %2190 = vmatpush2.bf16.msra.mxu0 0
    %2191 = vmatprep.subr.bf16.mxu0 0
    %2192 = vmatpush2.bf16.msra.mxu0 0
    %2193 = vmatprep.subr.bf16.mxu0 0
    %2194 = vmatpush2.bf16.msra.mxu0 0
    %2195 = vmatprep.mubr.bf16.mxu0 0
    %2196 = vmatmul.mubr.bf16.gmra.mxu0 %v2158
    %v2197 = vpop.f32.mrf.mxu0
    %v2198 = vadd.f32 %v2151, %v2197
    %v2199 = vpop.f32.mrf.mxu0
    %v2200 = vpop.f32.mrf.mxu0
    %v2201 = vadd.f32 %v2154, %v2200
    %v2202 = vpop.f32.mrf.mxu0
    %2203 = vdwg.mxu0
    %2204 = vrot.lane.b32.xlu0 %v1656, 112
    %v2205 = vpop.permute.xlu0 %2204
    %2206 = vrot.lane.b32.xlu0 %v1656, 80
    %v2207 = vpop.permute.xlu0 %2206
    %v2209 = vsel %vm190, %v2205, 0
    %v2212 = vsel %vm190, %v2207, 0
    %2214 = vmatprep.subr.bf16.mxu0 0
    %2215 = vmatpush1.bf16.xpose.msra.mxu0 0
    %2216 = vmatprep.subr.bf16.mxu0 0
    %2217 = vmatpush1.bf16.xpose.msra.mxu0 0
    %2218 = vmatprep.subr.bf16.mxu0 0
    %2219 = vmatpush1.bf16.xpose.msra.mxu0 0
    %2220 = vmatprep.subr.bf16.mxu0 0
    %2221 = vmatpush1.bf16.xpose.msra.mxu0 0
    %2222 = vmatprep.subr.bf16.mxu0 0
    %2223 = vmatpush1.bf16.xpose.msra.mxu0 0
    %2224 = vmatprep.subr.bf16.mxu0 0
    %2225 = vmatpush1.bf16.xpose.msra.mxu0 0
    %2226 = vmatprep.subr.bf16.mxu0 0
    %2227 = vmatpush1.bf16.xpose.msra.mxu0 0
    %2228 = vmatprep.subr.bf16.mxu0 0
    %2229 = vmatpush1.bf16.xpose.msra.mxu0 %v2212
    %2230 = vmatprep.subr.bf16.mxu0 0
    %2231 = vmatpush2.bf16.xpose.msra.mxu0 0
    %2232 = vmatprep.subr.bf16.mxu0 0
    %2233 = vmatpush2.bf16.xpose.msra.mxu0 0
    %2234 = vmatprep.subr.bf16.mxu0 0
    %2235 = vmatpush2.bf16.xpose.msra.mxu0 0
    %2236 = vmatprep.subr.bf16.mxu0 0
    %2237 = vmatpush2.bf16.xpose.msra.mxu0 0
    %2238 = vmatprep.subr.bf16.mxu0 0
    %2239 = vmatpush2.bf16.xpose.msra.mxu0 0
    %2240 = vmatprep.subr.bf16.mxu0 0
    %2241 = vmatpush2.bf16.xpose.msra.mxu0 0
    %2242 = vmatprep.subr.bf16.mxu0 0
    %2243 = vmatpush2.bf16.xpose.msra.mxu0 0
    %2244 = vmatprep.subr.bf16.mxu0 0
    %2245 = vmatpush2.bf16.xpose.msra.mxu0 0
    %2246 = vmatprep.mubr.bf16.mxu0 0
    %2247 = vmatmul.mubr.bf16.gmra.mxu0 %v2209
    %v2248 = vpop.f32.mrf.mxu0
    %v2249 = vadd.f32 0.0, %v2248
    %v2250 = vpop.f32.mrf.mxu0
    %v2251 = vpop.f32.mrf.mxu0
    %v2252 = vpop.f32.mrf.mxu0
    %2253 = vdwg.mxu0
    %2254 = vrot.lane.b32.xlu0 %v1657, 112
    %v2255 = vpop.permute.xlu0 %2254
    %2256 = vrot.lane.b32.xlu0 %v1657, 80
    %v2257 = vpop.permute.xlu0 %2256
    %v2259 = vsel %vm190, %v2255, 0
    %v2262 = vsel %vm190, %v2257, 0
    %2264 = vmatprep.subr.bf16.mxu0 0
    %2265 = vmatpush1.bf16.xpose.msra.mxu0 0
    %2266 = vmatprep.subr.bf16.mxu0 0
    %2267 = vmatpush1.bf16.xpose.msra.mxu0 0
    %2268 = vmatprep.subr.bf16.mxu0 0
    %2269 = vmatpush1.bf16.xpose.msra.mxu0 0
    %2270 = vmatprep.subr.bf16.mxu0 0
    %2271 = vmatpush1.bf16.xpose.msra.mxu0 0
    %2272 = vmatprep.subr.bf16.mxu0 0
    %2273 = vmatpush1.bf16.xpose.msra.mxu0 0
    %2274 = vmatprep.subr.bf16.mxu0 0
    %2275 = vmatpush1.bf16.xpose.msra.mxu0 0
    %2276 = vmatprep.subr.bf16.mxu0 0
    %2277 = vmatpush1.bf16.xpose.msra.mxu0 0
    %2278 = vmatprep.subr.bf16.mxu0 0
    %2279 = vmatpush1.bf16.xpose.msra.mxu0 %v2262
    %2280 = vmatprep.subr.bf16.mxu0 0
    %2281 = vmatpush2.bf16.xpose.msra.mxu0 0
    %2282 = vmatprep.subr.bf16.mxu0 0
    %2283 = vmatpush2.bf16.xpose.msra.mxu0 0
    %2284 = vmatprep.subr.bf16.mxu0 0
    %2285 = vmatpush2.bf16.xpose.msra.mxu0 0
    %2286 = vmatprep.subr.bf16.mxu0 0
    %2287 = vmatpush2.bf16.xpose.msra.mxu0 0
    %2288 = vmatprep.subr.bf16.mxu0 0
    %2289 = vmatpush2.bf16.xpose.msra.mxu0 0
    %2290 = vmatprep.subr.bf16.mxu0 0
    %2291 = vmatpush2.bf16.xpose.msra.mxu0 0
    %2292 = vmatprep.subr.bf16.mxu0 0
    %2293 = vmatpush2.bf16.xpose.msra.mxu0 0
    %2294 = vmatprep.subr.bf16.mxu0 0
    %2295 = vmatpush2.bf16.xpose.msra.mxu0 0
    %2296 = vmatprep.mubr.bf16.mxu0 0
    %2297 = vmatmul.mubr.bf16.gmra.mxu0 %v2259
    %v2298 = vpop.f32.mrf.mxu0
    %v2299 = vadd.f32 0.0, %v2298
    %v2300 = vpop.f32.mrf.mxu0
    %v2301 = vpop.f32.mrf.mxu0
    %v2302 = vpop.f32.mrf.mxu0
    %2303 = vdwg.mxu0
    %v2304 = vmul.f32 %v2249, 0.35355338
    %v2305 = vmul.f32 %v2299, 0.35355338
    %v2306 = vadd.f32 %v2304, %v64
    %v2307 = vadd.f32 %v2305, %v64
    %v2308 = vsel %vm190, %v2306, -inf
    %2309 = vmax.xlane.f32.xlu0 %v2308
    %v2310 = vpop.xlane.xlu0 %2309
    %v2311 = vsel %vm190, %v2307, -inf
    %2312 = vmax.xlane.f32.xlu0 %v2311
    %v2313 = vpop.xlane.xlu0 %2312
    %v2314 = vsub.f32 %v2306, %v2310
    %v2315 = vsub.f32 %v2307, %v2313
    %v2316 = vmul.f32 %v2314, 1.442695
    %v2317 = vpow.pop %v2316
    %v2318 = vmul.f32 %v2315, 1.442695
    %v2319 = vpow.pop %v2318
    %v2320 = vsel %vm190, %v2317, 0.0
    %2321 = vadd.xlane.f32.xlu0 %v2320
    %v2322 = vpop.xlane.xlu0 %2321
    %v2323 = vsel %vm190, %v2319, 0.0
    %2324 = vadd.xlane.f32.xlu0 %v2323
    %v2325 = vpop.xlane.xlu0 %2324
    %v2326 = vrcp.pop %v2322
    %v2327 = vrcp.pop %v2325
    %v2328 = vmul.f32 %v2317, %v2326
    %v2329 = vmul.f32 %v2319, %v2327
    %v2330 = vpack.c.bf16 %v2328, %v2328
    %v2331 = vpack.c.bf16 %v2329, %v2329
    %2332 = vrot.lane.b32.xlu0 %v1656, 48
    %v2333 = vpop.permute.xlu0 %2332
    %v2335 = vsel %vm190, %v2330, 0
    %v2338 = vsel %vm319, %v2333, 0
    %2340 = vmatprep.subr.bf16.mxu0 0
    %2341 = vmatpush1.bf16.msra.mxu0 0
    %2342 = vmatprep.subr.bf16.mxu0 0
    %2343 = vmatpush1.bf16.msra.mxu0 0
    %2344 = vmatprep.subr.bf16.mxu0 0
    %2345 = vmatpush1.bf16.msra.mxu0 0
    %2346 = vmatprep.subr.bf16.mxu0 0
    %2347 = vmatpush1.bf16.msra.mxu0 0
    %2348 = vmatprep.subr.bf16.mxu0 0
    %2349 = vmatpush1.bf16.msra.mxu0 0
    %2350 = vmatprep.subr.bf16.mxu0 0
    %2351 = vmatpush1.bf16.msra.mxu0 0
    %2352 = vmatprep.subr.bf16.mxu0 0
    %2353 = vmatpush1.bf16.msra.mxu0 0
    %2354 = vmatprep.subr.bf16.mxu0 0
    %2355 = vmatpush1.bf16.msra.mxu0 %v2338
    %2356 = vmatprep.subr.bf16.mxu0 0
    %2357 = vmatpush2.bf16.msra.mxu0 0
    %2358 = vmatprep.subr.bf16.mxu0 0
    %2359 = vmatpush2.bf16.msra.mxu0 0
    %2360 = vmatprep.subr.bf16.mxu0 0
    %2361 = vmatpush2.bf16.msra.mxu0 0
    %2362 = vmatprep.subr.bf16.mxu0 0
    %2363 = vmatpush2.bf16.msra.mxu0 0
    %2364 = vmatprep.subr.bf16.mxu0 0
    %2365 = vmatpush2.bf16.msra.mxu0 0
    %2366 = vmatprep.subr.bf16.mxu0 0
    %2367 = vmatpush2.bf16.msra.mxu0 0
    %2368 = vmatprep.subr.bf16.mxu0 0
    %2369 = vmatpush2.bf16.msra.mxu0 0
    %2370 = vmatprep.subr.bf16.mxu0 0
    %2371 = vmatpush2.bf16.msra.mxu0 0
    %2372 = vmatprep.mubr.bf16.mxu0 0
    %2373 = vmatmul.mubr.bf16.gmra.mxu0 %v2335
    %v2374 = vpop.f32.mrf.mxu0
    %v2375 = vadd.f32 0.0, %v2374
    %v2376 = vpop.f32.mrf.mxu0
    %v2377 = vpop.f32.mrf.mxu0
    %v2378 = vpop.f32.mrf.mxu0
    %2379 = vdwg.mxu0
    %2380 = vrot.lane.b32.xlu0 %v1657, 48
    %v2381 = vpop.permute.xlu0 %2380
    %v2383 = vsel %vm190, %v2331, 0
    %v2386 = vsel %vm319, %v2381, 0
    %2388 = vmatprep.subr.bf16.mxu0 0
    %2389 = vmatpush1.bf16.msra.mxu0 0
    %2390 = vmatprep.subr.bf16.mxu0 0
    %2391 = vmatpush1.bf16.msra.mxu0 0
    %2392 = vmatprep.subr.bf16.mxu0 0
    %2393 = vmatpush1.bf16.msra.mxu0 0
    %2394 = vmatprep.subr.bf16.mxu0 0
    %2395 = vmatpush1.bf16.msra.mxu0 0
    %2396 = vmatprep.subr.bf16.mxu0 0
    %2397 = vmatpush1.bf16.msra.mxu0 0
    %2398 = vmatprep.subr.bf16.mxu0 0
    %2399 = vmatpush1.bf16.msra.mxu0 0
    %2400 = vmatprep.subr.bf16.mxu0 0
    %2401 = vmatpush1.bf16.msra.mxu0 0
    %2402 = vmatprep.subr.bf16.mxu0 0
    %2403 = vmatpush1.bf16.msra.mxu0 %v2386
    %2404 = vmatprep.subr.bf16.mxu0 0
    %2405 = vmatpush2.bf16.msra.mxu0 0
    %2406 = vmatprep.subr.bf16.mxu0 0
    %2407 = vmatpush2.bf16.msra.mxu0 0
    %2408 = vmatprep.subr.bf16.mxu0 0
    %2409 = vmatpush2.bf16.msra.mxu0 0
    %2410 = vmatprep.subr.bf16.mxu0 0
    %2411 = vmatpush2.bf16.msra.mxu0 0
    %2412 = vmatprep.subr.bf16.mxu0 0
    %2413 = vmatpush2.bf16.msra.mxu0 0
    %2414 = vmatprep.subr.bf16.mxu0 0
    %2415 = vmatpush2.bf16.msra.mxu0 0
    %2416 = vmatprep.subr.bf16.mxu0 0
    %2417 = vmatpush2.bf16.msra.mxu0 0
    %2418 = vmatprep.subr.bf16.mxu0 0
    %2419 = vmatpush2.bf16.msra.mxu0 0
    %2420 = vmatprep.mubr.bf16.mxu0 0
    %2421 = vmatmul.mubr.bf16.gmra.mxu0 %v2383
    %v2422 = vpop.f32.mrf.mxu0
    %v2423 = vadd.f32 0.0, %v2422
    %v2424 = vpop.f32.mrf.mxu0
    %v2425 = vpop.f32.mrf.mxu0
    %v2426 = vpop.f32.mrf.mxu0
    %2427 = vdwg.mxu0
    %v2428 = vpack.c.bf16 %v2423, %v2375
    %s2429 = scalar_lea.vmem %s8, 24
    %v2430 = vld [vmem:[%s2429] sm:$0xf]
    %v2432 = vsel %vm190, %v2428, 0
    %v2435 = vsel %vm319, %v2430, 0
    %2437 = vmatprep.subr.bf16.mxu0 0
    %2438 = vmatpush1.bf16.msra.mxu0 0
    %2439 = vmatprep.subr.bf16.mxu0 0
    %2440 = vmatpush1.bf16.msra.mxu0 0
    %2441 = vmatprep.subr.bf16.mxu0 0
    %2442 = vmatpush1.bf16.msra.mxu0 0
    %2443 = vmatprep.subr.bf16.mxu0 0
    %2444 = vmatpush1.bf16.msra.mxu0 0
    %2445 = vmatprep.subr.bf16.mxu0 0
    %2446 = vmatpush1.bf16.msra.mxu0 0
    %2447 = vmatprep.subr.bf16.mxu0 0
    %2448 = vmatpush1.bf16.msra.mxu0 0
    %2449 = vmatprep.subr.bf16.mxu0 0
    %2450 = vmatpush1.bf16.msra.mxu0 0
    %2451 = vmatprep.subr.bf16.mxu0 0
    %2452 = vmatpush1.bf16.msra.mxu0 %v2435
    %2453 = vmatprep.subr.bf16.mxu0 0
    %2454 = vmatpush2.bf16.msra.mxu0 0
    %2455 = vmatprep.subr.bf16.mxu0 0
    %2456 = vmatpush2.bf16.msra.mxu0 0
    %2457 = vmatprep.subr.bf16.mxu0 0
    %2458 = vmatpush2.bf16.msra.mxu0 0
    %2459 = vmatprep.subr.bf16.mxu0 0
    %2460 = vmatpush2.bf16.msra.mxu0 0
    %2461 = vmatprep.subr.bf16.mxu0 0
    %2462 = vmatpush2.bf16.msra.mxu0 0
    %2463 = vmatprep.subr.bf16.mxu0 0
    %2464 = vmatpush2.bf16.msra.mxu0 0
    %2465 = vmatprep.subr.bf16.mxu0 0
    %2466 = vmatpush2.bf16.msra.mxu0 0
    %2467 = vmatprep.subr.bf16.mxu0 0
    %2468 = vmatpush2.bf16.msra.mxu0 0
    %2469 = vmatprep.mubr.bf16.mxu0 0
    %2470 = vmatmul.mubr.bf16.gmra.mxu0 %v2432
    %v2471 = vpop.f32.mrf.mxu0
    %v2472 = vadd.f32 0.0, %v2471
    %v2473 = vpop.f32.mrf.mxu0
    %v2474 = vpop.f32.mrf.mxu0
    %v2475 = vadd.f32 0.0, %v2474
    %v2476 = vpop.f32.mrf.mxu0
    %2477 = vdwg.mxu0
    %v2478 = vadd.f32 %v2198, %v2472
    %v2479 = vadd.f32 %v2201, %v2475
    %2480 = vrot.lane.b32.xlu0 %v1656, 104
    %v2481 = vpop.permute.xlu0 %2480
    %2482 = vrot.lane.b32.xlu0 %v1656, 72
    %v2483 = vpop.permute.xlu0 %2482
    %v2485 = vsel %vm190, %v2481, 0
    %v2488 = vsel %vm190, %v2483, 0
    %2490 = vmatprep.subr.bf16.mxu0 0
    %2491 = vmatpush1.bf16.xpose.msra.mxu0 0
    %2492 = vmatprep.subr.bf16.mxu0 0
    %2493 = vmatpush1.bf16.xpose.msra.mxu0 0
    %2494 = vmatprep.subr.bf16.mxu0 0
    %2495 = vmatpush1.bf16.xpose.msra.mxu0 0
    %2496 = vmatprep.subr.bf16.mxu0 0
    %2497 = vmatpush1.bf16.xpose.msra.mxu0 0
    %2498 = vmatprep.subr.bf16.mxu0 0
    %2499 = vmatpush1.bf16.xpose.msra.mxu0 0
    %2500 = vmatprep.subr.bf16.mxu0 0
    %2501 = vmatpush1.bf16.xpose.msra.mxu0 0
    %2502 = vmatprep.subr.bf16.mxu0 0
    %2503 = vmatpush1.bf16.xpose.msra.mxu0 0
    %2504 = vmatprep.subr.bf16.mxu0 0
    %2505 = vmatpush1.bf16.xpose.msra.mxu0 %v2488
    %2506 = vmatprep.subr.bf16.mxu0 0
    %2507 = vmatpush2.bf16.xpose.msra.mxu0 0
    %2508 = vmatprep.subr.bf16.mxu0 0
    %2509 = vmatpush2.bf16.xpose.msra.mxu0 0
    %2510 = vmatprep.subr.bf16.mxu0 0
    %2511 = vmatpush2.bf16.xpose.msra.mxu0 0
    %2512 = vmatprep.subr.bf16.mxu0 0
    %2513 = vmatpush2.bf16.xpose.msra.mxu0 0
    %2514 = vmatprep.subr.bf16.mxu0 0
    %2515 = vmatpush2.bf16.xpose.msra.mxu0 0
    %2516 = vmatprep.subr.bf16.mxu0 0
    %2517 = vmatpush2.bf16.xpose.msra.mxu0 0
    %2518 = vmatprep.subr.bf16.mxu0 0
    %2519 = vmatpush2.bf16.xpose.msra.mxu0 0
    %2520 = vmatprep.subr.bf16.mxu0 0
    %2521 = vmatpush2.bf16.xpose.msra.mxu0 0
    %2522 = vmatprep.mubr.bf16.mxu0 0
    %2523 = vmatmul.mubr.bf16.gmra.mxu0 %v2485
    %v2524 = vpop.f32.mrf.mxu0
    %v2525 = vadd.f32 0.0, %v2524
    %v2526 = vpop.f32.mrf.mxu0
    %v2527 = vpop.f32.mrf.mxu0
    %v2528 = vpop.f32.mrf.mxu0
    %2529 = vdwg.mxu0
    %2530 = vrot.lane.b32.xlu0 %v1657, 104
    %v2531 = vpop.permute.xlu0 %2530
    %2532 = vrot.lane.b32.xlu0 %v1657, 72
    %v2533 = vpop.permute.xlu0 %2532
    %v2535 = vsel %vm190, %v2531, 0
    %v2538 = vsel %vm190, %v2533, 0
    %2540 = vmatprep.subr.bf16.mxu0 0
    %2541 = vmatpush1.bf16.xpose.msra.mxu0 0
    %2542 = vmatprep.subr.bf16.mxu0 0
    %2543 = vmatpush1.bf16.xpose.msra.mxu0 0
    %2544 = vmatprep.subr.bf16.mxu0 0
    %2545 = vmatpush1.bf16.xpose.msra.mxu0 0
    %2546 = vmatprep.subr.bf16.mxu0 0
    %2547 = vmatpush1.bf16.xpose.msra.mxu0 0
    %2548 = vmatprep.subr.bf16.mxu0 0
    %2549 = vmatpush1.bf16.xpose.msra.mxu0 0
    %2550 = vmatprep.subr.bf16.mxu0 0
    %2551 = vmatpush1.bf16.xpose.msra.mxu0 0
    %2552 = vmatprep.subr.bf16.mxu0 0
    %2553 = vmatpush1.bf16.xpose.msra.mxu0 0
    %2554 = vmatprep.subr.bf16.mxu0 0
    %2555 = vmatpush1.bf16.xpose.msra.mxu0 %v2538
    %2556 = vmatprep.subr.bf16.mxu0 0
    %2557 = vmatpush2.bf16.xpose.msra.mxu0 0
    %2558 = vmatprep.subr.bf16.mxu0 0
    %2559 = vmatpush2.bf16.xpose.msra.mxu0 0
    %2560 = vmatprep.subr.bf16.mxu0 0
    %2561 = vmatpush2.bf16.xpose.msra.mxu0 0
    %2562 = vmatprep.subr.bf16.mxu0 0
    %2563 = vmatpush2.bf16.xpose.msra.mxu0 0
    %2564 = vmatprep.subr.bf16.mxu0 0
    %2565 = vmatpush2.bf16.xpose.msra.mxu0 0
    %2566 = vmatprep.subr.bf16.mxu0 0
    %2567 = vmatpush2.bf16.xpose.msra.mxu0 0
    %2568 = vmatprep.subr.bf16.mxu0 0
    %2569 = vmatpush2.bf16.xpose.msra.mxu0 0
    %2570 = vmatprep.subr.bf16.mxu0 0
    %2571 = vmatpush2.bf16.xpose.msra.mxu0 0
    %2572 = vmatprep.mubr.bf16.mxu0 0
    %2573 = vmatmul.mubr.bf16.gmra.mxu0 %v2535
    %v2574 = vpop.f32.mrf.mxu0
    %v2575 = vadd.f32 0.0, %v2574
    %v2576 = vpop.f32.mrf.mxu0
    %v2577 = vpop.f32.mrf.mxu0
    %v2578 = vpop.f32.mrf.mxu0
    %2579 = vdwg.mxu0
    %v2580 = vmul.f32 %v2525, 0.35355338
    %v2581 = vmul.f32 %v2575, 0.35355338
    %v2582 = vadd.f32 %v2580, %v64
    %v2583 = vadd.f32 %v2581, %v64
    %v2584 = vsel %vm190, %v2582, -inf
    %2585 = vmax.xlane.f32.xlu0 %v2584
    %v2586 = vpop.xlane.xlu0 %2585
    %v2587 = vsel %vm190, %v2583, -inf
    %2588 = vmax.xlane.f32.xlu0 %v2587
    %v2589 = vpop.xlane.xlu0 %2588
    %v2590 = vsub.f32 %v2582, %v2586
    %v2591 = vsub.f32 %v2583, %v2589
    %v2592 = vmul.f32 %v2590, 1.442695
    %v2593 = vpow.pop %v2592
    %v2594 = vmul.f32 %v2591, 1.442695
    %v2595 = vpow.pop %v2594
    %v2596 = vsel %vm190, %v2593, 0.0
    %2597 = vadd.xlane.f32.xlu0 %v2596
    %v2598 = vpop.xlane.xlu0 %2597
    %v2599 = vsel %vm190, %v2595, 0.0
    %2600 = vadd.xlane.f32.xlu0 %v2599
    %v2601 = vpop.xlane.xlu0 %2600
    %v2602 = vrcp.pop %v2598
    %v2603 = vrcp.pop %v2601
    %v2604 = vmul.f32 %v2593, %v2602
    %v2605 = vmul.f32 %v2595, %v2603
    %v2606 = vpack.c.bf16 %v2604, %v2604
    %v2607 = vpack.c.bf16 %v2605, %v2605
    %2608 = vrot.lane.b32.xlu0 %v1656, 40
    %v2609 = vpop.permute.xlu0 %2608
    %v2611 = vsel %vm190, %v2606, 0
    %v2614 = vsel %vm319, %v2609, 0
    %2616 = vmatprep.subr.bf16.mxu0 0
    %2617 = vmatpush1.bf16.msra.mxu0 0
    %2618 = vmatprep.subr.bf16.mxu0 0
    %2619 = vmatpush1.bf16.msra.mxu0 0
    %2620 = vmatprep.subr.bf16.mxu0 0
    %2621 = vmatpush1.bf16.msra.mxu0 0
    %2622 = vmatprep.subr.bf16.mxu0 0
    %2623 = vmatpush1.bf16.msra.mxu0 0
    %2624 = vmatprep.subr.bf16.mxu0 0
    %2625 = vmatpush1.bf16.msra.mxu0 0
    %2626 = vmatprep.subr.bf16.mxu0 0
    %2627 = vmatpush1.bf16.msra.mxu0 0
    %2628 = vmatprep.subr.bf16.mxu0 0
    %2629 = vmatpush1.bf16.msra.mxu0 0
    %2630 = vmatprep.subr.bf16.mxu0 0
    %2631 = vmatpush1.bf16.msra.mxu0 %v2614
    %2632 = vmatprep.subr.bf16.mxu0 0
    %2633 = vmatpush2.bf16.msra.mxu0 0
    %2634 = vmatprep.subr.bf16.mxu0 0
    %2635 = vmatpush2.bf16.msra.mxu0 0
    %2636 = vmatprep.subr.bf16.mxu0 0
    %2637 = vmatpush2.bf16.msra.mxu0 0
    %2638 = vmatprep.subr.bf16.mxu0 0
    %2639 = vmatpush2.bf16.msra.mxu0 0
    %2640 = vmatprep.subr.bf16.mxu0 0
    %2641 = vmatpush2.bf16.msra.mxu0 0
    %2642 = vmatprep.subr.bf16.mxu0 0
    %2643 = vmatpush2.bf16.msra.mxu0 0
    %2644 = vmatprep.subr.bf16.mxu0 0
    %2645 = vmatpush2.bf16.msra.mxu0 0
    %2646 = vmatprep.subr.bf16.mxu0 0
    %2647 = vmatpush2.bf16.msra.mxu0 0
    %2648 = vmatprep.mubr.bf16.mxu0 0
    %2649 = vmatmul.mubr.bf16.gmra.mxu0 %v2611
    %v2650 = vpop.f32.mrf.mxu0
    %v2651 = vadd.f32 0.0, %v2650
    %v2652 = vpop.f32.mrf.mxu0
    %v2653 = vpop.f32.mrf.mxu0
    %v2654 = vpop.f32.mrf.mxu0
    %2655 = vdwg.mxu0
    %2656 = vrot.lane.b32.xlu0 %v1657, 40
    %v2657 = vpop.permute.xlu0 %2656
    %v2659 = vsel %vm190, %v2607, 0
    %v2662 = vsel %vm319, %v2657, 0
    %2664 = vmatprep.subr.bf16.mxu0 0
    %2665 = vmatpush1.bf16.msra.mxu0 0
    %2666 = vmatprep.subr.bf16.mxu0 0
    %2667 = vmatpush1.bf16.msra.mxu0 0
    %2668 = vmatprep.subr.bf16.mxu0 0
    %2669 = vmatpush1.bf16.msra.mxu0 0
    %2670 = vmatprep.subr.bf16.mxu0 0
    %2671 = vmatpush1.bf16.msra.mxu0 0
    %2672 = vmatprep.subr.bf16.mxu0 0
    %2673 = vmatpush1.bf16.msra.mxu0 0
    %2674 = vmatprep.subr.bf16.mxu0 0
    %2675 = vmatpush1.bf16.msra.mxu0 0
    %2676 = vmatprep.subr.bf16.mxu0 0
    %2677 = vmatpush1.bf16.msra.mxu0 0
    %2678 = vmatprep.subr.bf16.mxu0 0
    %2679 = vmatpush1.bf16.msra.mxu0 %v2662
    %2680 = vmatprep.subr.bf16.mxu0 0
    %2681 = vmatpush2.bf16.msra.mxu0 0
    %2682 = vmatprep.subr.bf16.mxu0 0
    %2683 = vmatpush2.bf16.msra.mxu0 0
    %2684 = vmatprep.subr.bf16.mxu0 0
    %2685 = vmatpush2.bf16.msra.mxu0 0
    %2686 = vmatprep.subr.bf16.mxu0 0
    %2687 = vmatpush2.bf16.msra.mxu0 0
    %2688 = vmatprep.subr.bf16.mxu0 0
    %2689 = vmatpush2.bf16.msra.mxu0 0
    %2690 = vmatprep.subr.bf16.mxu0 0
    %2691 = vmatpush2.bf16.msra.mxu0 0
    %2692 = vmatprep.subr.bf16.mxu0 0
    %2693 = vmatpush2.bf16.msra.mxu0 0
    %2694 = vmatprep.subr.bf16.mxu0 0
    %2695 = vmatpush2.bf16.msra.mxu0 0
    %2696 = vmatprep.mubr.bf16.mxu0 0
    %2697 = vmatmul.mubr.bf16.gmra.mxu0 %v2659
    %v2698 = vpop.f32.mrf.mxu0
    %v2699 = vadd.f32 0.0, %v2698
    %v2700 = vpop.f32.mrf.mxu0
    %v2701 = vpop.f32.mrf.mxu0
    %v2702 = vpop.f32.mrf.mxu0
    %2703 = vdwg.mxu0
    %v2704 = vpack.c.bf16 %v2699, %v2651
    %s2705 = scalar_lea.vmem %s8, 28
    %v2706 = vld [vmem:[%s2705] sm:$0xf]
    %v2708 = vsel %vm190, %v2704, 0
    %v2711 = vsel %vm319, %v2706, 0
    %2713 = vmatprep.subr.bf16.mxu0 0
    %2714 = vmatpush1.bf16.msra.mxu0 0
    %2715 = vmatprep.subr.bf16.mxu0 0
    %2716 = vmatpush1.bf16.msra.mxu0 0
    %2717 = vmatprep.subr.bf16.mxu0 0
    %2718 = vmatpush1.bf16.msra.mxu0 0
    %2719 = vmatprep.subr.bf16.mxu0 0
    %2720 = vmatpush1.bf16.msra.mxu0 0
    %2721 = vmatprep.subr.bf16.mxu0 0
    %2722 = vmatpush1.bf16.msra.mxu0 0
    %2723 = vmatprep.subr.bf16.mxu0 0
    %2724 = vmatpush1.bf16.msra.mxu0 0
    %2725 = vmatprep.subr.bf16.mxu0 0
    %2726 = vmatpush1.bf16.msra.mxu0 0
    %2727 = vmatprep.subr.bf16.mxu0 0
    %2728 = vmatpush1.bf16.msra.mxu0 %v2711
    %2729 = vmatprep.subr.bf16.mxu0 0
    %2730 = vmatpush2.bf16.msra.mxu0 0
    %2731 = vmatprep.subr.bf16.mxu0 0
    %2732 = vmatpush2.bf16.msra.mxu0 0
    %2733 = vmatprep.subr.bf16.mxu0 0
    %2734 = vmatpush2.bf16.msra.mxu0 0
    %2735 = vmatprep.subr.bf16.mxu0 0
    %2736 = vmatpush2.bf16.msra.mxu0 0
    %2737 = vmatprep.subr.bf16.mxu0 0
    %2738 = vmatpush2.bf16.msra.mxu0 0
    %2739 = vmatprep.subr.bf16.mxu0 0
    %2740 = vmatpush2.bf16.msra.mxu0 0
    %2741 = vmatprep.subr.bf16.mxu0 0
    %2742 = vmatpush2.bf16.msra.mxu0 0
    %2743 = vmatprep.subr.bf16.mxu0 0
    %2744 = vmatpush2.bf16.msra.mxu0 0
    %2745 = vmatprep.mubr.bf16.mxu0 0
    %2746 = vmatmul.mubr.bf16.gmra.mxu0 %v2708
    %v2747 = vpop.f32.mrf.mxu0
    %v2748 = vadd.f32 0.0, %v2747
    %v2749 = vpop.f32.mrf.mxu0
    %v2750 = vpop.f32.mrf.mxu0
    %v2751 = vadd.f32 0.0, %v2750
    %v2752 = vpop.f32.mrf.mxu0
    %2753 = vdwg.mxu0
    %v2754 = vadd.f32 %v2478, %v2748
    %v2755 = vadd.f32 %v2479, %v2751
    %v2756 = vadd.f32 %v1538, %v2754
    %v2757 = vadd.f32 %v1539, %v2755
    %s2758 = scalar_lea.vmem %s9, 1
    %v2759 = vld [vmem:[%s2758] sm:$0x1]
    %v2761 = vlaneseq
    %v2762 = vshrl.u32 %v2761, 7
    %v2763 = vsub.s32 0, %v2762
    %v2764 = vrot.slane %v2759, %v2763
    %v2766 = vadd.f32 %v2756, %v2764
    %v2767 = vadd.f32 %v2757, %v2764
    %s2768 = scalar_lea.vmem %s10, 1
    %v2769 = vld [vmem:[%s2768] sm:$0x1]
    %s2770 = scalar_lea.vmem %s11, 1
    %v2771 = vld [vmem:[%s2770] sm:$0x1]
    %v2772 = vsel %vm73, %v2766, 0.0
    %2773 = vadd.xlane.f32.xlu0 %v2772
    %v2774 = vpop.xlane.xlu0 %2773
    %v2775 = vsel %vm73, %v2767, 0.0
    %2776 = vadd.xlane.f32.xlu0 %v2775
    %v2777 = vpop.xlane.xlu0 %2776
    %v2778 = vmul.f32 %v2774, %v80
    %v2779 = vmul.f32 %v2777, %v80
    %v2780 = vsub.f32 %v2766, %v2778
    %v2781 = vsub.f32 %v2767, %v2779
    %v2782 = vmul.f32 %v2780, %v2780
    %v2783 = vmul.f32 %v2781, %v2781
    %v2784 = vsel %vm73, %v2782, 0.0
    %2785 = vadd.xlane.f32.xlu0 %v2784
    %v2786 = vpop.xlane.xlu0 %2785
    %v2787 = vsel %vm73, %v2783, 0.0
    %2788 = vadd.xlane.f32.xlu0 %v2787
    %v2789 = vpop.xlane.xlu0 %2788
    %v2790 = vmul.f32 %v2786, %v80
    %v2791 = vmul.f32 %v2789, %v80
    %v2792 = vadd.f32 %v2790, 1e-05
    %v2793 = vadd.f32 %v2791, 1e-05
    %v2794 = vrsqrt.pop %v2792
    %v2795 = vrsqrt.pop %v2793
    %v2796 = vmul.f32 %v2780, %v2794
    %v2797 = vmul.f32 %v2781, %v2795
    %v2799 = vlaneseq
    %v2800 = vshrl.u32 %v2799, 7
    %v2801 = vsub.s32 0, %v2800
    %v2802 = vrot.slane %v2769, %v2801
    %v2804 = vmul.f32 %v2796, %v2802
    %v2805 = vmul.f32 %v2797, %v2802
    %v2807 = vlaneseq
    %v2808 = vshrl.u32 %v2807, 7
    %v2809 = vsub.s32 0, %v2808
    %v2810 = vrot.slane %v2771, %v2809
    %v2812 = vadd.f32 %v2804, %v2810
    %v2813 = vadd.f32 %v2805, %v2810
    %v2814 = vpack.c.bf16 %v2813, %v2812
    %s2815 = scalar_lea.vmem %s12, 16
    %v2816 = vld [vmem:[%s2815] sm:$0xf]
    %v2817 = vld [vmem:[%s2815 + $0x4] sm:$0xf]
    %v2818 = vld [vmem:[%s2815 + $0x8] sm:$0xf]
    %v2819 = vld [vmem:[%s2815 + $0xc] sm:$0xf]
    %s2820 = scalar_lea.vmem %s13, 1
    %v2821 = vld [vmem:[%s2820] sm:$0x1]
    %v2823 = vlaneseq
    %v2824 = vshrl.u32 %v2823, 7
    %v2825 = vsub.s32 0, %v2824
    %v2826 = vrot.slane %v2821, %v2825
    %v2832 = vunpack.c.l.b16 %v2816
    %v2833 = vunpack.c.l.b16 %v2817
    %v2834 = vunpack.c.l.b16 %v2818
    %v2835 = vunpack.c.l.b16 %v2819
    %v2836 = vpack.c.b16 %v2833, %v2832
    %v2837 = vpack.c.b16 %v2835, %v2834
    %v2841 = vsel %vm73, %v2814, 0
    %2843 = vmatprep.subr.bf16.mxu0 0
    %2844 = vmatpush1.bf16.msra.mxu0 0
    %2845 = vmatprep.subr.bf16.mxu0 0
    %2846 = vmatpush1.bf16.msra.mxu0 0
    %2847 = vmatprep.subr.bf16.mxu0 0
    %2848 = vmatpush1.bf16.msra.mxu0 0
    %2849 = vmatprep.subr.bf16.mxu0 0
    %2850 = vmatpush1.bf16.msra.mxu0 0
    %2851 = vmatprep.subr.bf16.mxu0 0
    %2852 = vmatpush1.bf16.msra.mxu0 0
    %2853 = vmatprep.subr.bf16.mxu0 0
    %2854 = vmatpush1.bf16.msra.mxu0 0
    %2855 = vmatprep.subr.bf16.mxu0 0
    %2856 = vmatpush1.bf16.msra.mxu0 %v2837
    %2857 = vmatprep.subr.bf16.mxu0 0
    %2858 = vmatpush1.bf16.msra.mxu0 %v2836
    %2859 = vmatprep.subr.bf16.mxu0 0
    %2860 = vmatpush2.bf16.msra.mxu0 0
    %2861 = vmatprep.subr.bf16.mxu0 0
    %2862 = vmatpush2.bf16.msra.mxu0 0
    %2863 = vmatprep.subr.bf16.mxu0 0
    %2864 = vmatpush2.bf16.msra.mxu0 0
    %2865 = vmatprep.subr.bf16.mxu0 0
    %2866 = vmatpush2.bf16.msra.mxu0 0
    %2867 = vmatprep.subr.bf16.mxu0 0
    %2868 = vmatpush2.bf16.msra.mxu0 0
    %2869 = vmatprep.subr.bf16.mxu0 0
    %2870 = vmatpush2.bf16.msra.mxu0 0
    %2871 = vmatprep.subr.bf16.mxu0 0
    %2872 = vmatpush2.bf16.msra.mxu0 0
    %2873 = vmatprep.subr.bf16.mxu0 0
    %2874 = vmatpush2.bf16.msra.mxu0 0
    %2875 = vmatprep.mubr.bf16.mxu0 0
    %2876 = vmatmul.mubr.bf16.gmra.mxu0 %v2841
    %v2877 = vpop.f32.mrf.mxu0
    %v2878 = vadd.f32 %v2826, %v2877
    %v2879 = vpop.f32.mrf.mxu0
    %v2880 = vpop.f32.mrf.mxu0
    %v2881 = vadd.f32 %v2826, %v2880
    %v2882 = vpop.f32.mrf.mxu0
    %2883 = vdwg.mxu0
    %v2884 = vmul.f32 %v2878, 1.702
    %v2885 = vmul.f32 %v2881, 1.702
    %v2886 = vxor.u32 %v2884, 2147483648
    %v2887 = vxor.u32 %v2885, 2147483648
    %v2888 = vmul.f32 %v2886, 1.442695
    %v2889 = vpow.pop %v2888
    %v2890 = vmul.f32 %v2887, 1.442695
    %v2891 = vpow.pop %v2890
    %v2892 = vadd.f32 %v2889, 1.0
    %v2893 = vadd.f32 %v2891, 1.0
    %v2894 = vrcp.pop %v2892
    %v2895 = vmul.f32 1.0, %v2894
    %v2896 = vrcp.pop %v2893
    %v2897 = vmul.f32 1.0, %v2896
    %v2898 = vmul.f32 %v2878, %v2895
    %v2899 = vmul.f32 %v2881, %v2897
    %v2900 = vpack.c.bf16 %v2899, %v2898
    %s2901 = scalar_lea.vmem %s14, 64
    %v2902 = vld [vmem:[%s2901] sm:$0xf]
    %v2903 = vld [vmem:[%s2901 + $0x4] sm:$0xf]
    %v2904 = vld [vmem:[%s2901 + $0x8] sm:$0xf]
    %v2905 = vld [vmem:[%s2901 + $0xc] sm:$0xf]
    %v2906 = vld [vmem:[%s2901 + $0x10] sm:$0xf]
    %v2907 = vld [vmem:[%s2901 + $0x14] sm:$0xf]
    %v2908 = vld [vmem:[%s2901 + $0x18] sm:$0xf]
    %v2909 = vld [vmem:[%s2901 + $0x1c] sm:$0xf]
    %v2910 = vld [vmem:[%s2901 + $0x20] sm:$0xf]
    %v2911 = vld [vmem:[%s2901 + $0x24] sm:$0xf]
    %v2912 = vld [vmem:[%s2901 + $0x28] sm:$0xf]
    %v2913 = vld [vmem:[%s2901 + $0x2c] sm:$0xf]
    %v2914 = vld [vmem:[%s2901 + $0x30] sm:$0xf]
    %v2915 = vld [vmem:[%s2901 + $0x34] sm:$0xf]
    %v2916 = vld [vmem:[%s2901 + $0x38] sm:$0xf]
    %v2917 = vld [vmem:[%s2901 + $0x3c] sm:$0xf]
    %s2918 = scalar_lea.vmem %s15, 1
    %v2919 = vld [vmem:[%s2918] sm:$0x1]
    %v2921 = vlaneseq
    %v2922 = vshrl.u32 %v2921, 7
    %v2923 = vsub.s32 0, %v2922
    %v2924 = vrot.slane %v2919, %v2923
    %v2942 = vunpack.c.l.b16 %v2902
    %v2943 = vunpack.c.l.b16 %v2903
    %v2944 = vunpack.c.l.b16 %v2904
    %v2945 = vunpack.c.l.b16 %v2905
    %v2946 = vunpack.c.l.b16 %v2906
    %v2947 = vunpack.c.l.b16 %v2907
    %v2948 = vunpack.c.l.b16 %v2908
    %v2949 = vunpack.c.l.b16 %v2909
    %v2950 = vunpack.c.l.b16 %v2910
    %v2951 = vunpack.c.l.b16 %v2911
    %v2952 = vunpack.c.l.b16 %v2912
    %v2953 = vunpack.c.l.b16 %v2913
    %v2954 = vunpack.c.l.b16 %v2914
    %v2955 = vunpack.c.l.b16 %v2915
    %v2956 = vunpack.c.l.b16 %v2916
    %v2957 = vunpack.c.l.b16 %v2917
    %v2958 = vpack.c.b16 %v2943, %v2942
    %v2959 = vpack.c.b16 %v2945, %v2944
    %v2960 = vpack.c.b16 %v2947, %v2946
    %v2961 = vpack.c.b16 %v2949, %v2948
    %v2962 = vpack.c.b16 %v2951, %v2950
    %v2963 = vpack.c.b16 %v2953, %v2952
    %v2964 = vpack.c.b16 %v2955, %v2954
    %v2965 = vpack.c.b16 %v2957, %v2956
    %2974 = vmatprep.subr.bf16.mxu0 0
    %2975 = vmatpush1.bf16.msra.mxu0 %v2965
    %2976 = vmatprep.subr.bf16.mxu0 0
    %2977 = vmatpush1.bf16.msra.mxu0 %v2964
    %2978 = vmatprep.subr.bf16.mxu0 0
    %2979 = vmatpush1.bf16.msra.mxu0 %v2963
    %2980 = vmatprep.subr.bf16.mxu0 0
    %2981 = vmatpush1.bf16.msra.mxu0 %v2962
    %2982 = vmatprep.subr.bf16.mxu0 0
    %2983 = vmatpush1.bf16.msra.mxu0 %v2961
    %2984 = vmatprep.subr.bf16.mxu0 0
    %2985 = vmatpush1.bf16.msra.mxu0 %v2960
    %2986 = vmatprep.subr.bf16.mxu0 0
    %2987 = vmatpush1.bf16.msra.mxu0 %v2959
    %2988 = vmatprep.subr.bf16.mxu0 0
    %2989 = vmatpush1.bf16.msra.mxu0 %v2958
    %2990 = vmatprep.subr.bf16.mxu0 0
    %2991 = vmatpush2.bf16.msra.mxu0 0
    %2992 = vmatprep.subr.bf16.mxu0 0
    %2993 = vmatpush2.bf16.msra.mxu0 0
    %2994 = vmatprep.subr.bf16.mxu0 0
    %2995 = vmatpush2.bf16.msra.mxu0 0
    %2996 = vmatprep.subr.bf16.mxu0 0
    %2997 = vmatpush2.bf16.msra.mxu0 0
    %2998 = vmatprep.subr.bf16.mxu0 0
    %2999 = vmatpush2.bf16.msra.mxu0 0
    %3000 = vmatprep.subr.bf16.mxu0 0
    %3001 = vmatpush2.bf16.msra.mxu0 0
    %3002 = vmatprep.subr.bf16.mxu0 0
    %3003 = vmatpush2.bf16.msra.mxu0 0
    %3004 = vmatprep.subr.bf16.mxu0 0
    %3005 = vmatpush2.bf16.msra.mxu0 0
    %3006 = vmatprep.mubr.bf16.mxu0 0
    %3007 = vmatmul.mubr.bf16.gmra.mxu0 %v2900
    %v3008 = vpop.f32.mrf.mxu0
    %v3009 = vadd.f32 %v2924, %v3008
    %v3010 = vpop.f32.mrf.mxu0
    %v3011 = vpop.f32.mrf.mxu0
    %v3012 = vadd.f32 %v2924, %v3011
    %v3013 = vpop.f32.mrf.mxu0
    %3014 = vdwg.mxu0
    %v3015 = vadd.f32 %v2766, %v3009
    %v3016 = vadd.f32 %v2767, %v3012
    %v3017 = vld [vmem:[%s3] sm:$0x3]
    %vm3018 = vcmask 130048
    %v3020 = vsel %vm3018, %v3017, 0
    %3022 = vmatprep.subr.mxu0 0.0
    %3023 = vmatpush1.msra.mxu0 0.0
    %3024 = vmatprep.subr.mxu0 0.0
    %3025 = vmatpush1.msra.mxu0 0.0
    %3026 = vmatprep.subr.mxu0 0.0
    %3027 = vmatpush1.msra.mxu0 0.0
    %3028 = vmatprep.subr.mxu0 0.0
    %3029 = vmatpush1.msra.mxu0 0.0
    %3030 = vmatprep.subr.mxu0 0.0
    %3031 = vmatpush1.msra.mxu0 0.0
    %3032 = vmatprep.subr.mxu0 0.0
    %3033 = vmatpush1.msra.mxu0 0.0
    %3034 = vmatprep.subr.mxu0 0.0
    %3035 = vmatpush1.msra.mxu0 0.0
    %3036 = vmatprep.subr.mxu0 0.0
    %3037 = vmatpush1.msra.mxu0 0.0
    %3038 = vmatprep.subr.mxu0 0.0
    %3039 = vmatpush1.msra.mxu0 0.0
    %3040 = vmatprep.subr.mxu0 0.0
    %3041 = vmatpush1.msra.mxu0 0.0
    %3042 = vmatprep.subr.mxu0 0.0
    %3043 = vmatpush1.msra.mxu0 0.0
    %3044 = vmatprep.subr.mxu0 0.0
    %3045 = vmatpush1.msra.mxu0 0.0
    %3046 = vmatprep.subr.mxu0 0.0
    %3047 = vmatpush1.msra.mxu0 0.0
    %3048 = vmatprep.subr.mxu0 0.0
    %3049 = vmatpush1.msra.mxu0 0.0
    %3050 = vmatprep.subr.mxu0 0.0
    %3051 = vmatpush1.msra.mxu0 %v3016
    %3052 = vmatprep.subr.mxu0 0.0
    %3053 = vmatpush1.msra.mxu0 %v3015
    %3054 = vmatprep.subr.mxu0 0.0
    %3055 = vmatpush2.msra.mxu0 0.0
    %3056 = vmatprep.subr.mxu0 0.0
    %3057 = vmatpush2.msra.mxu0 0.0
    %3058 = vmatprep.subr.mxu0 0.0
    %3059 = vmatpush2.msra.mxu0 0.0
    %3060 = vmatprep.subr.mxu0 0.0
    %3061 = vmatpush2.msra.mxu0 0.0
    %3062 = vmatprep.subr.mxu0 0.0
    %3063 = vmatpush2.msra.mxu0 0.0
    %3064 = vmatprep.subr.mxu0 0.0
    %3065 = vmatpush2.msra.mxu0 0.0
    %3066 = vmatprep.subr.mxu0 0.0
    %3067 = vmatpush2.msra.mxu0 0.0
    %3068 = vmatprep.subr.mxu0 0.0
    %3069 = vmatpush2.msra.mxu0 0.0
    %3070 = vmatprep.subr.mxu0 0.0
    %3071 = vmatpush2.msra.mxu0 0.0
    %3072 = vmatprep.subr.mxu0 0.0
    %3073 = vmatpush2.msra.mxu0 0.0
    %3074 = vmatprep.subr.mxu0 0.0
    %3075 = vmatpush2.msra.mxu0 0.0
    %3076 = vmatprep.subr.mxu0 0.0
    %3077 = vmatpush2.msra.mxu0 0.0
    %3078 = vmatprep.subr.mxu0 0.0
    %3079 = vmatpush2.msra.mxu0 0.0
    %3080 = vmatprep.subr.mxu0 0.0
    %3081 = vmatpush2.msra.mxu0 0.0
    %3082 = vmatprep.subr.mxu0 0.0
    %3083 = vmatpush2.msra.mxu0 0.0
    %3084 = vmatprep.subr.mxu0 0.0
    %3085 = vmatpush2.msra.mxu0 0.0
    %3086 = vmatprep.mubr.f32.mxu0 0.0
    %3087 = vmatmul.mubr.f32.gmra.mxu0 %v3020
    %v3088 = vpop.f32.mrf.mxu0
    %v3089 = vadd.f32 0.0, %v3088
    %v3090 = vpop.f32.mrf.mxu0
    %3091 = vdwg.mxu0
    %v3092 = vld [vmem:[%s16] sm:$0x1]
    %v3093 = vld [vmem:[%s17] sm:$0x1]
    %vm3094 = vcmask 254976
    %v3095 = vsel %vm3094, %v3089, 0.0
    %3096 = vadd.xlane.f32.xlu0 %v3095
    %v3097 = vpop.xlane.xlu0 %3096
    %v3098 = vmul.f32 %v3097, %v80
    %v3099 = vsub.f32 %v3089, %v3098
    %v3100 = vmul.f32 %v3099, %v3099
    %v3101 = vsel %vm3094, %v3100, 0.0
    %3102 = vadd.xlane.f32.xlu0 %v3101
    %v3103 = vpop.xlane.xlu0 %3102
    %v3104 = vmul.f32 %v3103, %v80
    %v3105 = vadd.f32 %v3104, 1e-05
    %v3106 = vrsqrt.pop %v3105
    %v3107 = vmul.f32 %v3099, %v3106
    %v3109 = vlaneseq
    %v3110 = vshrl.u32 %v3109, 7
    %v3111 = vsub.s32 0, %v3110
    %v3112 = vrot.slane %v3092, %v3111
    %v3114 = vmul.f32 %v3107, %v3112
    %v3116 = vlaneseq
    %v3117 = vshrl.u32 %v3116, 7
    %v3118 = vsub.s32 0, %v3117
    %v3119 = vrot.slane %v3093, %v3118
    %v3121 = vadd.f32 %v3114, %v3119
    %v3122 = vld [vmem:[%s18] sm:$0xff]
    %v3123 = vld [vmem:[%s18 + $0x8] sm:$0xff]
    %v3124 = vld [vmem:[%s18 + $0x10] sm:$0xff]
    %v3125 = vld [vmem:[%s18 + $0x18] sm:$0xff]
    %v3127 = vsel %vm73, %v3121, 0
    %3129 = vmatprep.subr.mxu0 0.0
    %3130 = vmatpush1.msra.mxu0 0.0
    %3131 = vmatprep.subr.mxu0 0.0
    %3132 = vmatpush1.msra.mxu0 0.0
    %3133 = vmatprep.subr.mxu0 0.0
    %3134 = vmatpush1.msra.mxu0 0.0
    %3135 = vmatprep.subr.mxu0 0.0
    %3136 = vmatpush1.msra.mxu0 0.0
    %3137 = vmatprep.subr.mxu0 0.0
    %3138 = vmatpush1.msra.mxu0 0.0
    %3139 = vmatprep.subr.mxu0 0.0
    %3140 = vmatpush1.msra.mxu0 0.0
    %3141 = vmatprep.subr.mxu0 0.0
    %3142 = vmatpush1.msra.mxu0 0.0
    %3143 = vmatprep.subr.mxu0 0.0
    %3144 = vmatpush1.msra.mxu0 0.0
    %3145 = vmatprep.subr.mxu0 0.0
    %3146 = vmatpush1.msra.mxu0 0.0
    %3147 = vmatprep.subr.mxu0 0.0
    %3148 = vmatpush1.msra.mxu0 0.0
    %3149 = vmatprep.subr.mxu0 0.0
    %3150 = vmatpush1.msra.mxu0 0.0
    %3151 = vmatprep.subr.mxu0 0.0
    %3152 = vmatpush1.msra.mxu0 0.0
    %3153 = vmatprep.subr.mxu0 0.0
    %3154 = vmatpush1.msra.mxu0 %v3125
    %3155 = vmatprep.subr.mxu0 0.0
    %3156 = vmatpush1.msra.mxu0 %v3124
    %3157 = vmatprep.subr.mxu0 0.0
    %3158 = vmatpush1.msra.mxu0 %v3123
    %3159 = vmatprep.subr.mxu0 0.0
    %3160 = vmatpush1.msra.mxu0 %v3122
    %3161 = vmatprep.subr.mxu0 0.0
    %3162 = vmatpush2.msra.mxu0 0.0
    %3163 = vmatprep.subr.mxu0 0.0
    %3164 = vmatpush2.msra.mxu0 0.0
    %3165 = vmatprep.subr.mxu0 0.0
    %3166 = vmatpush2.msra.mxu0 0.0
    %3167 = vmatprep.subr.mxu0 0.0
    %3168 = vmatpush2.msra.mxu0 0.0
    %3169 = vmatprep.subr.mxu0 0.0
    %3170 = vmatpush2.msra.mxu0 0.0
    %3171 = vmatprep.subr.mxu0 0.0
    %3172 = vmatpush2.msra.mxu0 0.0
    %3173 = vmatprep.subr.mxu0 0.0
    %3174 = vmatpush2.msra.mxu0 0.0
    %3175 = vmatprep.subr.mxu0 0.0
    %3176 = vmatpush2.msra.mxu0 0.0
    %3177 = vmatprep.subr.mxu0 0.0
    %3178 = vmatpush2.msra.mxu0 0.0
    %3179 = vmatprep.subr.mxu0 0.0
    %3180 = vmatpush2.msra.mxu0 0.0
    %3181 = vmatprep.subr.mxu0 0.0
    %3182 = vmatpush2.msra.mxu0 0.0
    %3183 = vmatprep.subr.mxu0 0.0
    %3184 = vmatpush2.msra.mxu0 0.0
    %3185 = vmatprep.subr.mxu0 0.0
    %3186 = vmatpush2.msra.mxu0 0.0
    %3187 = vmatprep.subr.mxu0 0.0
    %3188 = vmatpush2.msra.mxu0 0.0
    %3189 = vmatprep.subr.mxu0 0.0
    %3190 = vmatpush2.msra.mxu0 0.0
    %3191 = vmatprep.subr.mxu0 0.0
    %3192 = vmatpush2.msra.mxu0 0.0
    %3193 = vmatprep.mubr.f32.mxu0 0.0
    %3194 = vmatmul.mubr.f32.gmra.mxu0 %v3127
    %v3195 = vpop.f32.mrf.mxu0
    %v3196 = vadd.f32 0.0, %v3195
    %v3197 = vpop.f32.mrf.mxu0
    %3198 = vdwg.mxu0
    %vm3199 = vcmask 123904
    %3200 = vst.msk [vmem:[#allocation2] sm:$0x3] %vm3199, %v3196
    // Predicated region
    $region78: #{text_encoder_forward.1} parent=1 // pred_check
      _
    $region79: #{text_encoder_forward.1} parent=1 // pred_check_branch
      %3202 = sbr.rel (0) target = $region81
    $region80: #{text_encoder_forward.1} parent=1 // pred_region
      %s3204 = ssub.s32 32, 32
      %3205 = vsyncadd [#allocation3], %s3204
      %s3207 = sshll.u32 [#allocation2], 4
      %s3208 = int_to_ptr.vmem [resolvable:$true] %s3207
      %3210 = dma.vmem_to_hbm [thread:$0]  %s3208, 32, %s19, [#allocation3]
    $region81: #{text_encoder_forward.1} parent=1 // pred_fallthru
      _
    // Predicated region
    $region82: #{text_encoder_forward.1} parent=1 // pred_check
      _
    $region83: #{text_encoder_forward.1} parent=1 // pred_check_branch
      %3212 = sbr.rel (0) target = $region85
    $region84: #{text_encoder_forward.1} parent=1 // pred_region
      %3213 = dma.done [#allocation3], 32
    $region85: #{text_encoder_forward.1} parent=1 // pred_fallthru
      _
    %3214 = vsyncpa [#allocation3], 1

</llo_original>
